<compile_context>
chip_gen: v6e
topology: v6e:2x2x1
jax: 0.10.0
libtpu: 0.0.40
codegen_flags: <defaults>
</compile_context>

<pallas_src>
import functools

import jax
import jax.numpy as jnp
from jax.experimental import pallas as pl
from jax.experimental.pallas import tpu as pltpu

# ----------------------------- config (small, synthetic, lane-dense) ---------
HIDDEN = 256
NUM_HEADS = 2
HEAD_DIM = HIDDEN // NUM_HEADS          # 128 -> full lane width
INTERMEDIATE = 512
EPS = 1e-5
FFN_CHUNK = 256                         # lanes of intermediate streamed per step


# ----------------------------- fused Pallas kernel ---------------------------
def pixtral_block_kernel(x_ref, cos_ref, sins_ref,
                         attn_nw_ref, wqkv_ref, bqkv_ref,
                         wout_ref, bout_ref,
                         ffn_nw_ref, wgu_ref, wdown_ref,
                         o_ref, ctx_ref, *, eps):
    f32 = jnp.float32
    rows, h = x_ref.shape                # rows = B * S
    seq, d = cos_ref.shape
    batch = rows // seq
    num_heads = h // d
    half = d // 2
    inter = wdown_ref.shape[0]
    mm_dtype = x_ref.dtype               # bf16 in -> bf16 MXU; f32 in -> f32 MXU
    exact_softmax = (x_ref.dtype == jnp.float32)

    x = x_ref[...].astype(f32)           # [rows, h]

    # ---- RMSNorm (attention) fused into the QKV matmul ----
    var = jnp.mean(x * x, axis=-1, keepdims=True)
    xn = (x * jax.lax.rsqrt(var + eps) * attn_nw_ref[...].astype(f32)).astype(mm_dtype)

    # ---- QKV projection over all B*S rows (fills the MXU M dim). ----
    # The attention scale d**-0.5 is already folded into the Q columns.
    qkv = jnp.dot(xn, wqkv_ref[...], preferred_element_type=f32)
    qkv = (qkv + bqkv_ref[...].astype(f32)).astype(mm_dtype)   # keep storage dtype

    cos = cos_ref[...]                   # f32 [seq, d]
    sins = sins_ref[...]                 # f32 [seq, d]  (first half negated)

    # ---- attention per (batch, head); context assembled into ctx_ref ----
    # TODO(synk): at real Pixtral geometry (16 heads, head_dim=64) switch to a
    # lax.fori_loop over packed head pairs and pre-transpose K once per batch.
    for bi in range(batch):
        r0 = bi * seq
        for head in range(num_heads):
            lo = head * d
            qh = qkv[r0:r0 + seq, lo:lo + d].astype(f32)
            kh = qkv[r0:r0 + seq, h + lo:h + lo + d].astype(f32)
            vh = qkv[r0:r0 + seq, 2 * h + lo:2 * h + lo + d]    # stays mm_dtype

            # HF rotate_half rotary:  rotate_half(t) * sin == roll(t, d/2) * sins
            qh = qh * cos + pltpu.roll(qh, half, axis=1) * sins
            kh = kh * cos + pltpu.roll(kh, half, axis=1) * sins

            # scores = qh @ kh^T (no explicit transpose; scale pre-folded into q)
            sc = jax.lax.dot_general(qh.astype(mm_dtype), kh.astype(mm_dtype),
                                     (((1,), (1,)), ((), ())),
                                     preferred_element_type=f32)
            sc = sc - jnp.max(sc, axis=-1, keepdims=True)
            p = jnp.exp(sc)
            den = jnp.sum(p, axis=-1, keepdims=True)
            if exact_softmax:
                p = p / den
            else:
                p = p * pl.reciprocal(den, approx=True)

            ctx = jnp.dot(p.astype(mm_dtype), vh, preferred_element_type=f32)
            ctx_ref[pl.ds(r0, seq), pl.ds(lo, d)] = ctx.astype(ctx_ref.dtype)

    # ---- out-projection over all B*S rows at once + residual ----
    hid = (x
           + jnp.dot(ctx_ref[...], wout_ref[...], preferred_element_type=f32)
           + bout_ref[...].astype(f32))

    # ---- RMSNorm (ffn) fused into gate_up; SwiGLU streamed over intermediate ----
    var2 = jnp.mean(hid * hid, axis=-1, keepdims=True)
    hn = (hid * jax.lax.rsqrt(var2 + eps) * ffn_nw_ref[...].astype(f32)).astype(mm_dtype)

    out = hid
    chunk = min(inter, FFN_CHUNK)
    for c0 in range(0, inter, chunk):
        cw = min(chunk, inter - c0)
        g = jnp.dot(hn, wgu_ref[:, pl.ds(c0, cw)], preferred_element_type=f32)
        u = jnp.dot(hn, wgu_ref[:, pl.ds(inter + c0, cw)], preferred_element_type=f32)
        act = (g * jax.lax.logistic(g) * u).astype(mm_dtype)   # SiLU(gate) * up
        out = out + jnp.dot(act, wdown_ref[pl.ds(c0, cw), :],
                            preferred_element_type=f32)

    o_ref[...] = out.astype(o_ref.dtype)


# ----------------------------- wrapper ---------------------------------------
def pixtral_transformer_block(hidden_states, params, position_embeddings,
                              attention_mask=None):
    # TODO(synk): block-diagonal attention_mask for multi-image batches is not
    # implemented; Pixtral passes None for single-image batches.
    assert attention_mask is None

    b, s, h = hidden_states.shape
    cos, sin = position_embeddings
    d = cos.shape[-1]
    half = d // 2
    f32 = jnp.float32

    # Rotary tables stay f32 regardless of the activation dtype (tiny [S, d]).
    cos = cos.astype(f32)
    sin = sin.astype(f32)
    # pre-signed sin so in-kernel rotate_half is a single XLU roll:
    #   rotate_half(t) * sin == roll(t, d/2, lanes) * sins
    sins = jnp.concatenate([-sin[:, :half], sin[:, half:]], axis=-1)

    # Fold the attention scale (d**-0.5) into the Q columns of the QKV proj.
    scale = float(d) ** -0.5
    w_qkv = params["w_qkv"]
    b_qkv = params["b_qkv"]
    w_qkv = jnp.concatenate([w_qkv[:, :h] * scale, w_qkv[:, h:]], axis=-1).astype(w_qkv.dtype)
    b_qkv = jnp.concatenate([b_qkv[:, :h] * scale, b_qkv[:, h:]], axis=-1).astype(b_qkv.dtype)

    # Fold batch into the matmul M dimension (free bitcast reshape).
    x2d = hidden_states.reshape(b * s, h)

    kernel = functools.partial(pixtral_block_kernel, eps=EPS)

    def full2d(a):
        return pl.BlockSpec(a.shape, lambda i: (0, 0))

    operands = (x2d, cos, sins,
                params["attn_norm_w"], w_qkv, b_qkv,
                params["w_out"], params["b_out"],
                params["ffn_norm_w"], params["w_gate_up"], params["w_down"])

    out2d = pl.pallas_call(
        kernel,
        out_shape=jax.ShapeDtypeStruct((b * s, h), hidden_states.dtype),
        grid=(1,),
        in_specs=[full2d(a) for a in operands],
        out_specs=full2d(x2d),
        scratch_shapes=[pltpu.VMEM((b * s, h), hidden_states.dtype)],  # ctx slab
        compiler_params=pltpu.CompilerParams(
            dimension_semantics=("arbitrary",),
            # TODO(synk): at real Pixtral sizes add a parallel sequence-tile
            # axis and raise vmem_limit_bytes explicitly.
        ),
    )(*operands)
    return out2d.reshape(b, s, h)


# ----------------------------- pure-JAX reference ----------------------------
def rotate_half(x):
    half = x.shape[-1] // 2
    return jnp.concatenate([-x[..., half:], x[..., :half]], axis=-1)


def apply_rotary(q, k, cos, sin):
    cos = cos[None, None, :, :]
    sin = sin[None, None, :, :]
    return q * cos + rotate_half(q) * sin, k * cos + rotate_half(k) * sin


def reference_block(hidden_states, params, position_embeddings):
    b, s, h = hidden_states.shape
    x2d = hidden_states.reshape(-1, h)

    def rms(x, w):
        var = jnp.mean(x * x, axis=-1, keepdims=True)
        return x * jax.lax.rsqrt(var + EPS) * w

    attn_in = rms(x2d, params["attn_norm_w"])
    qkv = attn_in @ params["w_qkv"] + params["b_qkv"]
    q, k, v = jnp.split(qkv, 3, axis=-1)
    q = q.reshape(b, s, NUM_HEADS, HEAD_DIM).transpose(0, 2, 1, 3)
    k = k.reshape(b, s, NUM_HEADS, HEAD_DIM).transpose(0, 2, 1, 3)
    v = v.reshape(b, s, NUM_HEADS, HEAD_DIM).transpose(0, 2, 1, 3)
    cos, sin = position_embeddings
    q, k = apply_rotary(q, k, cos, sin)
    scale = float(HEAD_DIM) ** -0.5
    scores = jnp.einsum("bhqd,bhkd->bhqk", q, k) * scale
    probs = jax.nn.softmax(scores, axis=-1)
    ctx = jnp.einsum("bhqk,bhkd->bhqd", probs, v)
    ctx = ctx.transpose(0, 2, 1, 3).reshape(-1, h)
    hid = x2d + ctx @ params["w_out"] + params["b_out"]

    ffn_in = rms(hid, params["ffn_norm_w"])
    gu = ffn_in @ params["w_gate_up"]
    gate, up = jnp.split(gu, 2, axis=-1)
    ffn = (jax.nn.silu(gate) * up) @ params["w_down"]
    return (hid + ffn).reshape(b, s, h)


# ----------------------------- main ------------------------------------------
if __name__ == "__main__":
    key = jax.random.PRNGKey(0)
    ks = jax.random.split(key, 9)

    B, S = 2, 64
    hidden_states = jax.random.normal(ks[0], (B, S, HIDDEN), jnp.float32)

    params = {
        "attn_norm_w": 1.0 + 0.02 * jax.random.normal(ks[1], (1, HIDDEN), jnp.float32),
        "ffn_norm_w": 1.0 + 0.02 * jax.random.normal(ks[2], (1, HIDDEN), jnp.float32),
        "w_qkv": 0.05 * jax.random.normal(ks[3], (HIDDEN, 3 * HIDDEN), jnp.float32),
        "b_qkv": 0.01 * jax.random.normal(ks[4], (1, 3 * HIDDEN), jnp.float32),
        "w_out": 0.05 * jax.random.normal(ks[5], (HIDDEN, HIDDEN), jnp.float32),
        "b_out": 0.01 * jax.random.normal(ks[6], (1, HIDDEN), jnp.float32),
        "w_gate_up": 0.05 * jax.random.normal(ks[7], (HIDDEN, 2 * INTERMEDIATE), jnp.float32),
        "w_down": 0.05 * jax.random.normal(ks[8], (INTERMEDIATE, HIDDEN), jnp.float32),
    }

    # rotary position embeddings (HF rotate_half convention), [S, HEAD_DIM]
    inv_freq = 1.0 / (10000.0 ** (jnp.arange(0, HEAD_DIM, 2, dtype=jnp.float32) / HEAD_DIM))
    pos = jnp.arange(S, dtype=jnp.float32)
    freqs = jnp.outer(pos, inv_freq)
    emb = jnp.concatenate([freqs, freqs], axis=-1)
    position_embeddings = (jnp.cos(emb), jnp.sin(emb))

    ref = reference_block(hidden_states, params, position_embeddings)

    # ---- f32 run (exact softmax division -> tighter tolerance than before) ----
    out = pixtral_transformer_block(hidden_states, params, position_embeddings)
    out = jax.block_until_ready(out)
    assert out.shape == (B, S, HIDDEN)
    assert jnp.allclose(out, ref, rtol=1e-2, atol=1e-2), "f32 mismatch vs reference"

    # ---- bf16 run: compare against an f32 reference on bf16-rounded weights ----
    to_bf16 = lambda t: t.astype(jnp.bfloat16)
    hs_bf16 = to_bf16(hidden_states)
    params_bf16 = {k: to_bf16(v) for k, v in params.items()}
    out_bf16 = pixtral_transformer_block(hs_bf16, params_bf16, position_embeddings)
    out_bf16 = jax.block_until_ready(out_bf16)
    assert out_bf16.dtype == jnp.bfloat16
    ref_bf16 = reference_block(
        hs_bf16.astype(jnp.float32),
        {k: v.astype(jnp.float32) for k, v in params_bf16.items()},
        position_embeddings)
    assert jnp.allclose(out_bf16.astype(jnp.float32), ref_bf16, rtol=4e-2, atol=4e-2), \
        "bf16 mismatch vs bf16-weight reference"

    print("KERNEL_OK")
</pallas_src>

<mosaic_0001>
module attributes {stable_mosaic.version = 11 : i64} {
  func.func @pixtral_block_kernel(%arg0: i32, %arg1: memref<128x256xf32, #tpu.memory_space<vmem>>, %arg2: memref<64x128xf32, #tpu.memory_space<vmem>>, %arg3: memref<64x128xf32, #tpu.memory_space<vmem>>, %arg4: memref<1x256xf32, #tpu.memory_space<vmem>>, %arg5: memref<256x768xf32, #tpu.memory_space<vmem>>, %arg6: memref<1x768xf32, #tpu.memory_space<vmem>>, %arg7: memref<256x256xf32, #tpu.memory_space<vmem>>, %arg8: memref<1x256xf32, #tpu.memory_space<vmem>>, %arg9: memref<1x256xf32, #tpu.memory_space<vmem>>, %arg10: memref<256x1024xf32, #tpu.memory_space<vmem>>, %arg11: memref<512x256xf32, #tpu.memory_space<vmem>>, %arg12: memref<128x256xf32, #tpu.memory_space<vmem>>, %arg13: memref<128x256xf32, #tpu.memory_space<vmem>>) attributes {dimension_semantics = [#tpu.dimension_semantics<arbitrary>], iteration_bounds = array<i64: 1>, scalar_prefetch = 0 : i64, scratch_operands = 1 : i64, tpu.core_type = #tpu.core_type<tc>, window_params = [{pipeline_mode = #tpu.pipeline_mode<synchronous>, transform_indices = @transform_0, window_bounds = array<i64: 128, 256>}, {pipeline_mode = #tpu.pipeline_mode<synchronous>, transform_indices = @transform_1, window_bounds = array<i64: 64, 128>}, {pipeline_mode = #tpu.pipeline_mode<synchronous>, transform_indices = @transform_2, window_bounds = array<i64: 64, 128>}, {pipeline_mode = #tpu.pipeline_mode<synchronous>, transform_indices = @transform_3, window_bounds = array<i64: 1, 256>}, {pipeline_mode = #tpu.pipeline_mode<synchronous>, transform_indices = @transform_4, window_bounds = array<i64: 256, 768>}, {pipeline_mode = #tpu.pipeline_mode<synchronous>, transform_indices = @transform_5, window_bounds = array<i64: 1, 768>}, {pipeline_mode = #tpu.pipeline_mode<synchronous>, transform_indices = @transform_6, window_bounds = array<i64: 256, 256>}, {pipeline_mode = #tpu.pipeline_mode<synchronous>, transform_indices = @transform_7, window_bounds = array<i64: 1, 256>}, {pipeline_mode = #tpu.pipeline_mode<synchronous>, transform_indices = @transform_8, window_bounds = array<i64: 1, 256>}, {pipeline_mode = #tpu.pipeline_mode<synchronous>, transform_indices = @transform_9, window_bounds = array<i64: 256, 1024>}, {pipeline_mode = #tpu.pipeline_mode<synchronous>, transform_indices = @transform_10, window_bounds = array<i64: 512, 256>}, {pipeline_mode = #tpu.pipeline_mode<synchronous>, transform_indices = @transform_11, window_bounds = array<i64: 128, 256>}]} {
    %c0 = arith.constant 0 : index
    %c0_0 = arith.constant 0 : index
    %0 = vector.load %arg1[%c0, %c0_0] : memref<128x256xf32, #tpu.memory_space<vmem>>, vector<128x256xf32>
    %1 = arith.mulf %0, %0 : vector<128x256xf32>
    %cst = arith.constant dense<0.000000e+00> : vector<128xf32>
    %2 = vector.multi_reduction <add>, %1, %cst [1] : vector<128x256xf32> to vector<128xf32>
    %3 = vector.shape_cast %2 : vector<128xf32> to vector<128x1xf32>
    %cst_1 = arith.constant 2.560000e+02 : f32
    %4 = vector.broadcast %cst_1 : f32 to vector<128x1xf32>
    %5 = arith.divf %3, %4 : vector<128x1xf32>
    %cst_2 = arith.constant 9.99999974E-6 : f32
    %6 = vector.broadcast %cst_2 : f32 to vector<128x1xf32>
    %7 = arith.addf %5, %6 : vector<128x1xf32>
    %8 = math.rsqrt %7 : vector<128x1xf32>
    %9 = vector.broadcast %8 : vector<128x1xf32> to vector<128x256xf32>
    %10 = arith.mulf %0, %9 : vector<128x256xf32>
    %c0_3 = arith.constant 0 : index
    %c0_4 = arith.constant 0 : index
    %11 = vector.load %arg4[%c0_3, %c0_4] : memref<1x256xf32, #tpu.memory_space<vmem>>, vector<1x256xf32>
    %12 = vector.broadcast %11 : vector<1x256xf32> to vector<128x256xf32>
    %13 = arith.mulf %10, %12 : vector<128x256xf32>
    %c0_5 = arith.constant 0 : index
    %c0_6 = arith.constant 0 : index
    %14 = vector.load %arg5[%c0_5, %c0_6] : memref<256x768xf32, #tpu.memory_space<vmem>>, vector<256x768xf32>
    %cst_7 = arith.constant dense<0.000000e+00> : vector<128x768xf32>
    %15 = tpu.matmul %13, %14, %cst_7 {dimension_numbers = #tpu.dot_dimension_numbers<[1], [0], [0], [1], [0, 0, 1, 1], [], []>} : vector<128x256xf32>, vector<256x768xf32>, vector<128x768xf32> -> vector<128x768xf32>
    %c0_8 = arith.constant 0 : index
    %c0_9 = arith.constant 0 : index
    %16 = vector.load %arg6[%c0_8, %c0_9] : memref<1x768xf32, #tpu.memory_space<vmem>>, vector<1x768xf32>
    %17 = vector.broadcast %16 : vector<1x768xf32> to vector<128x768xf32>
    %18 = arith.addf %15, %17 : vector<128x768xf32>
    %c0_10 = arith.constant 0 : index
    %c0_11 = arith.constant 0 : index
    %19 = vector.load %arg2[%c0_10, %c0_11] : memref<64x128xf32, #tpu.memory_space<vmem>>, vector<64x128xf32>
    %c0_12 = arith.constant 0 : index
    %c0_13 = arith.constant 0 : index
    %20 = vector.load %arg3[%c0_12, %c0_13] : memref<64x128xf32, #tpu.memory_space<vmem>>, vector<64x128xf32>
    %21 = vector.extract_strided_slice %18 {offsets = [0, 0], sizes = [64, 128], strides = [1, 1]} : vector<128x768xf32> to vector<64x128xf32>
    %22 = vector.extract_strided_slice %18 {offsets = [0, 256], sizes = [64, 128], strides = [1, 1]} : vector<128x768xf32> to vector<64x128xf32>
    %23 = vector.extract_strided_slice %18 {offsets = [0, 512], sizes = [64, 128], strides = [1, 1]} : vector<128x768xf32> to vector<64x128xf32>
    %24 = arith.mulf %21, %19 : vector<64x128xf32>
    %c64_i32 = arith.constant 64 : i32
    %25 = tpu.dynamic_rotate %21 by %c64_i32 dim 1 : vector<64x128xf32>, i32 -> vector<64x128xf32>
    %26 = arith.mulf %25, %20 : vector<64x128xf32>
    %27 = arith.addf %24, %26 : vector<64x128xf32>
    %28 = arith.mulf %22, %19 : vector<64x128xf32>
    %c64_i32_14 = arith.constant 64 : i32
    %29 = tpu.dynamic_rotate %22 by %c64_i32_14 dim 1 : vector<64x128xf32>, i32 -> vector<64x128xf32>
    %30 = arith.mulf %29, %20 : vector<64x128xf32>
    %31 = arith.addf %28, %30 : vector<64x128xf32>
    %cst_15 = arith.constant dense<0.000000e+00> : vector<64x64xf32>
    %32 = tpu.matmul %27, %31, %cst_15 {dimension_numbers = #tpu.dot_dimension_numbers<[1], [1], [0], [0], [0, 0, 1, 0], [], []>} : vector<64x128xf32>, vector<64x128xf32>, vector<64x64xf32> -> vector<64x64xf32>
    %cst_16 = arith.constant dense<0xFF800000> : vector<64xf32>
    %33 = vector.multi_reduction <maximumf>, %32, %cst_16 [1] : vector<64x64xf32> to vector<64xf32>
    %34 = vector.shape_cast %33 : vector<64xf32> to vector<64x1xf32>
    %35 = vector.broadcast %34 : vector<64x1xf32> to vector<64x64xf32>
    %36 = arith.subf %32, %35 : vector<64x64xf32>
    %37 = math.exp %36 : vector<64x64xf32>
    %cst_17 = arith.constant dense<0.000000e+00> : vector<64xf32>
    %38 = vector.multi_reduction <add>, %37, %cst_17 [1] : vector<64x64xf32> to vector<64xf32>
    %39 = vector.shape_cast %38 : vector<64xf32> to vector<64x1xf32>
    %40 = vector.broadcast %39 : vector<64x1xf32> to vector<64x64xf32>
    %41 = arith.divf %37, %40 : vector<64x64xf32>
    %cst_18 = arith.constant dense<0.000000e+00> : vector<64x128xf32>
    %42 = tpu.matmul %41, %23, %cst_18 {dimension_numbers = #tpu.dot_dimension_numbers<[1], [0], [0], [1], [0, 0, 1, 1], [], []>} : vector<64x64xf32>, vector<64x128xf32>, vector<64x128xf32> -> vector<64x128xf32>
    %c0_19 = arith.constant 0 : index
    %c0_20 = arith.constant 0 : index
    %43 = vector.load %arg13[%c0_19, %c0_20] : memref<128x256xf32, #tpu.memory_space<vmem>>, vector<64x128xf32>
    tpu.vector_store %arg13[%c0_19, %c0_20], %42 {strides = array<i32>} : memref<128x256xf32, #tpu.memory_space<vmem>>, vector<64x128xf32>,
    %44 = vector.extract_strided_slice %18 {offsets = [0, 128], sizes = [64, 128], strides = [1, 1]} : vector<128x768xf32> to vector<64x128xf32>
    %45 = vector.extract_strided_slice %18 {offsets = [0, 384], sizes = [64, 128], strides = [1, 1]} : vector<128x768xf32> to vector<64x128xf32>
    %46 = vector.extract_strided_slice %18 {offsets = [0, 640], sizes = [64, 128], strides = [1, 1]} : vector<128x768xf32> to vector<64x128xf32>
    %47 = arith.mulf %44, %19 : vector<64x128xf32>
    %c64_i32_21 = arith.constant 64 : i32
    %48 = tpu.dynamic_rotate %44 by %c64_i32_21 dim 1 : vector<64x128xf32>, i32 -> vector<64x128xf32>
    %49 = arith.mulf %48, %20 : vector<64x128xf32>
    %50 = arith.addf %47, %49 : vector<64x128xf32>
    %51 = arith.mulf %45, %19 : vector<64x128xf32>
    %c64_i32_22 = arith.constant 64 : i32
    %52 = tpu.dynamic_rotate %45 by %c64_i32_22 dim 1 : vector<64x128xf32>, i32 -> vector<64x128xf32>
    %53 = arith.mulf %52, %20 : vector<64x128xf32>
    %54 = arith.addf %51, %53 : vector<64x128xf32>
    %cst_23 = arith.constant dense<0.000000e+00> : vector<64x64xf32>
    %55 = tpu.matmul %50, %54, %cst_23 {dimension_numbers = #tpu.dot_dimension_numbers<[1], [1], [0], [0], [0, 0, 1, 0], [], []>} : vector<64x128xf32>, vector<64x128xf32>, vector<64x64xf32> -> vector<64x64xf32>
    %cst_24 = arith.constant dense<0xFF800000> : vector<64xf32>
    %56 = vector.multi_reduction <maximumf>, %55, %cst_24 [1] : vector<64x64xf32> to vector<64xf32>
    %57 = vector.shape_cast %56 : vector<64xf32> to vector<64x1xf32>
    %58 = vector.broadcast %57 : vector<64x1xf32> to vector<64x64xf32>
    %59 = arith.subf %55, %58 : vector<64x64xf32>
    %60 = math.exp %59 : vector<64x64xf32>
    %cst_25 = arith.constant dense<0.000000e+00> : vector<64xf32>
    %61 = vector.multi_reduction <add>, %60, %cst_25 [1] : vector<64x64xf32> to vector<64xf32>
    %62 = vector.shape_cast %61 : vector<64xf32> to vector<64x1xf32>
    %63 = vector.broadcast %62 : vector<64x1xf32> to vector<64x64xf32>
    %64 = arith.divf %60, %63 : vector<64x64xf32>
    %cst_26 = arith.constant dense<0.000000e+00> : vector<64x128xf32>
    %65 = tpu.matmul %64, %46, %cst_26 {dimension_numbers = #tpu.dot_dimension_numbers<[1], [0], [0], [1], [0, 0, 1, 1], [], []>} : vector<64x64xf32>, vector<64x128xf32>, vector<64x128xf32> -> vector<64x128xf32>
    %c0_27 = arith.constant 0 : index
    %c128 = arith.constant 128 : index
    %66 = vector.load %arg13[%c0_27, %c128] : memref<128x256xf32, #tpu.memory_space<vmem>>, vector<64x128xf32>
    tpu.vector_store %arg13[%c0_27, %c128], %65 {strides = array<i32>} : memref<128x256xf32, #tpu.memory_space<vmem>>, vector<64x128xf32>,
    %67 = vector.extract_strided_slice %18 {offsets = [64, 0], sizes = [64, 128], strides = [1, 1]} : vector<128x768xf32> to vector<64x128xf32>
    %68 = vector.extract_strided_slice %18 {offsets = [64, 256], sizes = [64, 128], strides = [1, 1]} : vector<128x768xf32> to vector<64x128xf32>
    %69 = vector.extract_strided_slice %18 {offsets = [64, 512], sizes = [64, 128], strides = [1, 1]} : vector<128x768xf32> to vector<64x128xf32>
    %70 = arith.mulf %67, %19 : vector<64x128xf32>
    %c64_i32_28 = arith.constant 64 : i32
    %71 = tpu.dynamic_rotate %67 by %c64_i32_28 dim 1 : vector<64x128xf32>, i32 -> vector<64x128xf32>
    %72 = arith.mulf %71, %20 : vector<64x128xf32>
    %73 = arith.addf %70, %72 : vector<64x128xf32>
    %74 = arith.mulf %68, %19 : vector<64x128xf32>
    %c64_i32_29 = arith.constant 64 : i32
    %75 = tpu.dynamic_rotate %68 by %c64_i32_29 dim 1 : vector<64x128xf32>, i32 -> vector<64x128xf32>
    %76 = arith.mulf %75, %20 : vector<64x128xf32>
    %77 = arith.addf %74, %76 : vector<64x128xf32>
    %cst_30 = arith.constant dense<0.000000e+00> : vector<64x64xf32>
    %78 = tpu.matmul %73, %77, %cst_30 {dimension_numbers = #tpu.dot_dimension_numbers<[1], [1], [0], [0], [0, 0, 1, 0], [], []>} : vector<64x128xf32>, vector<64x128xf32>, vector<64x64xf32> -> vector<64x64xf32>
    %cst_31 = arith.constant dense<0xFF800000> : vector<64xf32>
    %79 = vector.multi_reduction <maximumf>, %78, %cst_31 [1] : vector<64x64xf32> to vector<64xf32>
    %80 = vector.shape_cast %79 : vector<64xf32> to vector<64x1xf32>
    %81 = vector.broadcast %80 : vector<64x1xf32> to vector<64x64xf32>
    %82 = arith.subf %78, %81 : vector<64x64xf32>
    %83 = math.exp %82 : vector<64x64xf32>
    %cst_32 = arith.constant dense<0.000000e+00> : vector<64xf32>
    %84 = vector.multi_reduction <add>, %83, %cst_32 [1] : vector<64x64xf32> to vector<64xf32>
    %85 = vector.shape_cast %84 : vector<64xf32> to vector<64x1xf32>
    %86 = vector.broadcast %85 : vector<64x1xf32> to vector<64x64xf32>
    %87 = arith.divf %83, %86 : vector<64x64xf32>
    %cst_33 = arith.constant dense<0.000000e+00> : vector<64x128xf32>
    %88 = tpu.matmul %87, %69, %cst_33 {dimension_numbers = #tpu.dot_dimension_numbers<[1], [0], [0], [1], [0, 0, 1, 1], [], []>} : vector<64x64xf32>, vector<64x128xf32>, vector<64x128xf32> -> vector<64x128xf32>
    %c64 = arith.constant 64 : index
    %c0_34 = arith.constant 0 : index
    %89 = vector.load %arg13[%c64, %c0_34] : memref<128x256xf32, #tpu.memory_space<vmem>>, vector<64x128xf32>
    tpu.vector_store %arg13[%c64, %c0_34], %88 {strides = array<i32>} : memref<128x256xf32, #tpu.memory_space<vmem>>, vector<64x128xf32>,
    %90 = vector.extract_strided_slice %18 {offsets = [64, 128], sizes = [64, 128], strides = [1, 1]} : vector<128x768xf32> to vector<64x128xf32>
    %91 = vector.extract_strided_slice %18 {offsets = [64, 384], sizes = [64, 128], strides = [1, 1]} : vector<128x768xf32> to vector<64x128xf32>
    %92 = vector.extract_strided_slice %18 {offsets = [64, 640], sizes = [64, 128], strides = [1, 1]} : vector<128x768xf32> to vector<64x128xf32>
    %93 = arith.mulf %90, %19 : vector<64x128xf32>
    %c64_i32_35 = arith.constant 64 : i32
    %94 = tpu.dynamic_rotate %90 by %c64_i32_35 dim 1 : vector<64x128xf32>, i32 -> vector<64x128xf32>
    %95 = arith.mulf %94, %20 : vector<64x128xf32>
    %96 = arith.addf %93, %95 : vector<64x128xf32>
    %97 = arith.mulf %91, %19 : vector<64x128xf32>
    %c64_i32_36 = arith.constant 64 : i32
    %98 = tpu.dynamic_rotate %91 by %c64_i32_36 dim 1 : vector<64x128xf32>, i32 -> vector<64x128xf32>
    %99 = arith.mulf %98, %20 : vector<64x128xf32>
    %100 = arith.addf %97, %99 : vector<64x128xf32>
    %cst_37 = arith.constant dense<0.000000e+00> : vector<64x64xf32>
    %101 = tpu.matmul %96, %100, %cst_37 {dimension_numbers = #tpu.dot_dimension_numbers<[1], [1], [0], [0], [0, 0, 1, 0], [], []>} : vector<64x128xf32>, vector<64x128xf32>, vector<64x64xf32> -> vector<64x64xf32>
    %cst_38 = arith.constant dense<0xFF800000> : vector<64xf32>
    %102 = vector.multi_reduction <maximumf>, %101, %cst_38 [1] : vector<64x64xf32> to vector<64xf32>
    %103 = vector.shape_cast %102 : vector<64xf32> to vector<64x1xf32>
    %104 = vector.broadcast %103 : vector<64x1xf32> to vector<64x64xf32>
    %105 = arith.subf %101, %104 : vector<64x64xf32>
    %106 = math.exp %105 : vector<64x64xf32>
    %cst_39 = arith.constant dense<0.000000e+00> : vector<64xf32>
    %107 = vector.multi_reduction <add>, %106, %cst_39 [1] : vector<64x64xf32> to vector<64xf32>
    %108 = vector.shape_cast %107 : vector<64xf32> to vector<64x1xf32>
    %109 = vector.broadcast %108 : vector<64x1xf32> to vector<64x64xf32>
    %110 = arith.divf %106, %109 : vector<64x64xf32>
    %cst_40 = arith.constant dense<0.000000e+00> : vector<64x128xf32>
    %111 = tpu.matmul %110, %92, %cst_40 {dimension_numbers = #tpu.dot_dimension_numbers<[1], [0], [0], [1], [0, 0, 1, 1], [], []>} : vector<64x64xf32>, vector<64x128xf32>, vector<64x128xf32> -> vector<64x128xf32>
    %c64_41 = arith.constant 64 : index
    %c128_42 = arith.constant 128 : index
    %112 = vector.load %arg13[%c64_41, %c128_42] : memref<128x256xf32, #tpu.memory_space<vmem>>, vector<64x128xf32>
    tpu.vector_store %arg13[%c64_41, %c128_42], %111 {strides = array<i32>} : memref<128x256xf32, #tpu.memory_space<vmem>>, vector<64x128xf32>,
    %c0_43 = arith.constant 0 : index
    %c0_44 = arith.constant 0 : index
    %113 = vector.load %arg13[%c0_43, %c0_44] : memref<128x256xf32, #tpu.memory_space<vmem>>, vector<128x256xf32>
    %c0_45 = arith.constant 0 : index
    %c0_46 = arith.constant 0 : index
    %114 = vector.load %arg7[%c0_45, %c0_46] : memref<256x256xf32, #tpu.memory_space<vmem>>, vector<256x256xf32>
    %cst_47 = arith.constant dense<0.000000e+00> : vector<128x256xf32>
    %115 = tpu.matmul %113, %114, %cst_47 {dimension_numbers = #tpu.dot_dimension_numbers<[1], [0], [0], [1], [0, 0, 1, 1], [], []>} : vector<128x256xf32>, vector<256x256xf32>, vector<128x256xf32> -> vector<128x256xf32>
    %116 = arith.addf %0, %115 : vector<128x256xf32>
    %c0_48 = arith.constant 0 : index
    %c0_49 = arith.constant 0 : index
    %117 = vector.load %arg8[%c0_48, %c0_49] : memref<1x256xf32, #tpu.memory_space<vmem>>, vector<1x256xf32>
    %118 = vector.broadcast %117 : vector<1x256xf32> to vector<128x256xf32>
    %119 = arith.addf %116, %118 : vector<128x256xf32>
    %120 = arith.mulf %119, %119 : vector<128x256xf32>
    %cst_50 = arith.constant dense<0.000000e+00> : vector<128xf32>
    %121 = vector.multi_reduction <add>, %120, %cst_50 [1] : vector<128x256xf32> to vector<128xf32>
    %122 = vector.shape_cast %121 : vector<128xf32> to vector<128x1xf32>
    %cst_51 = arith.constant 2.560000e+02 : f32
    %123 = vector.broadcast %cst_51 : f32 to vector<128x1xf32>
    %124 = arith.divf %122, %123 : vector<128x1xf32>
    %cst_52 = arith.constant 9.99999974E-6 : f32
    %125 = vector.broadcast %cst_52 : f32 to vector<128x1xf32>
    %126 = arith.addf %124, %125 : vector<128x1xf32>
    %127 = math.rsqrt %126 : vector<128x1xf32>
    %128 = vector.broadcast %127 : vector<128x1xf32> to vector<128x256xf32>
    %129 = arith.mulf %119, %128 : vector<128x256xf32>
    %c0_53 = arith.constant 0 : index
    %c0_54 = arith.constant 0 : index
    %130 = vector.load %arg9[%c0_53, %c0_54] : memref<1x256xf32, #tpu.memory_space<vmem>>, vector<1x256xf32>
    %131 = vector.broadcast %130 : vector<1x256xf32> to vector<128x256xf32>
    %132 = arith.mulf %129, %131 : vector<128x256xf32>
    %c0_55 = arith.constant 0 : index
    %c0_56 = arith.constant 0 : index
    %133 = vector.load %arg10[%c0_55, %c0_56] : memref<256x1024xf32, #tpu.memory_space<vmem>>, vector<256x256xf32>
    %cst_57 = arith.constant dense<0.000000e+00> : vector<128x256xf32>
    %134 = tpu.matmul %132, %133, %cst_57 {dimension_numbers = #tpu.dot_dimension_numbers<[1], [0], [0], [1], [0, 0, 1, 1], [], []>} : vector<128x256xf32>, vector<256x256xf32>, vector<128x256xf32> -> vector<128x256xf32>
    %c0_58 = arith.constant 0 : index
    %c512 = arith.constant 512 : index
    %135 = vector.load %arg10[%c0_58, %c512] : memref<256x1024xf32, #tpu.memory_space<vmem>>, vector<256x256xf32>
    %cst_59 = arith.constant dense<0.000000e+00> : vector<128x256xf32>
    %136 = tpu.matmul %132, %135, %cst_59 {dimension_numbers = #tpu.dot_dimension_numbers<[1], [0], [0], [1], [0, 0, 1, 1], [], []>} : vector<128x256xf32>, vector<256x256xf32>, vector<128x256xf32> -> vector<128x256xf32>
    %137 = arith.negf %134 : vector<128x256xf32>
    %138 = math.exp %137 : vector<128x256xf32>
    %cst_60 = arith.constant 1.000000e+00 : f32
    %139 = vector.broadcast %cst_60 : f32 to vector<128x256xf32>
    %140 = arith.addf %139, %138 : vector<128x256xf32>
    %141 = arith.divf %139, %140 : vector<128x256xf32>
    %142 = arith.mulf %134, %141 : vector<128x256xf32>
    %143 = arith.mulf %142, %136 : vector<128x256xf32>
    %c0_61 = arith.constant 0 : index
    %c0_62 = arith.constant 0 : index
    %144 = vector.load %arg11[%c0_61, %c0_62] : memref<512x256xf32, #tpu.memory_space<vmem>>, vector<256x256xf32>
    %cst_63 = arith.constant dense<0.000000e+00> : vector<128x256xf32>
    %145 = tpu.matmul %143, %144, %cst_63 {dimension_numbers = #tpu.dot_dimension_numbers<[1], [0], [0], [1], [0, 0, 1, 1], [], []>} : vector<128x256xf32>, vector<256x256xf32>, vector<128x256xf32> -> vector<128x256xf32>
    %146 = arith.addf %119, %145 : vector<128x256xf32>
    %c0_64 = arith.constant 0 : index
    %c256 = arith.constant 256 : index
    %147 = vector.load %arg10[%c0_64, %c256] : memref<256x1024xf32, #tpu.memory_space<vmem>>, vector<256x256xf32>
    %cst_65 = arith.constant dense<0.000000e+00> : vector<128x256xf32>
    %148 = tpu.matmul %132, %147, %cst_65 {dimension_numbers = #tpu.dot_dimension_numbers<[1], [0], [0], [1], [0, 0, 1, 1], [], []>} : vector<128x256xf32>, vector<256x256xf32>, vector<128x256xf32> -> vector<128x256xf32>
    %c0_66 = arith.constant 0 : index
    %c768 = arith.constant 768 : index
    %149 = vector.load %arg10[%c0_66, %c768] : memref<256x1024xf32, #tpu.memory_space<vmem>>, vector<256x256xf32>
    %cst_67 = arith.constant dense<0.000000e+00> : vector<128x256xf32>
    %150 = tpu.matmul %132, %149, %cst_67 {dimension_numbers = #tpu.dot_dimension_numbers<[1], [0], [0], [1], [0, 0, 1, 1], [], []>} : vector<128x256xf32>, vector<256x256xf32>, vector<128x256xf32> -> vector<128x256xf32>
    %151 = arith.negf %148 : vector<128x256xf32>
    %152 = math.exp %151 : vector<128x256xf32>
    %cst_68 = arith.constant 1.000000e+00 : f32
    %153 = vector.broadcast %cst_68 : f32 to vector<128x256xf32>
    %154 = arith.addf %153, %152 : vector<128x256xf32>
    %155 = arith.divf %153, %154 : vector<128x256xf32>
    %156 = arith.mulf %148, %155 : vector<128x256xf32>
    %157 = arith.mulf %156, %150 : vector<128x256xf32>
    %c256_69 = arith.constant 256 : index
    %c0_70 = arith.constant 0 : index
    %158 = vector.load %arg11[%c256_69, %c0_70] : memref<512x256xf32, #tpu.memory_space<vmem>>, vector<256x256xf32>
    %cst_71 = arith.constant dense<0.000000e+00> : vector<128x256xf32>
    %159 = tpu.matmul %157, %158, %cst_71 {dimension_numbers = #tpu.dot_dimension_numbers<[1], [0], [0], [1], [0, 0, 1, 1], [], []>} : vector<128x256xf32>, vector<256x256xf32>, vector<128x256xf32> -> vector<128x256xf32>
    %160 = arith.addf %146, %159 : vector<128x256xf32>
    %c0_72 = arith.constant 0 : index
    %c0_73 = arith.constant 0 : index
    %161 = vector.load %arg12[%c0_72, %c0_73] : memref<128x256xf32, #tpu.memory_space<vmem>>, vector<128x256xf32>
    tpu.vector_store %arg12[%c0_72, %c0_73], %160 {strides = array<i32>} : memref<128x256xf32, #tpu.memory_space<vmem>>, vector<128x256xf32>,
    return
  }
  func.func @transform_0(%arg0: i32) -> (i32, i32) {
    %c0_i32 = arith.constant 0 : i32
    %c0_i32_0 = arith.constant 0 : i32
    %c0_i32_1 = arith.constant 0 : i32
    return %c0_i32, %c0_i32_0 : i32, i32
  }
  func.func @transform_1(%arg0: i32) -> (i32, i32) {
    %c0_i32 = arith.constant 0 : i32
    %c0_i32_0 = arith.constant 0 : i32
    %c0_i32_1 = arith.constant 0 : i32
    return %c0_i32, %c0_i32_0 : i32, i32
  }
  func.func @transform_2(%arg0: i32) -> (i32, i32) {
    %c0_i32 = arith.constant 0 : i32
    %c0_i32_0 = arith.constant 0 : i32
    %c0_i32_1 = arith.constant 0 : i32
    return %c0_i32, %c0_i32_0 : i32, i32
  }
  func.func @transform_3(%arg0: i32) -> (i32, i32) {
    %c0_i32 = arith.constant 0 : i32
    %c0_i32_0 = arith.constant 0 : i32
    %c0_i32_1 = arith.constant 0 : i32
    return %c0_i32, %c0_i32_0 : i32, i32
  }
  func.func @transform_4(%arg0: i32) -> (i32, i32) {
    %c0_i32 = arith.constant 0 : i32
    %c0_i32_0 = arith.constant 0 : i32
    %c0_i32_1 = arith.constant 0 : i32
    return %c0_i32, %c0_i32_0 : i32, i32
  }
  func.func @transform_5(%arg0: i32) -> (i32, i32) {
    %c0_i32 = arith.constant 0 : i32
    %c0_i32_0 = arith.constant 0 : i32
    %c0_i32_1 = arith.constant 0 : i32
    return %c0_i32, %c0_i32_0 : i32, i32
  }
  func.func @transform_6(%arg0: i32) -> (i32, i32) {
    %c0_i32 = arith.constant 0 : i32
    %c0_i32_0 = arith.constant 0 : i32
    %c0_i32_1 = arith.constant 0 : i32
    return %c0_i32, %c0_i32_0 : i32, i32
  }
  func.func @transform_7(%arg0: i32) -> (i32, i32) {
    %c0_i32 = arith.constant 0 : i32
    %c0_i32_0 = arith.constant 0 : i32
    %c0_i32_1 = arith.constant 0 : i32
    return %c0_i32, %c0_i32_0 : i32, i32
  }
  func.func @transform_8(%arg0: i32) -> (i32, i32) {
    %c0_i32 = arith.constant 0 : i32
    %c0_i32_0 = arith.constant 0 : i32
    %c0_i32_1 = arith.constant 0 : i32
    return %c0_i32, %c0_i32_0 : i32, i32
  }
  func.func @transform_9(%arg0: i32) -> (i32, i32) {
    %c0_i32 = arith.constant 0 : i32
    %c0_i32_0 = arith.constant 0 : i32
    %c0_i32_1 = arith.constant 0 : i32
    return %c0_i32, %c0_i32_0 : i32, i32
  }
  func.func @transform_10(%arg0: i32) -> (i32, i32) {
    %c0_i32 = arith.constant 0 : i32
    %c0_i32_0 = arith.constant 0 : i32
    %c0_i32_1 = arith.constant 0 : i32
    return %c0_i32, %c0_i32_0 : i32, i32
  }
  func.func @transform_11(%arg0: i32) -> (i32, i32) {
    %c0_i32 = arith.constant 0 : i32
    %c0_i32_0 = arith.constant 0 : i32
    %c0_i32_1 = arith.constant 0 : i32
    return %c0_i32, %c0_i32_0 : i32, i32
  }
}

</mosaic_0001>

<llo_original>
// kernel: tpu_custom_call.1
$region0: #{tpu_custom_call.1}
  #allocation0 [shape = 'u32[]', space=smem, size = 0x4, offset = 0x4, fixed_abs, tag = 'smem constant byte address 0x4 - core index']
  #allocation1 [shape = 'u32[144,128]{1,0:T(1,128)}', space=vmem, size = 0x12000, scoped, tag = 'internal scratch']
  #allocation2 [shape = 'f32[128,256]{1,0:T(8,128)}', space=vmem, size = 0x20000, scoped, tag = 'scratch operand']
  %s0 = inlined_call_operand.hbm [shape: f32[128,256], index: 0, kind: input, shape index: {}]
  %s1 = inlined_call_operand.hbm [shape: f32[64,128], index: 1, kind: input, shape index: {}]
  %s2 = inlined_call_operand.hbm [shape: f32[64,128], index: 2, kind: input, shape index: {}]
  %s3 = inlined_call_operand.vmem [shape: f32[1,256], index: 3, kind: input, shape index: {}]
  %s4 = inlined_call_operand.hbm [shape: f32[256,768], index: 4, kind: input, shape index: {}]
  %s5 = inlined_call_operand.vmem [shape: f32[1,768], index: 5, kind: input, shape index: {}]
  %s6 = inlined_call_operand.hbm [shape: f32[256,256], index: 6, kind: input, shape index: {}]
  %s7 = inlined_call_operand.vmem [shape: f32[1,256], index: 7, kind: input, shape index: {}]
  %s8 = inlined_call_operand.vmem [shape: f32[1,256], index: 8, kind: input, shape index: {}]
  %s9 = inlined_call_operand.hbm [shape: f32[256,1024], index: 9, kind: input, shape index: {}]
  %s10 = inlined_call_operand.hbm [shape: f32[512,256], index: 10, kind: input, shape index: {}]
  %s11 = inlined_call_operand.hbm [shape: f32[128,256], index: 11, kind: output, shape index: {}]
  %s12 = sld [smem:[#allocation0]]
  $region82: #{tpu_custom_call.1} parent=0
    _
  %s14 = ssub.s32 1, %s12
  %s15 = scalar_select 0, %s14, %s12
  $region1: #{tpu_custom_call.1} parent=0
    #allocation3 [shape = 'u8[131072]{0}', space=vmem, size = 0x20000, scoped, tag = 'input window, operand 0, single buffered']
    #allocation4 [shape = 's32[1]{0}', space=sflag, size = 0x4, scoped, tag = 'scoped memory for tpu_custom_call.1']
    #allocation5 [shape = 's32[1]{0}', space=sflag, size = 0x4, scoped, tag = 'scoped memory for tpu_custom_call.1']
    #allocation6 [shape = 'u8[32768]{0}', space=vmem, size = 0x8000, scoped, tag = 'input window, operand 1, single buffered']
    #allocation7 [shape = 's32[1]{0}', space=sflag, size = 0x4, scoped, tag = 'scoped memory for tpu_custom_call.1']
    #allocation8 [shape = 'u8[32768]{0}', space=vmem, size = 0x8000, scoped, tag = 'input window, operand 2, single buffered']
    #allocation9 [shape = 'u8[786432]{0}', space=vmem, size = 0xc0000, scoped, tag = 'input window, operand 4, single buffered']
    #allocation10 [shape = 's32[1]{0}', space=sflag, size = 0x4, scoped, tag = 'scoped memory for tpu_custom_call.1']
    #allocation11 [shape = 'u8[262144]{0}', space=vmem, size = 0x40000, scoped, tag = 'input window, operand 6, single buffered']
    #allocation12 [shape = 'u8[1048576]{0}', space=vmem, size = 0x100000, scoped, tag = 'input window, operand 9, single buffered']
    #allocation13 [shape = 's32[1]{0}', space=sflag, size = 0x4, scoped, tag = 'scoped memory for tpu_custom_call.1']
    #allocation14 [shape = 'u8[524288]{0}', space=vmem, size = 0x80000, scoped, tag = 'input window, operand 10, single buffered']
    #allocation15 [shape = 'u8[131072]{0}', space=vmem, size = 0x20000, scoped, tag = 'output window, operand 0, single buffered']
    %16 = vsyncpa [#allocation4], 0
    %17 = vsyncpa [#allocation7], 0
    %18 = vsyncpa [#allocation10], 0
    %19 = vsyncpa [#allocation13], 0
    %20 = vsyncpa [#allocation5], 0
    // Predicated region
    $region2: #{tpu_custom_call.1} parent=1 // pred_check
      _
    $region3: #{tpu_custom_call.1} parent=1 // pred_check_branch
      %22 = sbr.rel (0) target = $region5
    $region4: #{tpu_custom_call.1} parent=1 // pred_region
      %s24 = ssub.s32 4096, 4096
      %25 = vsyncadd [#allocation4], %s24
      %s26 = sshll.u32 [#allocation3], 4
      %s27 = int_to_ptr.vmem [resolvable:$true] %s26
      %32 = dma.hbm_to_vmem [thread:$0]  %s0, 4096, %s27, [#allocation4], 256, 256, 16
    $region5: #{tpu_custom_call.1} parent=1 // pred_fallthru
      _
    // Predicated region
    $region6: #{tpu_custom_call.1} parent=1 // pred_check
      _
    $region7: #{tpu_custom_call.1} parent=1 // pred_check_branch
      %34 = sbr.rel (0) target = $region9
    $region8: #{tpu_custom_call.1} parent=1 // pred_region
      %s36 = ssub.s32 1024, 1024
      %37 = vsyncadd [#allocation7], %s36
      %s38 = sshll.u32 [#allocation6], 4
      %s39 = int_to_ptr.vmem [resolvable:$true] %s38
      %44 = dma.hbm_to_vmem [thread:$0]  %s1, 1024, %s39, [#allocation7], 128, 128, 8
    $region9: #{tpu_custom_call.1} parent=1 // pred_fallthru
      _
    // Predicated region
    $region10: #{tpu_custom_call.1} parent=1 // pred_check
      _
    $region11: #{tpu_custom_call.1} parent=1 // pred_check_branch
      %46 = sbr.rel (0) target = $region13
    $region12: #{tpu_custom_call.1} parent=1 // pred_region
      %s48 = ssub.s32 1024, 1024
      %49 = vsyncadd [#allocation7], %s48
      %s50 = sshll.u32 [#allocation8], 4
      %s51 = int_to_ptr.vmem [resolvable:$true] %s50
      %56 = dma.hbm_to_vmem [thread:$0]  %s2, 1024, %s51, [#allocation7], 128, 128, 8
    $region13: #{tpu_custom_call.1} parent=1 // pred_fallthru
      _
    // Predicated region
    $region14: #{tpu_custom_call.1} parent=1 // pred_check
      _
    $region15: #{tpu_custom_call.1} parent=1 // pred_check_branch
      %58 = sbr.rel (0) target = $region17
    $region16: #{tpu_custom_call.1} parent=1 // pred_region
      _
    $region17: #{tpu_custom_call.1} parent=1 // pred_fallthru
      _
    // Predicated region
    $region18: #{tpu_custom_call.1} parent=1 // pred_check
      _
    $region19: #{tpu_custom_call.1} parent=1 // pred_check_branch
      %60 = sbr.rel (0) target = $region21
    $region20: #{tpu_custom_call.1} parent=1 // pred_region
      %s62 = ssub.s32 24576, 24576
      %63 = vsyncadd [#allocation10], %s62
      %s64 = sshll.u32 [#allocation9], 4
      %s65 = int_to_ptr.vmem [resolvable:$true] %s64
      %70 = dma.hbm_to_vmem [thread:$0]  %s4, 24576, %s65, [#allocation10], 768, 768, 48
    $region21: #{tpu_custom_call.1} parent=1 // pred_fallthru
      _
    // Predicated region
    $region22: #{tpu_custom_call.1} parent=1 // pred_check
      _
    $region23: #{tpu_custom_call.1} parent=1 // pred_check_branch
      %72 = sbr.rel (0) target = $region25
    $region24: #{tpu_custom_call.1} parent=1 // pred_region
      _
    $region25: #{tpu_custom_call.1} parent=1 // pred_fallthru
      _
    // Predicated region
    $region26: #{tpu_custom_call.1} parent=1 // pred_check
      _
    $region27: #{tpu_custom_call.1} parent=1 // pred_check_branch
      %74 = sbr.rel (0) target = $region29
    $region28: #{tpu_custom_call.1} parent=1 // pred_region
      %s76 = ssub.s32 8192, 8192
      %77 = vsyncadd [#allocation10], %s76
      %s78 = sshll.u32 [#allocation11], 4
      %s79 = int_to_ptr.vmem [resolvable:$true] %s78
      %84 = dma.hbm_to_vmem [thread:$0]  %s6, 8192, %s79, [#allocation10], 256, 256, 16
    $region29: #{tpu_custom_call.1} parent=1 // pred_fallthru
      _
    // Predicated region
    $region30: #{tpu_custom_call.1} parent=1 // pred_check
      _
    $region31: #{tpu_custom_call.1} parent=1 // pred_check_branch
      %86 = sbr.rel (0) target = $region33
    $region32: #{tpu_custom_call.1} parent=1 // pred_region
      _
    $region33: #{tpu_custom_call.1} parent=1 // pred_fallthru
      _
    // Predicated region
    $region34: #{tpu_custom_call.1} parent=1 // pred_check
      _
    $region35: #{tpu_custom_call.1} parent=1 // pred_check_branch
      %88 = sbr.rel (0) target = $region37
    $region36: #{tpu_custom_call.1} parent=1 // pred_region
      _
    $region37: #{tpu_custom_call.1} parent=1 // pred_fallthru
      _
    // Predicated region
    $region38: #{tpu_custom_call.1} parent=1 // pred_check
      _
    $region39: #{tpu_custom_call.1} parent=1 // pred_check_branch
      %90 = sbr.rel (0) target = $region41
    $region40: #{tpu_custom_call.1} parent=1 // pred_region
      %s92 = ssub.s32 32768, 32768
      %93 = vsyncadd [#allocation13], %s92
      %s94 = sshll.u32 [#allocation12], 4
      %s95 = int_to_ptr.vmem [resolvable:$true] %s94
      %100 = dma.hbm_to_vmem [thread:$0]  %s9, 32768, %s95, [#allocation13], 1024, 1024, 64
    $region41: #{tpu_custom_call.1} parent=1 // pred_fallthru
      _
    // Predicated region
    $region42: #{tpu_custom_call.1} parent=1 // pred_check
      _
    $region43: #{tpu_custom_call.1} parent=1 // pred_check_branch
      %102 = sbr.rel (0) target = $region45
    $region44: #{tpu_custom_call.1} parent=1 // pred_region
      %s104 = ssub.s32 16384, 16384
      %105 = vsyncadd [#allocation13], %s104
      %s106 = sshll.u32 [#allocation14], 4
      %s107 = int_to_ptr.vmem [resolvable:$true] %s106
      %112 = dma.hbm_to_vmem [thread:$0]  %s10, 16384, %s107, [#allocation13], 256, 256, 16
    $region45: #{tpu_custom_call.1} parent=1 // pred_fallthru
      _
    // Predicated region
    $region46: #{tpu_custom_call.1} parent=1 // pred_check
      _
    $region47: #{tpu_custom_call.1} parent=1 // pred_check_branch
      %114 = sbr.rel (0) target = $region49
    $region48: #{tpu_custom_call.1} parent=1 // pred_region
      %115 = dma.done [#allocation4], 4096
    $region49: #{tpu_custom_call.1} parent=1 // pred_fallthru
      _
    // Predicated region
    $region50: #{tpu_custom_call.1} parent=1 // pred_check
      _
    $region51: #{tpu_custom_call.1} parent=1 // pred_check_branch
      %117 = sbr.rel (0) target = $region53
    $region52: #{tpu_custom_call.1} parent=1 // pred_region
      %118 = dma.done [#allocation7], 1024
    $region53: #{tpu_custom_call.1} parent=1 // pred_fallthru
      _
    // Predicated region
    $region54: #{tpu_custom_call.1} parent=1 // pred_check
      _
    $region55: #{tpu_custom_call.1} parent=1 // pred_check_branch
      %120 = sbr.rel (0) target = $region57
    $region56: #{tpu_custom_call.1} parent=1 // pred_region
      %121 = dma.done [#allocation7], 1024
    $region57: #{tpu_custom_call.1} parent=1 // pred_fallthru
      _
    // Predicated region
    $region58: #{tpu_custom_call.1} parent=1 // pred_check
      _
    $region59: #{tpu_custom_call.1} parent=1 // pred_check_branch
      %123 = sbr.rel (0) target = $region61
    $region60: #{tpu_custom_call.1} parent=1 // pred_region
      %124 = dma.done [#allocation10], 24576
    $region61: #{tpu_custom_call.1} parent=1 // pred_fallthru
      _
    // Predicated region
    $region62: #{tpu_custom_call.1} parent=1 // pred_check
      _
    $region63: #{tpu_custom_call.1} parent=1 // pred_check_branch
      %126 = sbr.rel (0) target = $region65
    $region64: #{tpu_custom_call.1} parent=1 // pred_region
      %127 = dma.done [#allocation10], 8192
    $region65: #{tpu_custom_call.1} parent=1 // pred_fallthru
      _
    // Predicated region
    $region66: #{tpu_custom_call.1} parent=1 // pred_check
      _
    $region67: #{tpu_custom_call.1} parent=1 // pred_check_branch
      %129 = sbr.rel (0) target = $region69
    $region68: #{tpu_custom_call.1} parent=1 // pred_region
      %130 = dma.done [#allocation13], 32768
    $region69: #{tpu_custom_call.1} parent=1 // pred_fallthru
      _
    // Predicated region
    $region70: #{tpu_custom_call.1} parent=1 // pred_check
      _
    $region71: #{tpu_custom_call.1} parent=1 // pred_check_branch
      %132 = sbr.rel (0) target = $region73
    $region72: #{tpu_custom_call.1} parent=1 // pred_region
      %133 = dma.done [#allocation13], 16384
    $region73: #{tpu_custom_call.1} parent=1 // pred_fallthru
      _
    %v134 = vld [vmem:[#allocation3] sm:$0xff]
    %v135 = vld [vmem:[#allocation3 + $0x8] sm:$0xff]
    %v136 = vld [vmem:[#allocation3 + $0x10] sm:$0xff]
    %v137 = vld [vmem:[#allocation3 + $0x18] sm:$0xff]
    %v138 = vld [vmem:[#allocation3 + $0x20] sm:$0xff]
    %v139 = vld [vmem:[#allocation3 + $0x28] sm:$0xff]
    %v140 = vld [vmem:[#allocation3 + $0x30] sm:$0xff]
    %v141 = vld [vmem:[#allocation3 + $0x38] sm:$0xff]
    %v142 = vld [vmem:[#allocation3 + $0x40] sm:$0xff]
    %v143 = vld [vmem:[#allocation3 + $0x48] sm:$0xff]
    %v144 = vld [vmem:[#allocation3 + $0x50] sm:$0xff]
    %v145 = vld [vmem:[#allocation3 + $0x58] sm:$0xff]
    %v146 = vld [vmem:[#allocation3 + $0x60] sm:$0xff]
    %v147 = vld [vmem:[#allocation3 + $0x68] sm:$0xff]
    %v148 = vld [vmem:[#allocation3 + $0x70] sm:$0xff]
    %v149 = vld [vmem:[#allocation3 + $0x78] sm:$0xff]
    %v150 = vld [vmem:[#allocation3 + $0x80] sm:$0xff]
    %v151 = vld [vmem:[#allocation3 + $0x88] sm:$0xff]
    %v152 = vld [vmem:[#allocation3 + $0x90] sm:$0xff]
    %v153 = vld [vmem:[#allocation3 + $0x98] sm:$0xff]
    %v154 = vld [vmem:[#allocation3 + $0xa0] sm:$0xff]
    %v155 = vld [vmem:[#allocation3 + $0xa8] sm:$0xff]
    %v156 = vld [vmem:[#allocation3 + $0xb0] sm:$0xff]
    %v157 = vld [vmem:[#allocation3 + $0xb8] sm:$0xff]
    %v158 = vld [vmem:[#allocation3 + $0xc0] sm:$0xff]
    %v159 = vld [vmem:[#allocation3 + $0xc8] sm:$0xff]
    %v160 = vld [vmem:[#allocation3 + $0xd0] sm:$0xff]
    %v161 = vld [vmem:[#allocation3 + $0xd8] sm:$0xff]
    %v162 = vld [vmem:[#allocation3 + $0xe0] sm:$0xff]
    %v163 = vld [vmem:[#allocation3 + $0xe8] sm:$0xff]
    %v164 = vld [vmem:[#allocation3 + $0xf0] sm:$0xff]
    %v165 = vld [vmem:[#allocation3 + $0xf8] sm:$0xff]
    %v166 = vmul.f32 %v134, %v134
    %v167 = vmul.f32 %v135, %v135
    %v168 = vmul.f32 %v136, %v136
    %v169 = vmul.f32 %v137, %v137
    %v170 = vmul.f32 %v138, %v138
    %v171 = vmul.f32 %v139, %v139
    %v172 = vmul.f32 %v140, %v140
    %v173 = vmul.f32 %v141, %v141
    %v174 = vmul.f32 %v142, %v142
    %v175 = vmul.f32 %v143, %v143
    %v176 = vmul.f32 %v144, %v144
    %v177 = vmul.f32 %v145, %v145
    %v178 = vmul.f32 %v146, %v146
    %v179 = vmul.f32 %v147, %v147
    %v180 = vmul.f32 %v148, %v148
    %v181 = vmul.f32 %v149, %v149
    %v182 = vmul.f32 %v150, %v150
    %v183 = vmul.f32 %v151, %v151
    %v184 = vmul.f32 %v152, %v152
    %v185 = vmul.f32 %v153, %v153
    %v186 = vmul.f32 %v154, %v154
    %v187 = vmul.f32 %v155, %v155
    %v188 = vmul.f32 %v156, %v156
    %v189 = vmul.f32 %v157, %v157
    %v190 = vmul.f32 %v158, %v158
    %v191 = vmul.f32 %v159, %v159
    %v192 = vmul.f32 %v160, %v160
    %v193 = vmul.f32 %v161, %v161
    %v194 = vmul.f32 %v162, %v162
    %v195 = vmul.f32 %v163, %v163
    %v196 = vmul.f32 %v164, %v164
    %v197 = vmul.f32 %v165, %v165
    %v198 = vadd.f32 %v166, %v167
    %199 = vadd.xlane.f32.xlu0 %v198
    %v200 = vpop.xlane.xlu0 %199
    %v201 = vadd.f32 %v168, %v169
    %202 = vadd.xlane.f32.xlu0 %v201
    %v203 = vpop.xlane.xlu0 %202
    %v204 = vadd.f32 %v170, %v171
    %205 = vadd.xlane.f32.xlu0 %v204
    %v206 = vpop.xlane.xlu0 %205
    %v207 = vadd.f32 %v172, %v173
    %208 = vadd.xlane.f32.xlu0 %v207
    %v209 = vpop.xlane.xlu0 %208
    %v210 = vadd.f32 %v174, %v175
    %211 = vadd.xlane.f32.xlu0 %v210
    %v212 = vpop.xlane.xlu0 %211
    %v213 = vadd.f32 %v176, %v177
    %214 = vadd.xlane.f32.xlu0 %v213
    %v215 = vpop.xlane.xlu0 %214
    %v216 = vadd.f32 %v178, %v179
    %217 = vadd.xlane.f32.xlu0 %v216
    %v218 = vpop.xlane.xlu0 %217
    %v219 = vadd.f32 %v180, %v181
    %220 = vadd.xlane.f32.xlu0 %v219
    %v221 = vpop.xlane.xlu0 %220
    %v222 = vadd.f32 %v182, %v183
    %223 = vadd.xlane.f32.xlu0 %v222
    %v224 = vpop.xlane.xlu0 %223
    %v225 = vadd.f32 %v184, %v185
    %226 = vadd.xlane.f32.xlu0 %v225
    %v227 = vpop.xlane.xlu0 %226
    %v228 = vadd.f32 %v186, %v187
    %229 = vadd.xlane.f32.xlu0 %v228
    %v230 = vpop.xlane.xlu0 %229
    %v231 = vadd.f32 %v188, %v189
    %232 = vadd.xlane.f32.xlu0 %v231
    %v233 = vpop.xlane.xlu0 %232
    %v234 = vadd.f32 %v190, %v191
    %235 = vadd.xlane.f32.xlu0 %v234
    %v236 = vpop.xlane.xlu0 %235
    %v237 = vadd.f32 %v192, %v193
    %238 = vadd.xlane.f32.xlu0 %v237
    %v239 = vpop.xlane.xlu0 %238
    %v240 = vadd.f32 %v194, %v195
    %241 = vadd.xlane.f32.xlu0 %v240
    %v242 = vpop.xlane.xlu0 %241
    %v243 = vadd.f32 %v196, %v197
    %244 = vadd.xlane.f32.xlu0 %v243
    %v245 = vpop.xlane.xlu0 %244
    %v246 = vrcp.pop 256.0
    %v247 = vmul.f32 %v200, %v246
    %v248 = vmul.f32 %v203, %v246
    %v249 = vmul.f32 %v206, %v246
    %v250 = vmul.f32 %v209, %v246
    %v251 = vmul.f32 %v212, %v246
    %v252 = vmul.f32 %v215, %v246
    %v253 = vmul.f32 %v218, %v246
    %v254 = vmul.f32 %v221, %v246
    %v255 = vmul.f32 %v224, %v246
    %v256 = vmul.f32 %v227, %v246
    %v257 = vmul.f32 %v230, %v246
    %v258 = vmul.f32 %v233, %v246
    %v259 = vmul.f32 %v236, %v246
    %v260 = vmul.f32 %v239, %v246
    %v261 = vmul.f32 %v242, %v246
    %v262 = vmul.f32 %v245, %v246
    %v263 = vadd.f32 %v247, 1e-05
    %v264 = vadd.f32 %v248, 1e-05
    %v265 = vadd.f32 %v249, 1e-05
    %v266 = vadd.f32 %v250, 1e-05
    %v267 = vadd.f32 %v251, 1e-05
    %v268 = vadd.f32 %v252, 1e-05
    %v269 = vadd.f32 %v253, 1e-05
    %v270 = vadd.f32 %v254, 1e-05
    %v271 = vadd.f32 %v255, 1e-05
    %v272 = vadd.f32 %v256, 1e-05
    %v273 = vadd.f32 %v257, 1e-05
    %v274 = vadd.f32 %v258, 1e-05
    %v275 = vadd.f32 %v259, 1e-05
    %v276 = vadd.f32 %v260, 1e-05
    %v277 = vadd.f32 %v261, 1e-05
    %v278 = vadd.f32 %v262, 1e-05
    %v279 = vrsqrt.pop %v263
    %v280 = vrsqrt.pop %v264
    %v281 = vrsqrt.pop %v265
    %v282 = vrsqrt.pop %v266
    %v283 = vrsqrt.pop %v267
    %v284 = vrsqrt.pop %v268
    %v285 = vrsqrt.pop %v269
    %v286 = vrsqrt.pop %v270
    %v287 = vrsqrt.pop %v271
    %v288 = vrsqrt.pop %v272
    %v289 = vrsqrt.pop %v273
    %v290 = vrsqrt.pop %v274
    %v291 = vrsqrt.pop %v275
    %v292 = vrsqrt.pop %v276
    %v293 = vrsqrt.pop %v277
    %v294 = vrsqrt.pop %v278
    %v295 = vmul.f32 %v134, %v279
    %v296 = vmul.f32 %v135, %v279
    %v297 = vmul.f32 %v136, %v280
    %v298 = vmul.f32 %v137, %v280
    %v299 = vmul.f32 %v138, %v281
    %v300 = vmul.f32 %v139, %v281
    %v301 = vmul.f32 %v140, %v282
    %v302 = vmul.f32 %v141, %v282
    %v303 = vmul.f32 %v142, %v283
    %v304 = vmul.f32 %v143, %v283
    %v305 = vmul.f32 %v144, %v284
    %v306 = vmul.f32 %v145, %v284
    %v307 = vmul.f32 %v146, %v285
    %v308 = vmul.f32 %v147, %v285
    %v309 = vmul.f32 %v148, %v286
    %v310 = vmul.f32 %v149, %v286
    %v311 = vmul.f32 %v150, %v287
    %v312 = vmul.f32 %v151, %v287
    %v313 = vmul.f32 %v152, %v288
    %v314 = vmul.f32 %v153, %v288
    %v315 = vmul.f32 %v154, %v289
    %v316 = vmul.f32 %v155, %v289
    %v317 = vmul.f32 %v156, %v290
    %v318 = vmul.f32 %v157, %v290
    %v319 = vmul.f32 %v158, %v291
    %v320 = vmul.f32 %v159, %v291
    %v321 = vmul.f32 %v160, %v292
    %v322 = vmul.f32 %v161, %v292
    %v323 = vmul.f32 %v162, %v293
    %v324 = vmul.f32 %v163, %v293
    %v325 = vmul.f32 %v164, %v294
    %v326 = vmul.f32 %v165, %v294
    %v327 = vld [vmem:[%s3] sm:$0x3]
    %v329 = vlaneseq
    %v330 = vshrl.u32 %v329, 7
    %v331 = vsub.s32 0, %v330
    %v332 = vrot.slane %v327, %v331
    %v333 = vlaneseq
    %v334 = vshrl.u32 %v333, 7
    %v335 = vsub.s32 1, %v334
    %v336 = vrot.slane %v327, %v335
    %v339 = vmul.f32 %v295, %v332
    %v340 = vmul.f32 %v296, %v336
    %v341 = vmul.f32 %v297, %v332
    %v342 = vmul.f32 %v298, %v336
    %v343 = vmul.f32 %v299, %v332
    %v344 = vmul.f32 %v300, %v336
    %v345 = vmul.f32 %v301, %v332
    %v346 = vmul.f32 %v302, %v336
    %v347 = vmul.f32 %v303, %v332
    %v348 = vmul.f32 %v304, %v336
    %v349 = vmul.f32 %v305, %v332
    %v350 = vmul.f32 %v306, %v336
    %v351 = vmul.f32 %v307, %v332
    %v352 = vmul.f32 %v308, %v336
    %v353 = vmul.f32 %v309, %v332
    %v354 = vmul.f32 %v310, %v336
    %v355 = vmul.f32 %v311, %v332
    %v356 = vmul.f32 %v312, %v336
    %v357 = vmul.f32 %v313, %v332
    %v358 = vmul.f32 %v314, %v336
    %v359 = vmul.f32 %v315, %v332
    %v360 = vmul.f32 %v316, %v336
    %v361 = vmul.f32 %v317, %v332
    %v362 = vmul.f32 %v318, %v336
    %v363 = vmul.f32 %v319, %v332
    %v364 = vmul.f32 %v320, %v336
    %v365 = vmul.f32 %v321, %v332
    %v366 = vmul.f32 %v322, %v336
    %v367 = vmul.f32 %v323, %v332
    %v368 = vmul.f32 %v324, %v336
    %v369 = vmul.f32 %v325, %v332
    %v370 = vmul.f32 %v326, %v336
    %v371 = vld [vmem:[#allocation9] sm:$0xff]
    %v372 = vld [vmem:[#allocation9 + $0x8] sm:$0xff]
    %v373 = vld [vmem:[#allocation9 + $0x10] sm:$0xff]
    %v374 = vld [vmem:[#allocation9 + $0x18] sm:$0xff]
    %v375 = vld [vmem:[#allocation9 + $0x20] sm:$0xff]
    %v376 = vld [vmem:[#allocation9 + $0x28] sm:$0xff]
    %v377 = vld [vmem:[#allocation9 + $0x30] sm:$0xff]
    %v378 = vld [vmem:[#allocation9 + $0x38] sm:$0xff]
    %v379 = vld [vmem:[#allocation9 + $0x40] sm:$0xff]
    %v380 = vld [vmem:[#allocation9 + $0x48] sm:$0xff]
    %v381 = vld [vmem:[#allocation9 + $0x50] sm:$0xff]
    %v382 = vld [vmem:[#allocation9 + $0x58] sm:$0xff]
    %v383 = vld [vmem:[#allocation9 + $0x60] sm:$0xff]
    %v384 = vld [vmem:[#allocation9 + $0x68] sm:$0xff]
    %v385 = vld [vmem:[#allocation9 + $0x70] sm:$0xff]
    %v386 = vld [vmem:[#allocation9 + $0x78] sm:$0xff]
    %v387 = vld [vmem:[#allocation9 + $0x80] sm:$0xff]
    %v388 = vld [vmem:[#allocation9 + $0x88] sm:$0xff]
    %v389 = vld [vmem:[#allocation9 + $0x90] sm:$0xff]
    %v390 = vld [vmem:[#allocation9 + $0x98] sm:$0xff]
    %v391 = vld [vmem:[#allocation9 + $0xa0] sm:$0xff]
    %v392 = vld [vmem:[#allocation9 + $0xa8] sm:$0xff]
    %v393 = vld [vmem:[#allocation9 + $0xb0] sm:$0xff]
    %v394 = vld [vmem:[#allocation9 + $0xb8] sm:$0xff]
    %v395 = vld [vmem:[#allocation9 + $0xc0] sm:$0xff]
    %v396 = vld [vmem:[#allocation9 + $0xc8] sm:$0xff]
    %v397 = vld [vmem:[#allocation9 + $0xd0] sm:$0xff]
    %v398 = vld [vmem:[#allocation9 + $0xd8] sm:$0xff]
    %v399 = vld [vmem:[#allocation9 + $0xe0] sm:$0xff]
    %v400 = vld [vmem:[#allocation9 + $0xe8] sm:$0xff]
    %v401 = vld [vmem:[#allocation9 + $0xf0] sm:$0xff]
    %v402 = vld [vmem:[#allocation9 + $0xf8] sm:$0xff]
    %v403 = vld [vmem:[#allocation9 + $0x100] sm:$0xff]
    %v404 = vld [vmem:[#allocation9 + $0x108] sm:$0xff]
    %v405 = vld [vmem:[#allocation9 + $0x110] sm:$0xff]
    %v406 = vld [vmem:[#allocation9 + $0x118] sm:$0xff]
    %v407 = vld [vmem:[#allocation9 + $0x120] sm:$0xff]
    %v408 = vld [vmem:[#allocation9 + $0x128] sm:$0xff]
    %v409 = vld [vmem:[#allocation9 + $0x130] sm:$0xff]
    %v410 = vld [vmem:[#allocation9 + $0x138] sm:$0xff]
    %v411 = vld [vmem:[#allocation9 + $0x140] sm:$0xff]
    %v412 = vld [vmem:[#allocation9 + $0x148] sm:$0xff]
    %v413 = vld [vmem:[#allocation9 + $0x150] sm:$0xff]
    %v414 = vld [vmem:[#allocation9 + $0x158] sm:$0xff]
    %v415 = vld [vmem:[#allocation9 + $0x160] sm:$0xff]
    %v416 = vld [vmem:[#allocation9 + $0x168] sm:$0xff]
    %v417 = vld [vmem:[#allocation9 + $0x170] sm:$0xff]
    %v418 = vld [vmem:[#allocation9 + $0x178] sm:$0xff]
    %v419 = vld [vmem:[#allocation9 + $0x180] sm:$0xff]
    %v420 = vld [vmem:[#allocation9 + $0x188] sm:$0xff]
    %v421 = vld [vmem:[#allocation9 + $0x190] sm:$0xff]
    %v422 = vld [vmem:[#allocation9 + $0x198] sm:$0xff]
    %v423 = vld [vmem:[#allocation9 + $0x1a0] sm:$0xff]
    %v424 = vld [vmem:[#allocation9 + $0x1a8] sm:$0xff]
    %v425 = vld [vmem:[#allocation9 + $0x1b0] sm:$0xff]
    %v426 = vld [vmem:[#allocation9 + $0x1b8] sm:$0xff]
    %v427 = vld [vmem:[#allocation9 + $0x1c0] sm:$0xff]
    %v428 = vld [vmem:[#allocation9 + $0x1c8] sm:$0xff]
    %v429 = vld [vmem:[#allocation9 + $0x1d0] sm:$0xff]
    %v430 = vld [vmem:[#allocation9 + $0x1d8] sm:$0xff]
    %v431 = vld [vmem:[#allocation9 + $0x1e0] sm:$0xff]
    %v432 = vld [vmem:[#allocation9 + $0x1e8] sm:$0xff]
    %v433 = vld [vmem:[#allocation9 + $0x1f0] sm:$0xff]
    %v434 = vld [vmem:[#allocation9 + $0x1f8] sm:$0xff]
    %v435 = vld [vmem:[#allocation9 + $0x200] sm:$0xff]
    %v436 = vld [vmem:[#allocation9 + $0x208] sm:$0xff]
    %v437 = vld [vmem:[#allocation9 + $0x210] sm:$0xff]
    %v438 = vld [vmem:[#allocation9 + $0x218] sm:$0xff]
    %v439 = vld [vmem:[#allocation9 + $0x220] sm:$0xff]
    %v440 = vld [vmem:[#allocation9 + $0x228] sm:$0xff]
    %v441 = vld [vmem:[#allocation9 + $0x230] sm:$0xff]
    %v442 = vld [vmem:[#allocation9 + $0x238] sm:$0xff]
    %v443 = vld [vmem:[#allocation9 + $0x240] sm:$0xff]
    %v444 = vld [vmem:[#allocation9 + $0x248] sm:$0xff]
    %v445 = vld [vmem:[#allocation9 + $0x250] sm:$0xff]
    %v446 = vld [vmem:[#allocation9 + $0x258] sm:$0xff]
    %v447 = vld [vmem:[#allocation9 + $0x260] sm:$0xff]
    %v448 = vld [vmem:[#allocation9 + $0x268] sm:$0xff]
    %v449 = vld [vmem:[#allocation9 + $0x270] sm:$0xff]
    %v450 = vld [vmem:[#allocation9 + $0x278] sm:$0xff]
    %v451 = vld [vmem:[#allocation9 + $0x280] sm:$0xff]
    %v452 = vld [vmem:[#allocation9 + $0x288] sm:$0xff]
    %v453 = vld [vmem:[#allocation9 + $0x290] sm:$0xff]
    %v454 = vld [vmem:[#allocation9 + $0x298] sm:$0xff]
    %v455 = vld [vmem:[#allocation9 + $0x2a0] sm:$0xff]
    %v456 = vld [vmem:[#allocation9 + $0x2a8] sm:$0xff]
    %v457 = vld [vmem:[#allocation9 + $0x2b0] sm:$0xff]
    %v458 = vld [vmem:[#allocation9 + $0x2b8] sm:$0xff]
    %v459 = vld [vmem:[#allocation9 + $0x2c0] sm:$0xff]
    %v460 = vld [vmem:[#allocation9 + $0x2c8] sm:$0xff]
    %v461 = vld [vmem:[#allocation9 + $0x2d0] sm:$0xff]
    %v462 = vld [vmem:[#allocation9 + $0x2d8] sm:$0xff]
    %v463 = vld [vmem:[#allocation9 + $0x2e0] sm:$0xff]
    %v464 = vld [vmem:[#allocation9 + $0x2e8] sm:$0xff]
    %v465 = vld [vmem:[#allocation9 + $0x2f0] sm:$0xff]
    %v466 = vld [vmem:[#allocation9 + $0x2f8] sm:$0xff]
    %v467 = vld [vmem:[#allocation9 + $0x300] sm:$0xff]
    %v468 = vld [vmem:[#allocation9 + $0x308] sm:$0xff]
    %v469 = vld [vmem:[#allocation9 + $0x310] sm:$0xff]
    %v470 = vld [vmem:[#allocation9 + $0x318] sm:$0xff]
    %v471 = vld [vmem:[#allocation9 + $0x320] sm:$0xff]
    %v472 = vld [vmem:[#allocation9 + $0x328] sm:$0xff]
    %v473 = vld [vmem:[#allocation9 + $0x330] sm:$0xff]
    %v474 = vld [vmem:[#allocation9 + $0x338] sm:$0xff]
    %v475 = vld [vmem:[#allocation9 + $0x340] sm:$0xff]
    %v476 = vld [vmem:[#allocation9 + $0x348] sm:$0xff]
    %v477 = vld [vmem:[#allocation9 + $0x350] sm:$0xff]
    %v478 = vld [vmem:[#allocation9 + $0x358] sm:$0xff]
    %v479 = vld [vmem:[#allocation9 + $0x360] sm:$0xff]
    %v480 = vld [vmem:[#allocation9 + $0x368] sm:$0xff]
    %v481 = vld [vmem:[#allocation9 + $0x370] sm:$0xff]
    %v482 = vld [vmem:[#allocation9 + $0x378] sm:$0xff]
    %v483 = vld [vmem:[#allocation9 + $0x380] sm:$0xff]
    %v484 = vld [vmem:[#allocation9 + $0x388] sm:$0xff]
    %v485 = vld [vmem:[#allocation9 + $0x390] sm:$0xff]
    %v486 = vld [vmem:[#allocation9 + $0x398] sm:$0xff]
    %v487 = vld [vmem:[#allocation9 + $0x3a0] sm:$0xff]
    %v488 = vld [vmem:[#allocation9 + $0x3a8] sm:$0xff]
    %v489 = vld [vmem:[#allocation9 + $0x3b0] sm:$0xff]
    %v490 = vld [vmem:[#allocation9 + $0x3b8] sm:$0xff]
    %v491 = vld [vmem:[#allocation9 + $0x3c0] sm:$0xff]
    %v492 = vld [vmem:[#allocation9 + $0x3c8] sm:$0xff]
    %v493 = vld [vmem:[#allocation9 + $0x3d0] sm:$0xff]
    %v494 = vld [vmem:[#allocation9 + $0x3d8] sm:$0xff]
    %v495 = vld [vmem:[#allocation9 + $0x3e0] sm:$0xff]
    %v496 = vld [vmem:[#allocation9 + $0x3e8] sm:$0xff]
    %v497 = vld [vmem:[#allocation9 + $0x3f0] sm:$0xff]
    %v498 = vld [vmem:[#allocation9 + $0x3f8] sm:$0xff]
    %v499 = vld [vmem:[#allocation9 + $0x400] sm:$0xff]
    %v500 = vld [vmem:[#allocation9 + $0x408] sm:$0xff]
    %v501 = vld [vmem:[#allocation9 + $0x410] sm:$0xff]
    %v502 = vld [vmem:[#allocation9 + $0x418] sm:$0xff]
    %v503 = vld [vmem:[#allocation9 + $0x420] sm:$0xff]
    %v504 = vld [vmem:[#allocation9 + $0x428] sm:$0xff]
    %v505 = vld [vmem:[#allocation9 + $0x430] sm:$0xff]
    %v506 = vld [vmem:[#allocation9 + $0x438] sm:$0xff]
    %v507 = vld [vmem:[#allocation9 + $0x440] sm:$0xff]
    %v508 = vld [vmem:[#allocation9 + $0x448] sm:$0xff]
    %v509 = vld [vmem:[#allocation9 + $0x450] sm:$0xff]
    %v510 = vld [vmem:[#allocation9 + $0x458] sm:$0xff]
    %v511 = vld [vmem:[#allocation9 + $0x460] sm:$0xff]
    %v512 = vld [vmem:[#allocation9 + $0x468] sm:$0xff]
    %v513 = vld [vmem:[#allocation9 + $0x470] sm:$0xff]
    %v514 = vld [vmem:[#allocation9 + $0x478] sm:$0xff]
    %v515 = vld [vmem:[#allocation9 + $0x480] sm:$0xff]
    %v516 = vld [vmem:[#allocation9 + $0x488] sm:$0xff]
    %v517 = vld [vmem:[#allocation9 + $0x490] sm:$0xff]
    %v518 = vld [vmem:[#allocation9 + $0x498] sm:$0xff]
    %v519 = vld [vmem:[#allocation9 + $0x4a0] sm:$0xff]
    %v520 = vld [vmem:[#allocation9 + $0x4a8] sm:$0xff]
    %v521 = vld [vmem:[#allocation9 + $0x4b0] sm:$0xff]
    %v522 = vld [vmem:[#allocation9 + $0x4b8] sm:$0xff]
    %v523 = vld [vmem:[#allocation9 + $0x4c0] sm:$0xff]
    %v524 = vld [vmem:[#allocation9 + $0x4c8] sm:$0xff]
    %v525 = vld [vmem:[#allocation9 + $0x4d0] sm:$0xff]
    %v526 = vld [vmem:[#allocation9 + $0x4d8] sm:$0xff]
    %v527 = vld [vmem:[#allocation9 + $0x4e0] sm:$0xff]
    %v528 = vld [vmem:[#allocation9 + $0x4e8] sm:$0xff]
    %v529 = vld [vmem:[#allocation9 + $0x4f0] sm:$0xff]
    %v530 = vld [vmem:[#allocation9 + $0x4f8] sm:$0xff]
    %v531 = vld [vmem:[#allocation9 + $0x500] sm:$0xff]
    %v532 = vld [vmem:[#allocation9 + $0x508] sm:$0xff]
    %v533 = vld [vmem:[#allocation9 + $0x510] sm:$0xff]
    %v534 = vld [vmem:[#allocation9 + $0x518] sm:$0xff]
    %v535 = vld [vmem:[#allocation9 + $0x520] sm:$0xff]
    %v536 = vld [vmem:[#allocation9 + $0x528] sm:$0xff]
    %v537 = vld [vmem:[#allocation9 + $0x530] sm:$0xff]
    %v538 = vld [vmem:[#allocation9 + $0x538] sm:$0xff]
    %v539 = vld [vmem:[#allocation9 + $0x540] sm:$0xff]
    %v540 = vld [vmem:[#allocation9 + $0x548] sm:$0xff]
    %v541 = vld [vmem:[#allocation9 + $0x550] sm:$0xff]
    %v542 = vld [vmem:[#allocation9 + $0x558] sm:$0xff]
    %v543 = vld [vmem:[#allocation9 + $0x560] sm:$0xff]
    %v544 = vld [vmem:[#allocation9 + $0x568] sm:$0xff]
    %v545 = vld [vmem:[#allocation9 + $0x570] sm:$0xff]
    %v546 = vld [vmem:[#allocation9 + $0x578] sm:$0xff]
    %v547 = vld [vmem:[#allocation9 + $0x580] sm:$0xff]
    %v548 = vld [vmem:[#allocation9 + $0x588] sm:$0xff]
    %v549 = vld [vmem:[#allocation9 + $0x590] sm:$0xff]
    %v550 = vld [vmem:[#allocation9 + $0x598] sm:$0xff]
    %v551 = vld [vmem:[#allocation9 + $0x5a0] sm:$0xff]
    %v552 = vld [vmem:[#allocation9 + $0x5a8] sm:$0xff]
    %v553 = vld [vmem:[#allocation9 + $0x5b0] sm:$0xff]
    %v554 = vld [vmem:[#allocation9 + $0x5b8] sm:$0xff]
    %v555 = vld [vmem:[#allocation9 + $0x5c0] sm:$0xff]
    %v556 = vld [vmem:[#allocation9 + $0x5c8] sm:$0xff]
    %v557 = vld [vmem:[#allocation9 + $0x5d0] sm:$0xff]
    %v558 = vld [vmem:[#allocation9 + $0x5d8] sm:$0xff]
    %v559 = vld [vmem:[#allocation9 + $0x5e0] sm:$0xff]
    %v560 = vld [vmem:[#allocation9 + $0x5e8] sm:$0xff]
    %v561 = vld [vmem:[#allocation9 + $0x5f0] sm:$0xff]
    %v562 = vld [vmem:[#allocation9 + $0x5f8] sm:$0xff]
    %v563 = vld [vmem:[%s5] sm:$0x3f]
    %v565 = vlaneseq
    %v566 = vshrl.u32 %v565, 7
    %v567 = vsub.s32 0, %v566
    %v568 = vrot.slane %v563, %v567
    %v569 = vlaneseq
    %v570 = vshrl.u32 %v569, 7
    %v571 = vsub.s32 1, %v570
    %v572 = vrot.slane %v563, %v571
    %v573 = vlaneseq
    %v574 = vshrl.u32 %v573, 7
    %v575 = vsub.s32 2, %v574
    %v576 = vrot.slane %v563, %v575
    %v577 = vlaneseq
    %v578 = vshrl.u32 %v577, 7
    %v579 = vsub.s32 3, %v578
    %v580 = vrot.slane %v563, %v579
    %v581 = vlaneseq
    %v582 = vshrl.u32 %v581, 7
    %v583 = vsub.s32 4, %v582
    %v584 = vrot.slane %v563, %v583
    %v585 = vlaneseq
    %v586 = vshrl.u32 %v585, 7
    %v587 = vsub.s32 5, %v586
    %v588 = vrot.slane %v563, %v587
    %595 = vmatprep.subr.mxu0 %v462
    %596 = vmatpush1.msra.mxu0 %v461
    %597 = vmatprep.subr.mxu0 %v456
    %598 = vmatpush1.msra.mxu0 %v455
    %599 = vmatprep.subr.mxu0 %v450
    %600 = vmatpush1.msra.mxu0 %v449
    %601 = vmatprep.subr.mxu0 %v444
    %602 = vmatpush1.msra.mxu0 %v443
    %603 = vmatprep.subr.mxu0 %v438
    %604 = vmatpush1.msra.mxu0 %v437
    %605 = vmatprep.subr.mxu0 %v432
    %606 = vmatpush1.msra.mxu0 %v431
    %607 = vmatprep.subr.mxu0 %v426
    %608 = vmatpush1.msra.mxu0 %v425
    %609 = vmatprep.subr.mxu0 %v420
    %610 = vmatpush1.msra.mxu0 %v419
    %611 = vmatprep.subr.mxu0 %v414
    %612 = vmatpush1.msra.mxu0 %v413
    %613 = vmatprep.subr.mxu0 %v408
    %614 = vmatpush1.msra.mxu0 %v407
    %615 = vmatprep.subr.mxu0 %v402
    %616 = vmatpush1.msra.mxu0 %v401
    %617 = vmatprep.subr.mxu0 %v396
    %618 = vmatpush1.msra.mxu0 %v395
    %619 = vmatprep.subr.mxu0 %v390
    %620 = vmatpush1.msra.mxu0 %v389
    %621 = vmatprep.subr.mxu0 %v384
    %622 = vmatpush1.msra.mxu0 %v383
    %623 = vmatprep.subr.mxu0 %v378
    %624 = vmatpush1.msra.mxu0 %v377
    %625 = vmatprep.subr.mxu0 %v372
    %626 = vmatpush1.msra.mxu0 %v371
    %627 = vmatprep.subr.mxu0 %v558
    %628 = vmatpush2.msra.mxu0 %v557
    %629 = vmatprep.subr.mxu0 %v552
    %630 = vmatpush2.msra.mxu0 %v551
    %631 = vmatprep.subr.mxu0 %v546
    %632 = vmatpush2.msra.mxu0 %v545
    %633 = vmatprep.subr.mxu0 %v540
    %634 = vmatpush2.msra.mxu0 %v539
    %635 = vmatprep.subr.mxu0 %v534
    %636 = vmatpush2.msra.mxu0 %v533
    %637 = vmatprep.subr.mxu0 %v528
    %638 = vmatpush2.msra.mxu0 %v527
    %639 = vmatprep.subr.mxu0 %v522
    %640 = vmatpush2.msra.mxu0 %v521
    %641 = vmatprep.subr.mxu0 %v516
    %642 = vmatpush2.msra.mxu0 %v515
    %643 = vmatprep.subr.mxu0 %v510
    %644 = vmatpush2.msra.mxu0 %v509
    %645 = vmatprep.subr.mxu0 %v504
    %646 = vmatpush2.msra.mxu0 %v503
    %647 = vmatprep.subr.mxu0 %v498
    %648 = vmatpush2.msra.mxu0 %v497
    %649 = vmatprep.subr.mxu0 %v492
    %650 = vmatpush2.msra.mxu0 %v491
    %651 = vmatprep.subr.mxu0 %v486
    %652 = vmatpush2.msra.mxu0 %v485
    %653 = vmatprep.subr.mxu0 %v480
    %654 = vmatpush2.msra.mxu0 %v479
    %655 = vmatprep.subr.mxu0 %v474
    %656 = vmatpush2.msra.mxu0 %v473
    %657 = vmatprep.subr.mxu0 %v468
    %658 = vmatpush2.msra.mxu0 %v467
    %659 = vmatprep.mubr.f32.mxu0 %v340
    %660 = vmatmul.mubr.f32.gmra.mxu0 %v339
    %v661 = vpop.f32.mrf.mxu0
    %v662 = vadd.f32 %v568, %v661
    %v663 = vpop.f32.mrf.mxu0
    %v664 = vadd.f32 %v572, %v663
    %665 = vmatprep.mubr.f32.mxu0 %v342
    %666 = vmatmul.mubr.f32.gmra.mxu0 %v341
    %v667 = vpop.f32.mrf.mxu0
    %v668 = vadd.f32 %v568, %v667
    %v669 = vpop.f32.mrf.mxu0
    %v670 = vadd.f32 %v572, %v669
    %671 = vmatprep.mubr.f32.mxu0 %v344
    %672 = vmatmul.mubr.f32.gmra.mxu0 %v343
    %v673 = vpop.f32.mrf.mxu0
    %v674 = vadd.f32 %v568, %v673
    %v675 = vpop.f32.mrf.mxu0
    %v676 = vadd.f32 %v572, %v675
    %677 = vmatprep.mubr.f32.mxu0 %v346
    %678 = vmatmul.mubr.f32.gmra.mxu0 %v345
    %v679 = vpop.f32.mrf.mxu0
    %v680 = vadd.f32 %v568, %v679
    %v681 = vpop.f32.mrf.mxu0
    %v682 = vadd.f32 %v572, %v681
    %683 = vmatprep.mubr.f32.mxu0 %v348
    %684 = vmatmul.mubr.f32.gmra.mxu0 %v347
    %v685 = vpop.f32.mrf.mxu0
    %v686 = vadd.f32 %v568, %v685
    %v687 = vpop.f32.mrf.mxu0
    %v688 = vadd.f32 %v572, %v687
    %689 = vmatprep.mubr.f32.mxu0 %v350
    %690 = vmatmul.mubr.f32.gmra.mxu0 %v349
    %v691 = vpop.f32.mrf.mxu0
    %v692 = vadd.f32 %v568, %v691
    %v693 = vpop.f32.mrf.mxu0
    %v694 = vadd.f32 %v572, %v693
    %695 = vmatprep.mubr.f32.mxu0 %v352
    %696 = vmatmul.mubr.f32.gmra.mxu0 %v351
    %v697 = vpop.f32.mrf.mxu0
    %v698 = vadd.f32 %v568, %v697
    %v699 = vpop.f32.mrf.mxu0
    %v700 = vadd.f32 %v572, %v699
    %701 = vmatprep.mubr.f32.mxu0 %v354
    %702 = vmatmul.mubr.f32.gmra.mxu0 %v353
    %v703 = vpop.f32.mrf.mxu0
    %v704 = vadd.f32 %v568, %v703
    %v705 = vpop.f32.mrf.mxu0
    %v706 = vadd.f32 %v572, %v705
    %707 = vmatprep.mubr.f32.mxu0 %v356
    %708 = vmatmul.mubr.f32.gmra.mxu0 %v355
    %v709 = vpop.f32.mrf.mxu0
    %v710 = vadd.f32 %v568, %v709
    %v711 = vpop.f32.mrf.mxu0
    %v712 = vadd.f32 %v572, %v711
    %713 = vmatprep.mubr.f32.mxu0 %v358
    %714 = vmatmul.mubr.f32.gmra.mxu0 %v357
    %v715 = vpop.f32.mrf.mxu0
    %v716 = vadd.f32 %v568, %v715
    %v717 = vpop.f32.mrf.mxu0
    %v718 = vadd.f32 %v572, %v717
    %719 = vmatprep.mubr.f32.mxu0 %v360
    %720 = vmatmul.mubr.f32.gmra.mxu0 %v359
    %v721 = vpop.f32.mrf.mxu0
    %v722 = vadd.f32 %v568, %v721
    %v723 = vpop.f32.mrf.mxu0
    %v724 = vadd.f32 %v572, %v723
    %725 = vmatprep.mubr.f32.mxu0 %v362
    %726 = vmatmul.mubr.f32.gmra.mxu0 %v361
    %v727 = vpop.f32.mrf.mxu0
    %v728 = vadd.f32 %v568, %v727
    %v729 = vpop.f32.mrf.mxu0
    %v730 = vadd.f32 %v572, %v729
    %731 = vmatprep.mubr.f32.mxu0 %v364
    %732 = vmatmul.mubr.f32.gmra.mxu0 %v363
    %v733 = vpop.f32.mrf.mxu0
    %v734 = vadd.f32 %v568, %v733
    %v735 = vpop.f32.mrf.mxu0
    %v736 = vadd.f32 %v572, %v735
    %737 = vmatprep.mubr.f32.mxu0 %v366
    %738 = vmatmul.mubr.f32.gmra.mxu0 %v365
    %v739 = vpop.f32.mrf.mxu0
    %v740 = vadd.f32 %v568, %v739
    %v741 = vpop.f32.mrf.mxu0
    %v742 = vadd.f32 %v572, %v741
    %743 = vmatprep.mubr.f32.mxu0 %v368
    %744 = vmatmul.mubr.f32.gmra.mxu0 %v367
    %v745 = vpop.f32.mrf.mxu0
    %v746 = vadd.f32 %v568, %v745
    %v747 = vpop.f32.mrf.mxu0
    %v748 = vadd.f32 %v572, %v747
    %749 = vmatprep.mubr.f32.mxu0 %v370
    %750 = vmatmul.mubr.f32.gmra.mxu0 %v369
    %v751 = vpop.f32.mrf.mxu0
    %v752 = vadd.f32 %v568, %v751
    %v753 = vpop.f32.mrf.mxu0
    %v754 = vadd.f32 %v572, %v753
    %755 = vdwg.mxu0
    %756 = vmatprep.subr.mxu0 %v464
    %757 = vmatpush1.msra.mxu0 %v463
    %758 = vmatprep.subr.mxu0 %v458
    %759 = vmatpush1.msra.mxu0 %v457
    %760 = vmatprep.subr.mxu0 %v452
    %761 = vmatpush1.msra.mxu0 %v451
    %762 = vmatprep.subr.mxu0 %v446
    %763 = vmatpush1.msra.mxu0 %v445
    %764 = vmatprep.subr.mxu0 %v440
    %765 = vmatpush1.msra.mxu0 %v439
    %766 = vmatprep.subr.mxu0 %v434
    %767 = vmatpush1.msra.mxu0 %v433
    %768 = vmatprep.subr.mxu0 %v428
    %769 = vmatpush1.msra.mxu0 %v427
    %770 = vmatprep.subr.mxu0 %v422
    %771 = vmatpush1.msra.mxu0 %v421
    %772 = vmatprep.subr.mxu0 %v416
    %773 = vmatpush1.msra.mxu0 %v415
    %774 = vmatprep.subr.mxu0 %v410
    %775 = vmatpush1.msra.mxu0 %v409
    %776 = vmatprep.subr.mxu0 %v404
    %777 = vmatpush1.msra.mxu0 %v403
    %778 = vmatprep.subr.mxu0 %v398
    %779 = vmatpush1.msra.mxu0 %v397
    %780 = vmatprep.subr.mxu0 %v392
    %781 = vmatpush1.msra.mxu0 %v391
    %782 = vmatprep.subr.mxu0 %v386
    %783 = vmatpush1.msra.mxu0 %v385
    %784 = vmatprep.subr.mxu0 %v380
    %785 = vmatpush1.msra.mxu0 %v379
    %786 = vmatprep.subr.mxu0 %v374
    %787 = vmatpush1.msra.mxu0 %v373
    %788 = vmatprep.subr.mxu0 %v560
    %789 = vmatpush2.msra.mxu0 %v559
    %790 = vmatprep.subr.mxu0 %v554
    %791 = vmatpush2.msra.mxu0 %v553
    %792 = vmatprep.subr.mxu0 %v548
    %793 = vmatpush2.msra.mxu0 %v547
    %794 = vmatprep.subr.mxu0 %v542
    %795 = vmatpush2.msra.mxu0 %v541
    %796 = vmatprep.subr.mxu0 %v536
    %797 = vmatpush2.msra.mxu0 %v535
    %798 = vmatprep.subr.mxu0 %v530
    %799 = vmatpush2.msra.mxu0 %v529
    %800 = vmatprep.subr.mxu0 %v524
    %801 = vmatpush2.msra.mxu0 %v523
    %802 = vmatprep.subr.mxu0 %v518
    %803 = vmatpush2.msra.mxu0 %v517
    %804 = vmatprep.subr.mxu0 %v512
    %805 = vmatpush2.msra.mxu0 %v511
    %806 = vmatprep.subr.mxu0 %v506
    %807 = vmatpush2.msra.mxu0 %v505
    %808 = vmatprep.subr.mxu0 %v500
    %809 = vmatpush2.msra.mxu0 %v499
    %810 = vmatprep.subr.mxu0 %v494
    %811 = vmatpush2.msra.mxu0 %v493
    %812 = vmatprep.subr.mxu0 %v488
    %813 = vmatpush2.msra.mxu0 %v487
    %814 = vmatprep.subr.mxu0 %v482
    %815 = vmatpush2.msra.mxu0 %v481
    %816 = vmatprep.subr.mxu0 %v476
    %817 = vmatpush2.msra.mxu0 %v475
    %818 = vmatprep.subr.mxu0 %v470
    %819 = vmatpush2.msra.mxu0 %v469
    %820 = vmatprep.mubr.f32.mxu0 %v340
    %821 = vmatmul.mubr.f32.gmra.mxu0 %v339
    %v822 = vpop.f32.mrf.mxu0
    %v823 = vadd.f32 %v576, %v822
    %v824 = vpop.f32.mrf.mxu0
    %v825 = vadd.f32 %v580, %v824
    %826 = vmatprep.mubr.f32.mxu0 %v342
    %827 = vmatmul.mubr.f32.gmra.mxu0 %v341
    %v828 = vpop.f32.mrf.mxu0
    %v829 = vadd.f32 %v576, %v828
    %v830 = vpop.f32.mrf.mxu0
    %v831 = vadd.f32 %v580, %v830
    %832 = vmatprep.mubr.f32.mxu0 %v344
    %833 = vmatmul.mubr.f32.gmra.mxu0 %v343
    %v834 = vpop.f32.mrf.mxu0
    %v835 = vadd.f32 %v576, %v834
    %v836 = vpop.f32.mrf.mxu0
    %v837 = vadd.f32 %v580, %v836
    %838 = vmatprep.mubr.f32.mxu0 %v346
    %839 = vmatmul.mubr.f32.gmra.mxu0 %v345
    %v840 = vpop.f32.mrf.mxu0
    %v841 = vadd.f32 %v576, %v840
    %v842 = vpop.f32.mrf.mxu0
    %v843 = vadd.f32 %v580, %v842
    %844 = vmatprep.mubr.f32.mxu0 %v348
    %845 = vmatmul.mubr.f32.gmra.mxu0 %v347
    %v846 = vpop.f32.mrf.mxu0
    %v847 = vadd.f32 %v576, %v846
    %v848 = vpop.f32.mrf.mxu0
    %v849 = vadd.f32 %v580, %v848
    %850 = vmatprep.mubr.f32.mxu0 %v350
    %851 = vmatmul.mubr.f32.gmra.mxu0 %v349
    %v852 = vpop.f32.mrf.mxu0
    %v853 = vadd.f32 %v576, %v852
    %v854 = vpop.f32.mrf.mxu0
    %v855 = vadd.f32 %v580, %v854
    %856 = vmatprep.mubr.f32.mxu0 %v352
    %857 = vmatmul.mubr.f32.gmra.mxu0 %v351
    %v858 = vpop.f32.mrf.mxu0
    %v859 = vadd.f32 %v576, %v858
    %v860 = vpop.f32.mrf.mxu0
    %v861 = vadd.f32 %v580, %v860
    %862 = vmatprep.mubr.f32.mxu0 %v354
    %863 = vmatmul.mubr.f32.gmra.mxu0 %v353
    %v864 = vpop.f32.mrf.mxu0
    %v865 = vadd.f32 %v576, %v864
    %v866 = vpop.f32.mrf.mxu0
    %v867 = vadd.f32 %v580, %v866
    %868 = vmatprep.mubr.f32.mxu0 %v356
    %869 = vmatmul.mubr.f32.gmra.mxu0 %v355
    %v870 = vpop.f32.mrf.mxu0
    %v871 = vadd.f32 %v576, %v870
    %v872 = vpop.f32.mrf.mxu0
    %v873 = vadd.f32 %v580, %v872
    %874 = vmatprep.mubr.f32.mxu0 %v358
    %875 = vmatmul.mubr.f32.gmra.mxu0 %v357
    %v876 = vpop.f32.mrf.mxu0
    %v877 = vadd.f32 %v576, %v876
    %v878 = vpop.f32.mrf.mxu0
    %v879 = vadd.f32 %v580, %v878
    %880 = vmatprep.mubr.f32.mxu0 %v360
    %881 = vmatmul.mubr.f32.gmra.mxu0 %v359
    %v882 = vpop.f32.mrf.mxu0
    %v883 = vadd.f32 %v576, %v882
    %v884 = vpop.f32.mrf.mxu0
    %v885 = vadd.f32 %v580, %v884
    %886 = vmatprep.mubr.f32.mxu0 %v362
    %887 = vmatmul.mubr.f32.gmra.mxu0 %v361
    %v888 = vpop.f32.mrf.mxu0
    %v889 = vadd.f32 %v576, %v888
    %v890 = vpop.f32.mrf.mxu0
    %v891 = vadd.f32 %v580, %v890
    %892 = vmatprep.mubr.f32.mxu0 %v364
    %893 = vmatmul.mubr.f32.gmra.mxu0 %v363
    %v894 = vpop.f32.mrf.mxu0
    %v895 = vadd.f32 %v576, %v894
    %v896 = vpop.f32.mrf.mxu0
    %v897 = vadd.f32 %v580, %v896
    %898 = vmatprep.mubr.f32.mxu0 %v366
    %899 = vmatmul.mubr.f32.gmra.mxu0 %v365
    %v900 = vpop.f32.mrf.mxu0
    %v901 = vadd.f32 %v576, %v900
    %v902 = vpop.f32.mrf.mxu0
    %v903 = vadd.f32 %v580, %v902
    %904 = vmatprep.mubr.f32.mxu0 %v368
    %905 = vmatmul.mubr.f32.gmra.mxu0 %v367
    %v906 = vpop.f32.mrf.mxu0
    %v907 = vadd.f32 %v576, %v906
    %v908 = vpop.f32.mrf.mxu0
    %v909 = vadd.f32 %v580, %v908
    %910 = vmatprep.mubr.f32.mxu0 %v370
    %911 = vmatmul.mubr.f32.gmra.mxu0 %v369
    %v912 = vpop.f32.mrf.mxu0
    %v913 = vadd.f32 %v576, %v912
    %v914 = vpop.f32.mrf.mxu0
    %v915 = vadd.f32 %v580, %v914
    %916 = vdwg.mxu0
    %917 = vmatprep.subr.mxu0 %v466
    %918 = vmatpush1.msra.mxu0 %v465
    %919 = vmatprep.subr.mxu0 %v460
    %920 = vmatpush1.msra.mxu0 %v459
    %921 = vmatprep.subr.mxu0 %v454
    %922 = vmatpush1.msra.mxu0 %v453
    %923 = vmatprep.subr.mxu0 %v448
    %924 = vmatpush1.msra.mxu0 %v447
    %925 = vmatprep.subr.mxu0 %v442
    %926 = vmatpush1.msra.mxu0 %v441
    %927 = vmatprep.subr.mxu0 %v436
    %928 = vmatpush1.msra.mxu0 %v435
    %929 = vmatprep.subr.mxu0 %v430
    %930 = vmatpush1.msra.mxu0 %v429
    %931 = vmatprep.subr.mxu0 %v424
    %932 = vmatpush1.msra.mxu0 %v423
    %933 = vmatprep.subr.mxu0 %v418
    %934 = vmatpush1.msra.mxu0 %v417
    %935 = vmatprep.subr.mxu0 %v412
    %936 = vmatpush1.msra.mxu0 %v411
    %937 = vmatprep.subr.mxu0 %v406
    %938 = vmatpush1.msra.mxu0 %v405
    %939 = vmatprep.subr.mxu0 %v400
    %940 = vmatpush1.msra.mxu0 %v399
    %941 = vmatprep.subr.mxu0 %v394
    %942 = vmatpush1.msra.mxu0 %v393
    %943 = vmatprep.subr.mxu0 %v388
    %944 = vmatpush1.msra.mxu0 %v387
    %945 = vmatprep.subr.mxu0 %v382
    %946 = vmatpush1.msra.mxu0 %v381
    %947 = vmatprep.subr.mxu0 %v376
    %948 = vmatpush1.msra.mxu0 %v375
    %949 = vmatprep.subr.mxu0 %v562
    %950 = vmatpush2.msra.mxu0 %v561
    %951 = vmatprep.subr.mxu0 %v556
    %952 = vmatpush2.msra.mxu0 %v555
    %953 = vmatprep.subr.mxu0 %v550
    %954 = vmatpush2.msra.mxu0 %v549
    %955 = vmatprep.subr.mxu0 %v544
    %956 = vmatpush2.msra.mxu0 %v543
    %957 = vmatprep.subr.mxu0 %v538
    %958 = vmatpush2.msra.mxu0 %v537
    %959 = vmatprep.subr.mxu0 %v532
    %960 = vmatpush2.msra.mxu0 %v531
    %961 = vmatprep.subr.mxu0 %v526
    %962 = vmatpush2.msra.mxu0 %v525
    %963 = vmatprep.subr.mxu0 %v520
    %964 = vmatpush2.msra.mxu0 %v519
    %965 = vmatprep.subr.mxu0 %v514
    %966 = vmatpush2.msra.mxu0 %v513
    %967 = vmatprep.subr.mxu0 %v508
    %968 = vmatpush2.msra.mxu0 %v507
    %969 = vmatprep.subr.mxu0 %v502
    %970 = vmatpush2.msra.mxu0 %v501
    %971 = vmatprep.subr.mxu0 %v496
    %972 = vmatpush2.msra.mxu0 %v495
    %973 = vmatprep.subr.mxu0 %v490
    %974 = vmatpush2.msra.mxu0 %v489
    %975 = vmatprep.subr.mxu0 %v484
    %976 = vmatpush2.msra.mxu0 %v483
    %977 = vmatprep.subr.mxu0 %v478
    %978 = vmatpush2.msra.mxu0 %v477
    %979 = vmatprep.subr.mxu0 %v472
    %980 = vmatpush2.msra.mxu0 %v471
    %981 = vmatprep.mubr.f32.mxu0 %v340
    %982 = vmatmul.mubr.f32.gmra.mxu0 %v339
    %v983 = vpop.f32.mrf.mxu0
    %v984 = vadd.f32 %v584, %v983
    %v985 = vpop.f32.mrf.mxu0
    %v986 = vadd.f32 %v588, %v985
    %987 = vmatprep.mubr.f32.mxu0 %v342
    %988 = vmatmul.mubr.f32.gmra.mxu0 %v341
    %v989 = vpop.f32.mrf.mxu0
    %v990 = vadd.f32 %v584, %v989
    %v991 = vpop.f32.mrf.mxu0
    %v992 = vadd.f32 %v588, %v991
    %993 = vmatprep.mubr.f32.mxu0 %v344
    %994 = vmatmul.mubr.f32.gmra.mxu0 %v343
    %v995 = vpop.f32.mrf.mxu0
    %v996 = vadd.f32 %v584, %v995
    %v997 = vpop.f32.mrf.mxu0
    %v998 = vadd.f32 %v588, %v997
    %999 = vmatprep.mubr.f32.mxu0 %v346
    %1000 = vmatmul.mubr.f32.gmra.mxu0 %v345
    %v1001 = vpop.f32.mrf.mxu0
    %v1002 = vadd.f32 %v584, %v1001
    %v1003 = vpop.f32.mrf.mxu0
    %v1004 = vadd.f32 %v588, %v1003
    %1005 = vmatprep.mubr.f32.mxu0 %v348
    %1006 = vmatmul.mubr.f32.gmra.mxu0 %v347
    %v1007 = vpop.f32.mrf.mxu0
    %v1008 = vadd.f32 %v584, %v1007
    %v1009 = vpop.f32.mrf.mxu0
    %v1010 = vadd.f32 %v588, %v1009
    %1011 = vmatprep.mubr.f32.mxu0 %v350
    %1012 = vmatmul.mubr.f32.gmra.mxu0 %v349
    %v1013 = vpop.f32.mrf.mxu0
    %v1014 = vadd.f32 %v584, %v1013
    %v1015 = vpop.f32.mrf.mxu0
    %v1016 = vadd.f32 %v588, %v1015
    %1017 = vmatprep.mubr.f32.mxu0 %v352
    %1018 = vmatmul.mubr.f32.gmra.mxu0 %v351
    %v1019 = vpop.f32.mrf.mxu0
    %v1020 = vadd.f32 %v584, %v1019
    %v1021 = vpop.f32.mrf.mxu0
    %v1022 = vadd.f32 %v588, %v1021
    %1023 = vmatprep.mubr.f32.mxu0 %v354
    %1024 = vmatmul.mubr.f32.gmra.mxu0 %v353
    %v1025 = vpop.f32.mrf.mxu0
    %v1026 = vadd.f32 %v584, %v1025
    %v1027 = vpop.f32.mrf.mxu0
    %v1028 = vadd.f32 %v588, %v1027
    %1029 = vmatprep.mubr.f32.mxu0 %v356
    %1030 = vmatmul.mubr.f32.gmra.mxu0 %v355
    %v1031 = vpop.f32.mrf.mxu0
    %v1032 = vadd.f32 %v584, %v1031
    %v1033 = vpop.f32.mrf.mxu0
    %v1034 = vadd.f32 %v588, %v1033
    %1035 = vmatprep.mubr.f32.mxu0 %v358
    %1036 = vmatmul.mubr.f32.gmra.mxu0 %v357
    %v1037 = vpop.f32.mrf.mxu0
    %v1038 = vadd.f32 %v584, %v1037
    %v1039 = vpop.f32.mrf.mxu0
    %v1040 = vadd.f32 %v588, %v1039
    %1041 = vmatprep.mubr.f32.mxu0 %v360
    %1042 = vmatmul.mubr.f32.gmra.mxu0 %v359
    %v1043 = vpop.f32.mrf.mxu0
    %v1044 = vadd.f32 %v584, %v1043
    %v1045 = vpop.f32.mrf.mxu0
    %v1046 = vadd.f32 %v588, %v1045
    %1047 = vmatprep.mubr.f32.mxu0 %v362
    %1048 = vmatmul.mubr.f32.gmra.mxu0 %v361
    %v1049 = vpop.f32.mrf.mxu0
    %v1050 = vadd.f32 %v584, %v1049
    %v1051 = vpop.f32.mrf.mxu0
    %v1052 = vadd.f32 %v588, %v1051
    %1053 = vmatprep.mubr.f32.mxu0 %v364
    %1054 = vmatmul.mubr.f32.gmra.mxu0 %v363
    %v1055 = vpop.f32.mrf.mxu0
    %v1056 = vadd.f32 %v584, %v1055
    %v1057 = vpop.f32.mrf.mxu0
    %v1058 = vadd.f32 %v588, %v1057
    %1059 = vmatprep.mubr.f32.mxu0 %v366
    %1060 = vmatmul.mubr.f32.gmra.mxu0 %v365
    %v1061 = vpop.f32.mrf.mxu0
    %v1062 = vadd.f32 %v584, %v1061
    %v1063 = vpop.f32.mrf.mxu0
    %v1064 = vadd.f32 %v588, %v1063
    %1065 = vmatprep.mubr.f32.mxu0 %v368
    %1066 = vmatmul.mubr.f32.gmra.mxu0 %v367
    %v1067 = vpop.f32.mrf.mxu0
    %v1068 = vadd.f32 %v584, %v1067
    %v1069 = vpop.f32.mrf.mxu0
    %v1070 = vadd.f32 %v588, %v1069
    %1071 = vmatprep.mubr.f32.mxu0 %v370
    %1072 = vmatmul.mubr.f32.gmra.mxu0 %v369
    %v1073 = vpop.f32.mrf.mxu0
    %v1074 = vadd.f32 %v584, %v1073
    %v1075 = vpop.f32.mrf.mxu0
    %v1076 = vadd.f32 %v588, %v1075
    %1077 = vdwg.mxu0
    %v1078 = vld [vmem:[#allocation6] sm:$0xff]
    %v1079 = vld [vmem:[#allocation6 + $0x8] sm:$0xff]
    %v1080 = vld [vmem:[#allocation6 + $0x10] sm:$0xff]
    %v1081 = vld [vmem:[#allocation6 + $0x18] sm:$0xff]
    %v1082 = vld [vmem:[#allocation6 + $0x20] sm:$0xff]
    %v1083 = vld [vmem:[#allocation6 + $0x28] sm:$0xff]
    %v1084 = vld [vmem:[#allocation6 + $0x30] sm:$0xff]
    %v1085 = vld [vmem:[#allocation6 + $0x38] sm:$0xff]
    %v1086 = vld [vmem:[#allocation8] sm:$0xff]
    %v1087 = vld [vmem:[#allocation8 + $0x8] sm:$0xff]
    %v1088 = vld [vmem:[#allocation8 + $0x10] sm:$0xff]
    %v1089 = vld [vmem:[#allocation8 + $0x18] sm:$0xff]
    %v1090 = vld [vmem:[#allocation8 + $0x20] sm:$0xff]
    %v1091 = vld [vmem:[#allocation8 + $0x28] sm:$0xff]
    %v1092 = vld [vmem:[#allocation8 + $0x30] sm:$0xff]
    %v1093 = vld [vmem:[#allocation8 + $0x38] sm:$0xff]
    %v1094 = vmul.f32 %v662, %v1078
    %v1095 = vmul.f32 %v668, %v1079
    %v1096 = vmul.f32 %v674, %v1080
    %v1097 = vmul.f32 %v680, %v1081
    %v1098 = vmul.f32 %v686, %v1082
    %v1099 = vmul.f32 %v692, %v1083
    %v1100 = vmul.f32 %v698, %v1084
    %v1101 = vmul.f32 %v704, %v1085
    %1102 = vrot.lane.b32.xlu0 %v662, 64
    %v1103 = vpop.permute.xlu0 %1102
    %1104 = vrot.lane.b32.xlu0 %v668, 64
    %v1105 = vpop.permute.xlu0 %1104
    %1106 = vrot.lane.b32.xlu0 %v674, 64
    %v1107 = vpop.permute.xlu0 %1106
    %1108 = vrot.lane.b32.xlu0 %v680, 64
    %v1109 = vpop.permute.xlu0 %1108
    %1110 = vrot.lane.b32.xlu0 %v686, 64
    %v1111 = vpop.permute.xlu0 %1110
    %1112 = vrot.lane.b32.xlu0 %v692, 64
    %v1113 = vpop.permute.xlu0 %1112
    %1114 = vrot.lane.b32.xlu0 %v698, 64
    %v1115 = vpop.permute.xlu0 %1114
    %1116 = vrot.lane.b32.xlu0 %v704, 64
    %v1117 = vpop.permute.xlu0 %1116
    %v1118 = vmul.f32 %v1103, %v1086
    %v1119 = vmul.f32 %v1105, %v1087
    %v1120 = vmul.f32 %v1107, %v1088
    %v1121 = vmul.f32 %v1109, %v1089
    %v1122 = vmul.f32 %v1111, %v1090
    %v1123 = vmul.f32 %v1113, %v1091
    %v1124 = vmul.f32 %v1115, %v1092
    %v1125 = vmul.f32 %v1117, %v1093
    %v1126 = vadd.f32 %v1094, %v1118
    %v1127 = vadd.f32 %v1095, %v1119
    %v1128 = vadd.f32 %v1096, %v1120
    %v1129 = vadd.f32 %v1097, %v1121
    %v1130 = vadd.f32 %v1098, %v1122
    %v1131 = vadd.f32 %v1099, %v1123
    %v1132 = vadd.f32 %v1100, %v1124
    %v1133 = vadd.f32 %v1101, %v1125
    %v1134 = vmul.f32 %v823, %v1078
    %v1135 = vmul.f32 %v829, %v1079
    %v1136 = vmul.f32 %v835, %v1080
    %v1137 = vmul.f32 %v841, %v1081
    %v1138 = vmul.f32 %v847, %v1082
    %v1139 = vmul.f32 %v853, %v1083
    %v1140 = vmul.f32 %v859, %v1084
    %v1141 = vmul.f32 %v865, %v1085
    %1142 = vrot.lane.b32.xlu0 %v823, 64
    %v1143 = vpop.permute.xlu0 %1142
    %1144 = vrot.lane.b32.xlu0 %v829, 64
    %v1145 = vpop.permute.xlu0 %1144
    %1146 = vrot.lane.b32.xlu0 %v835, 64
    %v1147 = vpop.permute.xlu0 %1146
    %1148 = vrot.lane.b32.xlu0 %v841, 64
    %v1149 = vpop.permute.xlu0 %1148
    %1150 = vrot.lane.b32.xlu0 %v847, 64
    %v1151 = vpop.permute.xlu0 %1150
    %1152 = vrot.lane.b32.xlu0 %v853, 64
    %v1153 = vpop.permute.xlu0 %1152
    %1154 = vrot.lane.b32.xlu0 %v859, 64
    %v1155 = vpop.permute.xlu0 %1154
    %1156 = vrot.lane.b32.xlu0 %v865, 64
    %v1157 = vpop.permute.xlu0 %1156
    %v1158 = vmul.f32 %v1143, %v1086
    %v1159 = vmul.f32 %v1145, %v1087
    %v1160 = vmul.f32 %v1147, %v1088
    %v1161 = vmul.f32 %v1149, %v1089
    %v1162 = vmul.f32 %v1151, %v1090
    %v1163 = vmul.f32 %v1153, %v1091
    %v1164 = vmul.f32 %v1155, %v1092
    %v1165 = vmul.f32 %v1157, %v1093
    %v1166 = vadd.f32 %v1134, %v1158
    %v1167 = vadd.f32 %v1135, %v1159
    %v1168 = vadd.f32 %v1136, %v1160
    %v1169 = vadd.f32 %v1137, %v1161
    %v1170 = vadd.f32 %v1138, %v1162
    %v1171 = vadd.f32 %v1139, %v1163
    %v1172 = vadd.f32 %v1140, %v1164
    %v1173 = vadd.f32 %v1141, %v1165
    %1174 = vmatprep.subr.mxu0 0.0
    %1175 = vmatpush1.xpose.msra.mxu0 0.0
    %1176 = vmatprep.subr.mxu0 0.0
    %1177 = vmatpush1.xpose.msra.mxu0 0.0
    %1178 = vmatprep.subr.mxu0 0.0
    %1179 = vmatpush1.xpose.msra.mxu0 0.0
    %1180 = vmatprep.subr.mxu0 0.0
    %1181 = vmatpush1.xpose.msra.mxu0 0.0
    %1182 = vmatprep.subr.mxu0 0.0
    %1183 = vmatpush1.xpose.msra.mxu0 0.0
    %1184 = vmatprep.subr.mxu0 0.0
    %1185 = vmatpush1.xpose.msra.mxu0 0.0
    %1186 = vmatprep.subr.mxu0 0.0
    %1187 = vmatpush1.xpose.msra.mxu0 0.0
    %1188 = vmatprep.subr.mxu0 0.0
    %1189 = vmatpush1.xpose.msra.mxu0 0.0
    %1190 = vmatprep.subr.mxu0 0.0
    %1191 = vmatpush1.xpose.msra.mxu0 %v1173
    %1192 = vmatprep.subr.mxu0 0.0
    %1193 = vmatpush1.xpose.msra.mxu0 %v1172
    %1194 = vmatprep.subr.mxu0 0.0
    %1195 = vmatpush1.xpose.msra.mxu0 %v1171
    %1196 = vmatprep.subr.mxu0 0.0
    %1197 = vmatpush1.xpose.msra.mxu0 %v1170
    %1198 = vmatprep.subr.mxu0 0.0
    %1199 = vmatpush1.xpose.msra.mxu0 %v1169
    %1200 = vmatprep.subr.mxu0 0.0
    %1201 = vmatpush1.xpose.msra.mxu0 %v1168
    %1202 = vmatprep.subr.mxu0 0.0
    %1203 = vmatpush1.xpose.msra.mxu0 %v1167
    %1204 = vmatprep.subr.mxu0 0.0
    %1205 = vmatpush1.xpose.msra.mxu0 %v1166
    %1206 = vmatprep.subr.mxu0 0.0
    %1207 = vmatpush2.xpose.msra.mxu0 0.0
    %1208 = vmatprep.subr.mxu0 0.0
    %1209 = vmatpush2.xpose.msra.mxu0 0.0
    %1210 = vmatprep.subr.mxu0 0.0
    %1211 = vmatpush2.xpose.msra.mxu0 0.0
    %1212 = vmatprep.subr.mxu0 0.0
    %1213 = vmatpush2.xpose.msra.mxu0 0.0
    %1214 = vmatprep.subr.mxu0 0.0
    %1215 = vmatpush2.xpose.msra.mxu0 0.0
    %1216 = vmatprep.subr.mxu0 0.0
    %1217 = vmatpush2.xpose.msra.mxu0 0.0
    %1218 = vmatprep.subr.mxu0 0.0
    %1219 = vmatpush2.xpose.msra.mxu0 0.0
    %1220 = vmatprep.subr.mxu0 0.0
    %1221 = vmatpush2.xpose.msra.mxu0 0.0
    %1222 = vmatprep.subr.mxu0 0.0
    %1223 = vmatpush2.xpose.msra.mxu0 0.0
    %1224 = vmatprep.subr.mxu0 0.0
    %1225 = vmatpush2.xpose.msra.mxu0 0.0
    %1226 = vmatprep.subr.mxu0 0.0
    %1227 = vmatpush2.xpose.msra.mxu0 0.0
    %1228 = vmatprep.subr.mxu0 0.0
    %1229 = vmatpush2.xpose.msra.mxu0 0.0
    %1230 = vmatprep.subr.mxu0 0.0
    %1231 = vmatpush2.xpose.msra.mxu0 0.0
    %1232 = vmatprep.subr.mxu0 0.0
    %1233 = vmatpush2.xpose.msra.mxu0 0.0
    %1234 = vmatprep.subr.mxu0 0.0
    %1235 = vmatpush2.xpose.msra.mxu0 0.0
    %1236 = vmatprep.subr.mxu0 0.0
    %1237 = vmatpush2.xpose.msra.mxu0 0.0
    %1238 = vmatprep.mubr.f32.mxu0 0.0
    %1239 = vmatmul.mubr.f32.gmra.mxu0 %v1126
    %v1240 = vpop.f32.mrf.mxu0
    %v1241 = vadd.f32 0.0, %v1240
    %v1242 = vpop.f32.mrf.mxu0
    %1243 = vmatprep.mubr.f32.mxu0 0.0
    %1244 = vmatmul.mubr.f32.gmra.mxu0 %v1127
    %v1245 = vpop.f32.mrf.mxu0
    %v1246 = vadd.f32 0.0, %v1245
    %v1247 = vpop.f32.mrf.mxu0
    %1248 = vmatprep.mubr.f32.mxu0 0.0
    %1249 = vmatmul.mubr.f32.gmra.mxu0 %v1128
    %v1250 = vpop.f32.mrf.mxu0
    %v1251 = vadd.f32 0.0, %v1250
    %v1252 = vpop.f32.mrf.mxu0
    %1253 = vmatprep.mubr.f32.mxu0 0.0
    %1254 = vmatmul.mubr.f32.gmra.mxu0 %v1129
    %v1255 = vpop.f32.mrf.mxu0
    %v1256 = vadd.f32 0.0, %v1255
    %v1257 = vpop.f32.mrf.mxu0
    %1258 = vmatprep.mubr.f32.mxu0 0.0
    %1259 = vmatmul.mubr.f32.gmra.mxu0 %v1130
    %v1260 = vpop.f32.mrf.mxu0
    %v1261 = vadd.f32 0.0, %v1260
    %v1262 = vpop.f32.mrf.mxu0
    %1263 = vmatprep.mubr.f32.mxu0 0.0
    %1264 = vmatmul.mubr.f32.gmra.mxu0 %v1131
    %v1265 = vpop.f32.mrf.mxu0
    %v1266 = vadd.f32 0.0, %v1265
    %v1267 = vpop.f32.mrf.mxu0
    %1268 = vmatprep.mubr.f32.mxu0 0.0
    %1269 = vmatmul.mubr.f32.gmra.mxu0 %v1132
    %v1270 = vpop.f32.mrf.mxu0
    %v1271 = vadd.f32 0.0, %v1270
    %v1272 = vpop.f32.mrf.mxu0
    %1273 = vmatprep.mubr.f32.mxu0 0.0
    %1274 = vmatmul.mubr.f32.gmra.mxu0 %v1133
    %v1275 = vpop.f32.mrf.mxu0
    %v1276 = vadd.f32 0.0, %v1275
    %v1277 = vpop.f32.mrf.mxu0
    %1278 = vdwg.mxu0
    %vm1279 = vcmask 523264
    %v1280 = vsel %vm1279, %v1241, -inf
    %1281 = vmax.xlane.f32.xlu0 %v1280
    %v1282 = vpop.xlane.xlu0 %1281
    %v1283 = vsel %vm1279, %v1246, -inf
    %1284 = vmax.xlane.f32.xlu0 %v1283
    %v1285 = vpop.xlane.xlu0 %1284
    %v1286 = vsel %vm1279, %v1251, -inf
    %1287 = vmax.xlane.f32.xlu0 %v1286
    %v1288 = vpop.xlane.xlu0 %1287
    %v1289 = vsel %vm1279, %v1256, -inf
    %1290 = vmax.xlane.f32.xlu0 %v1289
    %v1291 = vpop.xlane.xlu0 %1290
    %v1292 = vsel %vm1279, %v1261, -inf
    %1293 = vmax.xlane.f32.xlu0 %v1292
    %v1294 = vpop.xlane.xlu0 %1293
    %v1295 = vsel %vm1279, %v1266, -inf
    %1296 = vmax.xlane.f32.xlu0 %v1295
    %v1297 = vpop.xlane.xlu0 %1296
    %v1298 = vsel %vm1279, %v1271, -inf
    %1299 = vmax.xlane.f32.xlu0 %v1298
    %v1300 = vpop.xlane.xlu0 %1299
    %v1301 = vsel %vm1279, %v1276, -inf
    %1302 = vmax.xlane.f32.xlu0 %v1301
    %v1303 = vpop.xlane.xlu0 %1302
    %v1304 = vsub.f32 %v1241, %v1282
    %v1305 = vsub.f32 %v1246, %v1285
    %v1306 = vsub.f32 %v1251, %v1288
    %v1307 = vsub.f32 %v1256, %v1291
    %v1308 = vsub.f32 %v1261, %v1294
    %v1309 = vsub.f32 %v1266, %v1297
    %v1310 = vsub.f32 %v1271, %v1300
    %v1311 = vsub.f32 %v1276, %v1303
    %v1312 = vmul.f32 %v1304, 1.442695
    %v1313 = vpow.pop %v1312
    %v1314 = vmul.f32 %v1305, 1.442695
    %v1315 = vpow.pop %v1314
    %v1316 = vmul.f32 %v1306, 1.442695
    %v1317 = vpow.pop %v1316
    %v1318 = vmul.f32 %v1307, 1.442695
    %v1319 = vpow.pop %v1318
    %v1320 = vmul.f32 %v1308, 1.442695
    %v1321 = vpow.pop %v1320
    %v1322 = vmul.f32 %v1309, 1.442695
    %v1323 = vpow.pop %v1322
    %v1324 = vmul.f32 %v1310, 1.442695
    %v1325 = vpow.pop %v1324
    %v1326 = vmul.f32 %v1311, 1.442695
    %v1327 = vpow.pop %v1326
    %v1328 = vsel %vm1279, %v1313, 0.0
    %1329 = vadd.xlane.f32.xlu0 %v1328
    %v1330 = vpop.xlane.xlu0 %1329
    %v1331 = vsel %vm1279, %v1315, 0.0
    %1332 = vadd.xlane.f32.xlu0 %v1331
    %v1333 = vpop.xlane.xlu0 %1332
    %v1334 = vsel %vm1279, %v1317, 0.0
    %1335 = vadd.xlane.f32.xlu0 %v1334
    %v1336 = vpop.xlane.xlu0 %1335
    %v1337 = vsel %vm1279, %v1319, 0.0
    %1338 = vadd.xlane.f32.xlu0 %v1337
    %v1339 = vpop.xlane.xlu0 %1338
    %v1340 = vsel %vm1279, %v1321, 0.0
    %1341 = vadd.xlane.f32.xlu0 %v1340
    %v1342 = vpop.xlane.xlu0 %1341
    %v1343 = vsel %vm1279, %v1323, 0.0
    %1344 = vadd.xlane.f32.xlu0 %v1343
    %v1345 = vpop.xlane.xlu0 %1344
    %v1346 = vsel %vm1279, %v1325, 0.0
    %1347 = vadd.xlane.f32.xlu0 %v1346
    %v1348 = vpop.xlane.xlu0 %1347
    %v1349 = vsel %vm1279, %v1327, 0.0
    %1350 = vadd.xlane.f32.xlu0 %v1349
    %v1351 = vpop.xlane.xlu0 %1350
    %v1352 = vrcp.pop %v1330
    %v1353 = vmul.f32 %v1313, %v1352
    %v1354 = vrcp.pop %v1333
    %v1355 = vmul.f32 %v1315, %v1354
    %v1356 = vrcp.pop %v1336
    %v1357 = vmul.f32 %v1317, %v1356
    %v1358 = vrcp.pop %v1339
    %v1359 = vmul.f32 %v1319, %v1358
    %v1360 = vrcp.pop %v1342
    %v1361 = vmul.f32 %v1321, %v1360
    %v1362 = vrcp.pop %v1345
    %v1363 = vmul.f32 %v1323, %v1362
    %v1364 = vrcp.pop %v1348
    %v1365 = vmul.f32 %v1325, %v1364
    %v1366 = vrcp.pop %v1351
    %v1367 = vmul.f32 %v1327, %v1366
    %v1369 = vsel %vm1279, %v1353, 0
    %v1372 = vsel %vm1279, %v1355, 0
    %v1375 = vsel %vm1279, %v1357, 0
    %v1378 = vsel %vm1279, %v1359, 0
    %v1381 = vsel %vm1279, %v1361, 0
    %v1384 = vsel %vm1279, %v1363, 0
    %v1387 = vsel %vm1279, %v1365, 0
    %v1390 = vsel %vm1279, %v1367, 0
    %1392 = vmatprep.subr.mxu0 0.0
    %1393 = vmatpush1.msra.mxu0 0.0
    %1394 = vmatprep.subr.mxu0 0.0
    %1395 = vmatpush1.msra.mxu0 0.0
    %1396 = vmatprep.subr.mxu0 0.0
    %1397 = vmatpush1.msra.mxu0 0.0
    %1398 = vmatprep.subr.mxu0 0.0
    %1399 = vmatpush1.msra.mxu0 0.0
    %1400 = vmatprep.subr.mxu0 0.0
    %1401 = vmatpush1.msra.mxu0 0.0
    %1402 = vmatprep.subr.mxu0 0.0
    %1403 = vmatpush1.msra.mxu0 0.0
    %1404 = vmatprep.subr.mxu0 0.0
    %1405 = vmatpush1.msra.mxu0 0.0
    %1406 = vmatprep.subr.mxu0 0.0
    %1407 = vmatpush1.msra.mxu0 0.0
    %1408 = vmatprep.subr.mxu0 0.0
    %1409 = vmatpush1.msra.mxu0 %v1026
    %1410 = vmatprep.subr.mxu0 0.0
    %1411 = vmatpush1.msra.mxu0 %v1020
    %1412 = vmatprep.subr.mxu0 0.0
    %1413 = vmatpush1.msra.mxu0 %v1014
    %1414 = vmatprep.subr.mxu0 0.0
    %1415 = vmatpush1.msra.mxu0 %v1008
    %1416 = vmatprep.subr.mxu0 0.0
    %1417 = vmatpush1.msra.mxu0 %v1002
    %1418 = vmatprep.subr.mxu0 0.0
    %1419 = vmatpush1.msra.mxu0 %v996
    %1420 = vmatprep.subr.mxu0 0.0
    %1421 = vmatpush1.msra.mxu0 %v990
    %1422 = vmatprep.subr.mxu0 0.0
    %1423 = vmatpush1.msra.mxu0 %v984
    %1424 = vmatprep.subr.mxu0 0.0
    %1425 = vmatpush2.msra.mxu0 0.0
    %1426 = vmatprep.subr.mxu0 0.0
    %1427 = vmatpush2.msra.mxu0 0.0
    %1428 = vmatprep.subr.mxu0 0.0
    %1429 = vmatpush2.msra.mxu0 0.0
    %1430 = vmatprep.subr.mxu0 0.0
    %1431 = vmatpush2.msra.mxu0 0.0
    %1432 = vmatprep.subr.mxu0 0.0
    %1433 = vmatpush2.msra.mxu0 0.0
    %1434 = vmatprep.subr.mxu0 0.0
    %1435 = vmatpush2.msra.mxu0 0.0
    %1436 = vmatprep.subr.mxu0 0.0
    %1437 = vmatpush2.msra.mxu0 0.0
    %1438 = vmatprep.subr.mxu0 0.0
    %1439 = vmatpush2.msra.mxu0 0.0
    %1440 = vmatprep.subr.mxu0 0.0
    %1441 = vmatpush2.msra.mxu0 0.0
    %1442 = vmatprep.subr.mxu0 0.0
    %1443 = vmatpush2.msra.mxu0 0.0
    %1444 = vmatprep.subr.mxu0 0.0
    %1445 = vmatpush2.msra.mxu0 0.0
    %1446 = vmatprep.subr.mxu0 0.0
    %1447 = vmatpush2.msra.mxu0 0.0
    %1448 = vmatprep.subr.mxu0 0.0
    %1449 = vmatpush2.msra.mxu0 0.0
    %1450 = vmatprep.subr.mxu0 0.0
    %1451 = vmatpush2.msra.mxu0 0.0
    %1452 = vmatprep.subr.mxu0 0.0
    %1453 = vmatpush2.msra.mxu0 0.0
    %1454 = vmatprep.subr.mxu0 0.0
    %1455 = vmatpush2.msra.mxu0 0.0
    %1456 = vmatprep.mubr.f32.mxu0 0.0
    %1457 = vmatmul.mubr.f32.gmra.mxu0 %v1369
    %v1458 = vpop.f32.mrf.mxu0
    %v1459 = vadd.f32 0.0, %v1458
    %v1460 = vpop.f32.mrf.mxu0
    %1461 = vmatprep.mubr.f32.mxu0 0.0
    %1462 = vmatmul.mubr.f32.gmra.mxu0 %v1372
    %v1463 = vpop.f32.mrf.mxu0
    %v1464 = vadd.f32 0.0, %v1463
    %v1465 = vpop.f32.mrf.mxu0
    %1466 = vmatprep.mubr.f32.mxu0 0.0
    %1467 = vmatmul.mubr.f32.gmra.mxu0 %v1375
    %v1468 = vpop.f32.mrf.mxu0
    %v1469 = vadd.f32 0.0, %v1468
    %v1470 = vpop.f32.mrf.mxu0
    %1471 = vmatprep.mubr.f32.mxu0 0.0
    %1472 = vmatmul.mubr.f32.gmra.mxu0 %v1378
    %v1473 = vpop.f32.mrf.mxu0
    %v1474 = vadd.f32 0.0, %v1473
    %v1475 = vpop.f32.mrf.mxu0
    %1476 = vmatprep.mubr.f32.mxu0 0.0
    %1477 = vmatmul.mubr.f32.gmra.mxu0 %v1381
    %v1478 = vpop.f32.mrf.mxu0
    %v1479 = vadd.f32 0.0, %v1478
    %v1480 = vpop.f32.mrf.mxu0
    %1481 = vmatprep.mubr.f32.mxu0 0.0
    %1482 = vmatmul.mubr.f32.gmra.mxu0 %v1384
    %v1483 = vpop.f32.mrf.mxu0
    %v1484 = vadd.f32 0.0, %v1483
    %v1485 = vpop.f32.mrf.mxu0
    %1486 = vmatprep.mubr.f32.mxu0 0.0
    %1487 = vmatmul.mubr.f32.gmra.mxu0 %v1387
    %v1488 = vpop.f32.mrf.mxu0
    %v1489 = vadd.f32 0.0, %v1488
    %v1490 = vpop.f32.mrf.mxu0
    %1491 = vmatprep.mubr.f32.mxu0 0.0
    %1492 = vmatmul.mubr.f32.gmra.mxu0 %v1390
    %v1493 = vpop.f32.mrf.mxu0
    %v1494 = vadd.f32 0.0, %v1493
    %v1495 = vpop.f32.mrf.mxu0
    %1496 = vdwg.mxu0
    %1497 = vst [vmem:[#allocation2] sm:$0xff] %v1459
    %1498 = vst [vmem:[#allocation2 + $0x10] sm:$0xff] %v1464
    %1499 = vst [vmem:[#allocation2 + $0x20] sm:$0xff] %v1469
    %1500 = vst [vmem:[#allocation2 + $0x30] sm:$0xff] %v1474
    %1501 = vst [vmem:[#allocation2 + $0x40] sm:$0xff] %v1479
    %1502 = vst [vmem:[#allocation2 + $0x50] sm:$0xff] %v1484
    %1503 = vst [vmem:[#allocation2 + $0x60] sm:$0xff] %v1489
    %1504 = vst [vmem:[#allocation2 + $0x70] sm:$0xff] %v1494
    %v1505 = vmul.f32 %v664, %v1078
    %v1506 = vmul.f32 %v670, %v1079
    %v1507 = vmul.f32 %v676, %v1080
    %v1508 = vmul.f32 %v682, %v1081
    %v1509 = vmul.f32 %v688, %v1082
    %v1510 = vmul.f32 %v694, %v1083
    %v1511 = vmul.f32 %v700, %v1084
    %v1512 = vmul.f32 %v706, %v1085
    %1513 = vrot.lane.b32.xlu0 %v664, 64
    %v1514 = vpop.permute.xlu0 %1513
    %1515 = vrot.lane.b32.xlu0 %v670, 64
    %v1516 = vpop.permute.xlu0 %1515
    %1517 = vrot.lane.b32.xlu0 %v676, 64
    %v1518 = vpop.permute.xlu0 %1517
    %1519 = vrot.lane.b32.xlu0 %v682, 64
    %v1520 = vpop.permute.xlu0 %1519
    %1521 = vrot.lane.b32.xlu0 %v688, 64
    %v1522 = vpop.permute.xlu0 %1521
    %1523 = vrot.lane.b32.xlu0 %v694, 64
    %v1524 = vpop.permute.xlu0 %1523
    %1525 = vrot.lane.b32.xlu0 %v700, 64
    %v1526 = vpop.permute.xlu0 %1525
    %1527 = vrot.lane.b32.xlu0 %v706, 64
    %v1528 = vpop.permute.xlu0 %1527
    %v1529 = vmul.f32 %v1514, %v1086
    %v1530 = vmul.f32 %v1516, %v1087
    %v1531 = vmul.f32 %v1518, %v1088
    %v1532 = vmul.f32 %v1520, %v1089
    %v1533 = vmul.f32 %v1522, %v1090
    %v1534 = vmul.f32 %v1524, %v1091
    %v1535 = vmul.f32 %v1526, %v1092
    %v1536 = vmul.f32 %v1528, %v1093
    %v1537 = vadd.f32 %v1505, %v1529
    %v1538 = vadd.f32 %v1506, %v1530
    %v1539 = vadd.f32 %v1507, %v1531
    %v1540 = vadd.f32 %v1508, %v1532
    %v1541 = vadd.f32 %v1509, %v1533
    %v1542 = vadd.f32 %v1510, %v1534
    %v1543 = vadd.f32 %v1511, %v1535
    %v1544 = vadd.f32 %v1512, %v1536
    %v1545 = vmul.f32 %v825, %v1078
    %v1546 = vmul.f32 %v831, %v1079
    %v1547 = vmul.f32 %v837, %v1080
    %v1548 = vmul.f32 %v843, %v1081
    %v1549 = vmul.f32 %v849, %v1082
    %v1550 = vmul.f32 %v855, %v1083
    %v1551 = vmul.f32 %v861, %v1084
    %v1552 = vmul.f32 %v867, %v1085
    %1553 = vrot.lane.b32.xlu0 %v825, 64
    %v1554 = vpop.permute.xlu0 %1553
    %1555 = vrot.lane.b32.xlu0 %v831, 64
    %v1556 = vpop.permute.xlu0 %1555
    %1557 = vrot.lane.b32.xlu0 %v837, 64
    %v1558 = vpop.permute.xlu0 %1557
    %1559 = vrot.lane.b32.xlu0 %v843, 64
    %v1560 = vpop.permute.xlu0 %1559
    %1561 = vrot.lane.b32.xlu0 %v849, 64
    %v1562 = vpop.permute.xlu0 %1561
    %1563 = vrot.lane.b32.xlu0 %v855, 64
    %v1564 = vpop.permute.xlu0 %1563
    %1565 = vrot.lane.b32.xlu0 %v861, 64
    %v1566 = vpop.permute.xlu0 %1565
    %1567 = vrot.lane.b32.xlu0 %v867, 64
    %v1568 = vpop.permute.xlu0 %1567
    %v1569 = vmul.f32 %v1554, %v1086
    %v1570 = vmul.f32 %v1556, %v1087
    %v1571 = vmul.f32 %v1558, %v1088
    %v1572 = vmul.f32 %v1560, %v1089
    %v1573 = vmul.f32 %v1562, %v1090
    %v1574 = vmul.f32 %v1564, %v1091
    %v1575 = vmul.f32 %v1566, %v1092
    %v1576 = vmul.f32 %v1568, %v1093
    %v1577 = vadd.f32 %v1545, %v1569
    %v1578 = vadd.f32 %v1546, %v1570
    %v1579 = vadd.f32 %v1547, %v1571
    %v1580 = vadd.f32 %v1548, %v1572
    %v1581 = vadd.f32 %v1549, %v1573
    %v1582 = vadd.f32 %v1550, %v1574
    %v1583 = vadd.f32 %v1551, %v1575
    %v1584 = vadd.f32 %v1552, %v1576
    %1585 = vmatprep.subr.mxu0 0.0
    %1586 = vmatpush1.xpose.msra.mxu0 0.0
    %1587 = vmatprep.subr.mxu0 0.0
    %1588 = vmatpush1.xpose.msra.mxu0 0.0
    %1589 = vmatprep.subr.mxu0 0.0
    %1590 = vmatpush1.xpose.msra.mxu0 0.0
    %1591 = vmatprep.subr.mxu0 0.0
    %1592 = vmatpush1.xpose.msra.mxu0 0.0
    %1593 = vmatprep.subr.mxu0 0.0
    %1594 = vmatpush1.xpose.msra.mxu0 0.0
    %1595 = vmatprep.subr.mxu0 0.0
    %1596 = vmatpush1.xpose.msra.mxu0 0.0
    %1597 = vmatprep.subr.mxu0 0.0
    %1598 = vmatpush1.xpose.msra.mxu0 0.0
    %1599 = vmatprep.subr.mxu0 0.0
    %1600 = vmatpush1.xpose.msra.mxu0 0.0
    %1601 = vmatprep.subr.mxu0 0.0
    %1602 = vmatpush1.xpose.msra.mxu0 %v1584
    %1603 = vmatprep.subr.mxu0 0.0
    %1604 = vmatpush1.xpose.msra.mxu0 %v1583
    %1605 = vmatprep.subr.mxu0 0.0
    %1606 = vmatpush1.xpose.msra.mxu0 %v1582
    %1607 = vmatprep.subr.mxu0 0.0
    %1608 = vmatpush1.xpose.msra.mxu0 %v1581
    %1609 = vmatprep.subr.mxu0 0.0
    %1610 = vmatpush1.xpose.msra.mxu0 %v1580
    %1611 = vmatprep.subr.mxu0 0.0
    %1612 = vmatpush1.xpose.msra.mxu0 %v1579
    %1613 = vmatprep.subr.mxu0 0.0
    %1614 = vmatpush1.xpose.msra.mxu0 %v1578
    %1615 = vmatprep.subr.mxu0 0.0
    %1616 = vmatpush1.xpose.msra.mxu0 %v1577
    %1617 = vmatprep.subr.mxu0 0.0
    %1618 = vmatpush2.xpose.msra.mxu0 0.0
    %1619 = vmatprep.subr.mxu0 0.0
    %1620 = vmatpush2.xpose.msra.mxu0 0.0
    %1621 = vmatprep.subr.mxu0 0.0
    %1622 = vmatpush2.xpose.msra.mxu0 0.0
    %1623 = vmatprep.subr.mxu0 0.0
    %1624 = vmatpush2.xpose.msra.mxu0 0.0
    %1625 = vmatprep.subr.mxu0 0.0
    %1626 = vmatpush2.xpose.msra.mxu0 0.0
    %1627 = vmatprep.subr.mxu0 0.0
    %1628 = vmatpush2.xpose.msra.mxu0 0.0
    %1629 = vmatprep.subr.mxu0 0.0
    %1630 = vmatpush2.xpose.msra.mxu0 0.0
    %1631 = vmatprep.subr.mxu0 0.0
    %1632 = vmatpush2.xpose.msra.mxu0 0.0
    %1633 = vmatprep.subr.mxu0 0.0
    %1634 = vmatpush2.xpose.msra.mxu0 0.0
    %1635 = vmatprep.subr.mxu0 0.0
    %1636 = vmatpush2.xpose.msra.mxu0 0.0
    %1637 = vmatprep.subr.mxu0 0.0
    %1638 = vmatpush2.xpose.msra.mxu0 0.0
    %1639 = vmatprep.subr.mxu0 0.0
    %1640 = vmatpush2.xpose.msra.mxu0 0.0
    %1641 = vmatprep.subr.mxu0 0.0
    %1642 = vmatpush2.xpose.msra.mxu0 0.0
    %1643 = vmatprep.subr.mxu0 0.0
    %1644 = vmatpush2.xpose.msra.mxu0 0.0
    %1645 = vmatprep.subr.mxu0 0.0
    %1646 = vmatpush2.xpose.msra.mxu0 0.0
    %1647 = vmatprep.subr.mxu0 0.0
    %1648 = vmatpush2.xpose.msra.mxu0 0.0
    %1649 = vmatprep.mubr.f32.mxu0 0.0
    %1650 = vmatmul.mubr.f32.gmra.mxu0 %v1537
    %v1651 = vpop.f32.mrf.mxu0
    %v1652 = vadd.f32 0.0, %v1651
    %v1653 = vpop.f32.mrf.mxu0
    %1654 = vmatprep.mubr.f32.mxu0 0.0
    %1655 = vmatmul.mubr.f32.gmra.mxu0 %v1538
    %v1656 = vpop.f32.mrf.mxu0
    %v1657 = vadd.f32 0.0, %v1656
    %v1658 = vpop.f32.mrf.mxu0
    %1659 = vmatprep.mubr.f32.mxu0 0.0
    %1660 = vmatmul.mubr.f32.gmra.mxu0 %v1539
    %v1661 = vpop.f32.mrf.mxu0
    %v1662 = vadd.f32 0.0, %v1661
    %v1663 = vpop.f32.mrf.mxu0
    %1664 = vmatprep.mubr.f32.mxu0 0.0
    %1665 = vmatmul.mubr.f32.gmra.mxu0 %v1540
    %v1666 = vpop.f32.mrf.mxu0
    %v1667 = vadd.f32 0.0, %v1666
    %v1668 = vpop.f32.mrf.mxu0
    %1669 = vmatprep.mubr.f32.mxu0 0.0
    %1670 = vmatmul.mubr.f32.gmra.mxu0 %v1541
    %v1671 = vpop.f32.mrf.mxu0
    %v1672 = vadd.f32 0.0, %v1671
    %v1673 = vpop.f32.mrf.mxu0
    %1674 = vmatprep.mubr.f32.mxu0 0.0
    %1675 = vmatmul.mubr.f32.gmra.mxu0 %v1542
    %v1676 = vpop.f32.mrf.mxu0
    %v1677 = vadd.f32 0.0, %v1676
    %v1678 = vpop.f32.mrf.mxu0
    %1679 = vmatprep.mubr.f32.mxu0 0.0
    %1680 = vmatmul.mubr.f32.gmra.mxu0 %v1543
    %v1681 = vpop.f32.mrf.mxu0
    %v1682 = vadd.f32 0.0, %v1681
    %v1683 = vpop.f32.mrf.mxu0
    %1684 = vmatprep.mubr.f32.mxu0 0.0
    %1685 = vmatmul.mubr.f32.gmra.mxu0 %v1544
    %v1686 = vpop.f32.mrf.mxu0
    %v1687 = vadd.f32 0.0, %v1686
    %v1688 = vpop.f32.mrf.mxu0
    %1689 = vdwg.mxu0
    %v1690 = vsel %vm1279, %v1652, -inf
    %1691 = vmax.xlane.f32.xlu0 %v1690
    %v1692 = vpop.xlane.xlu0 %1691
    %v1693 = vsel %vm1279, %v1657, -inf
    %1694 = vmax.xlane.f32.xlu0 %v1693
    %v1695 = vpop.xlane.xlu0 %1694
    %v1696 = vsel %vm1279, %v1662, -inf
    %1697 = vmax.xlane.f32.xlu0 %v1696
    %v1698 = vpop.xlane.xlu0 %1697
    %v1699 = vsel %vm1279, %v1667, -inf
    %1700 = vmax.xlane.f32.xlu0 %v1699
    %v1701 = vpop.xlane.xlu0 %1700
    %v1702 = vsel %vm1279, %v1672, -inf
    %1703 = vmax.xlane.f32.xlu0 %v1702
    %v1704 = vpop.xlane.xlu0 %1703
    %v1705 = vsel %vm1279, %v1677, -inf
    %1706 = vmax.xlane.f32.xlu0 %v1705
    %v1707 = vpop.xlane.xlu0 %1706
    %v1708 = vsel %vm1279, %v1682, -inf
    %1709 = vmax.xlane.f32.xlu0 %v1708
    %v1710 = vpop.xlane.xlu0 %1709
    %v1711 = vsel %vm1279, %v1687, -inf
    %1712 = vmax.xlane.f32.xlu0 %v1711
    %v1713 = vpop.xlane.xlu0 %1712
    %v1714 = vsub.f32 %v1652, %v1692
    %v1715 = vsub.f32 %v1657, %v1695
    %v1716 = vsub.f32 %v1662, %v1698
    %v1717 = vsub.f32 %v1667, %v1701
    %v1718 = vsub.f32 %v1672, %v1704
    %v1719 = vsub.f32 %v1677, %v1707
    %v1720 = vsub.f32 %v1682, %v1710
    %v1721 = vsub.f32 %v1687, %v1713
    %v1722 = vmul.f32 %v1714, 1.442695
    %v1723 = vpow.pop %v1722
    %v1724 = vmul.f32 %v1715, 1.442695
    %v1725 = vpow.pop %v1724
    %v1726 = vmul.f32 %v1716, 1.442695
    %v1727 = vpow.pop %v1726
    %v1728 = vmul.f32 %v1717, 1.442695
    %v1729 = vpow.pop %v1728
    %v1730 = vmul.f32 %v1718, 1.442695
    %v1731 = vpow.pop %v1730
    %v1732 = vmul.f32 %v1719, 1.442695
    %v1733 = vpow.pop %v1732
    %v1734 = vmul.f32 %v1720, 1.442695
    %v1735 = vpow.pop %v1734
    %v1736 = vmul.f32 %v1721, 1.442695
    %v1737 = vpow.pop %v1736
    %v1738 = vsel %vm1279, %v1723, 0.0
    %1739 = vadd.xlane.f32.xlu0 %v1738
    %v1740 = vpop.xlane.xlu0 %1739
    %v1741 = vsel %vm1279, %v1725, 0.0
    %1742 = vadd.xlane.f32.xlu0 %v1741
    %v1743 = vpop.xlane.xlu0 %1742
    %v1744 = vsel %vm1279, %v1727, 0.0
    %1745 = vadd.xlane.f32.xlu0 %v1744
    %v1746 = vpop.xlane.xlu0 %1745
    %v1747 = vsel %vm1279, %v1729, 0.0
    %1748 = vadd.xlane.f32.xlu0 %v1747
    %v1749 = vpop.xlane.xlu0 %1748
    %v1750 = vsel %vm1279, %v1731, 0.0
    %1751 = vadd.xlane.f32.xlu0 %v1750
    %v1752 = vpop.xlane.xlu0 %1751
    %v1753 = vsel %vm1279, %v1733, 0.0
    %1754 = vadd.xlane.f32.xlu0 %v1753
    %v1755 = vpop.xlane.xlu0 %1754
    %v1756 = vsel %vm1279, %v1735, 0.0
    %1757 = vadd.xlane.f32.xlu0 %v1756
    %v1758 = vpop.xlane.xlu0 %1757
    %v1759 = vsel %vm1279, %v1737, 0.0
    %1760 = vadd.xlane.f32.xlu0 %v1759
    %v1761 = vpop.xlane.xlu0 %1760
    %v1762 = vrcp.pop %v1740
    %v1763 = vmul.f32 %v1723, %v1762
    %v1764 = vrcp.pop %v1743
    %v1765 = vmul.f32 %v1725, %v1764
    %v1766 = vrcp.pop %v1746
    %v1767 = vmul.f32 %v1727, %v1766
    %v1768 = vrcp.pop %v1749
    %v1769 = vmul.f32 %v1729, %v1768
    %v1770 = vrcp.pop %v1752
    %v1771 = vmul.f32 %v1731, %v1770
    %v1772 = vrcp.pop %v1755
    %v1773 = vmul.f32 %v1733, %v1772
    %v1774 = vrcp.pop %v1758
    %v1775 = vmul.f32 %v1735, %v1774
    %v1776 = vrcp.pop %v1761
    %v1777 = vmul.f32 %v1737, %v1776
    %v1779 = vsel %vm1279, %v1763, 0
    %v1782 = vsel %vm1279, %v1765, 0
    %v1785 = vsel %vm1279, %v1767, 0
    %v1788 = vsel %vm1279, %v1769, 0
    %v1791 = vsel %vm1279, %v1771, 0
    %v1794 = vsel %vm1279, %v1773, 0
    %v1797 = vsel %vm1279, %v1775, 0
    %v1800 = vsel %vm1279, %v1777, 0
    %1802 = vmatprep.subr.mxu0 0.0
    %1803 = vmatpush1.msra.mxu0 0.0
    %1804 = vmatprep.subr.mxu0 0.0
    %1805 = vmatpush1.msra.mxu0 0.0
    %1806 = vmatprep.subr.mxu0 0.0
    %1807 = vmatpush1.msra.mxu0 0.0
    %1808 = vmatprep.subr.mxu0 0.0
    %1809 = vmatpush1.msra.mxu0 0.0
    %1810 = vmatprep.subr.mxu0 0.0
    %1811 = vmatpush1.msra.mxu0 0.0
    %1812 = vmatprep.subr.mxu0 0.0
    %1813 = vmatpush1.msra.mxu0 0.0
    %1814 = vmatprep.subr.mxu0 0.0
    %1815 = vmatpush1.msra.mxu0 0.0
    %1816 = vmatprep.subr.mxu0 0.0
    %1817 = vmatpush1.msra.mxu0 0.0
    %1818 = vmatprep.subr.mxu0 0.0
    %1819 = vmatpush1.msra.mxu0 %v1028
    %1820 = vmatprep.subr.mxu0 0.0
    %1821 = vmatpush1.msra.mxu0 %v1022
    %1822 = vmatprep.subr.mxu0 0.0
    %1823 = vmatpush1.msra.mxu0 %v1016
    %1824 = vmatprep.subr.mxu0 0.0
    %1825 = vmatpush1.msra.mxu0 %v1010
    %1826 = vmatprep.subr.mxu0 0.0
    %1827 = vmatpush1.msra.mxu0 %v1004
    %1828 = vmatprep.subr.mxu0 0.0
    %1829 = vmatpush1.msra.mxu0 %v998
    %1830 = vmatprep.subr.mxu0 0.0
    %1831 = vmatpush1.msra.mxu0 %v992
    %1832 = vmatprep.subr.mxu0 0.0
    %1833 = vmatpush1.msra.mxu0 %v986
    %1834 = vmatprep.subr.mxu0 0.0
    %1835 = vmatpush2.msra.mxu0 0.0
    %1836 = vmatprep.subr.mxu0 0.0
    %1837 = vmatpush2.msra.mxu0 0.0
    %1838 = vmatprep.subr.mxu0 0.0
    %1839 = vmatpush2.msra.mxu0 0.0
    %1840 = vmatprep.subr.mxu0 0.0
    %1841 = vmatpush2.msra.mxu0 0.0
    %1842 = vmatprep.subr.mxu0 0.0
    %1843 = vmatpush2.msra.mxu0 0.0
    %1844 = vmatprep.subr.mxu0 0.0
    %1845 = vmatpush2.msra.mxu0 0.0
    %1846 = vmatprep.subr.mxu0 0.0
    %1847 = vmatpush2.msra.mxu0 0.0
    %1848 = vmatprep.subr.mxu0 0.0
    %1849 = vmatpush2.msra.mxu0 0.0
    %1850 = vmatprep.subr.mxu0 0.0
    %1851 = vmatpush2.msra.mxu0 0.0
    %1852 = vmatprep.subr.mxu0 0.0
    %1853 = vmatpush2.msra.mxu0 0.0
    %1854 = vmatprep.subr.mxu0 0.0
    %1855 = vmatpush2.msra.mxu0 0.0
    %1856 = vmatprep.subr.mxu0 0.0
    %1857 = vmatpush2.msra.mxu0 0.0
    %1858 = vmatprep.subr.mxu0 0.0
    %1859 = vmatpush2.msra.mxu0 0.0
    %1860 = vmatprep.subr.mxu0 0.0
    %1861 = vmatpush2.msra.mxu0 0.0
    %1862 = vmatprep.subr.mxu0 0.0
    %1863 = vmatpush2.msra.mxu0 0.0
    %1864 = vmatprep.subr.mxu0 0.0
    %1865 = vmatpush2.msra.mxu0 0.0
    %1866 = vmatprep.mubr.f32.mxu0 0.0
    %1867 = vmatmul.mubr.f32.gmra.mxu0 %v1779
    %v1868 = vpop.f32.mrf.mxu0
    %v1869 = vadd.f32 0.0, %v1868
    %v1870 = vpop.f32.mrf.mxu0
    %1871 = vmatprep.mubr.f32.mxu0 0.0
    %1872 = vmatmul.mubr.f32.gmra.mxu0 %v1782
    %v1873 = vpop.f32.mrf.mxu0
    %v1874 = vadd.f32 0.0, %v1873
    %v1875 = vpop.f32.mrf.mxu0
    %1876 = vmatprep.mubr.f32.mxu0 0.0
    %1877 = vmatmul.mubr.f32.gmra.mxu0 %v1785
    %v1878 = vpop.f32.mrf.mxu0
    %v1879 = vadd.f32 0.0, %v1878
    %v1880 = vpop.f32.mrf.mxu0
    %1881 = vmatprep.mubr.f32.mxu0 0.0
    %1882 = vmatmul.mubr.f32.gmra.mxu0 %v1788
    %v1883 = vpop.f32.mrf.mxu0
    %v1884 = vadd.f32 0.0, %v1883
    %v1885 = vpop.f32.mrf.mxu0
    %1886 = vmatprep.mubr.f32.mxu0 0.0
    %1887 = vmatmul.mubr.f32.gmra.mxu0 %v1791
    %v1888 = vpop.f32.mrf.mxu0
    %v1889 = vadd.f32 0.0, %v1888
    %v1890 = vpop.f32.mrf.mxu0
    %1891 = vmatprep.mubr.f32.mxu0 0.0
    %1892 = vmatmul.mubr.f32.gmra.mxu0 %v1794
    %v1893 = vpop.f32.mrf.mxu0
    %v1894 = vadd.f32 0.0, %v1893
    %v1895 = vpop.f32.mrf.mxu0
    %1896 = vmatprep.mubr.f32.mxu0 0.0
    %1897 = vmatmul.mubr.f32.gmra.mxu0 %v1797
    %v1898 = vpop.f32.mrf.mxu0
    %v1899 = vadd.f32 0.0, %v1898
    %v1900 = vpop.f32.mrf.mxu0
    %1901 = vmatprep.mubr.f32.mxu0 0.0
    %1902 = vmatmul.mubr.f32.gmra.mxu0 %v1800
    %v1903 = vpop.f32.mrf.mxu0
    %v1904 = vadd.f32 0.0, %v1903
    %v1905 = vpop.f32.mrf.mxu0
    %1906 = vdwg.mxu0
    %1907 = vst [vmem:[#allocation2 + $0x8] sm:$0xff] %v1869
    %1908 = vst [vmem:[#allocation2 + $0x18] sm:$0xff] %v1874
    %1909 = vst [vmem:[#allocation2 + $0x28] sm:$0xff] %v1879
    %1910 = vst [vmem:[#allocation2 + $0x38] sm:$0xff] %v1884
    %1911 = vst [vmem:[#allocation2 + $0x48] sm:$0xff] %v1889
    %1912 = vst [vmem:[#allocation2 + $0x58] sm:$0xff] %v1894
    %1913 = vst [vmem:[#allocation2 + $0x68] sm:$0xff] %v1899
    %1914 = vst [vmem:[#allocation2 + $0x78] sm:$0xff] %v1904
    %v1915 = vmul.f32 %v710, %v1078
    %v1916 = vmul.f32 %v716, %v1079
    %v1917 = vmul.f32 %v722, %v1080
    %v1918 = vmul.f32 %v728, %v1081
    %v1919 = vmul.f32 %v734, %v1082
    %v1920 = vmul.f32 %v740, %v1083
    %v1921 = vmul.f32 %v746, %v1084
    %v1922 = vmul.f32 %v752, %v1085
    %1923 = vrot.lane.b32.xlu0 %v710, 64
    %v1924 = vpop.permute.xlu0 %1923
    %1925 = vrot.lane.b32.xlu0 %v716, 64
    %v1926 = vpop.permute.xlu0 %1925
    %1927 = vrot.lane.b32.xlu0 %v722, 64
    %v1928 = vpop.permute.xlu0 %1927
    %1929 = vrot.lane.b32.xlu0 %v728, 64
    %v1930 = vpop.permute.xlu0 %1929
    %1931 = vrot.lane.b32.xlu0 %v734, 64
    %v1932 = vpop.permute.xlu0 %1931
    %1933 = vrot.lane.b32.xlu0 %v740, 64
    %v1934 = vpop.permute.xlu0 %1933
    %1935 = vrot.lane.b32.xlu0 %v746, 64
    %v1936 = vpop.permute.xlu0 %1935
    %1937 = vrot.lane.b32.xlu0 %v752, 64
    %v1938 = vpop.permute.xlu0 %1937
    %v1939 = vmul.f32 %v1924, %v1086
    %v1940 = vmul.f32 %v1926, %v1087
    %v1941 = vmul.f32 %v1928, %v1088
    %v1942 = vmul.f32 %v1930, %v1089
    %v1943 = vmul.f32 %v1932, %v1090
    %v1944 = vmul.f32 %v1934, %v1091
    %v1945 = vmul.f32 %v1936, %v1092
    %v1946 = vmul.f32 %v1938, %v1093
    %v1947 = vadd.f32 %v1915, %v1939
    %v1948 = vadd.f32 %v1916, %v1940
    %v1949 = vadd.f32 %v1917, %v1941
    %v1950 = vadd.f32 %v1918, %v1942
    %v1951 = vadd.f32 %v1919, %v1943
    %v1952 = vadd.f32 %v1920, %v1944
    %v1953 = vadd.f32 %v1921, %v1945
    %v1954 = vadd.f32 %v1922, %v1946
    %v1955 = vmul.f32 %v871, %v1078
    %v1956 = vmul.f32 %v877, %v1079
    %v1957 = vmul.f32 %v883, %v1080
    %v1958 = vmul.f32 %v889, %v1081
    %v1959 = vmul.f32 %v895, %v1082
    %v1960 = vmul.f32 %v901, %v1083
    %v1961 = vmul.f32 %v907, %v1084
    %v1962 = vmul.f32 %v913, %v1085
    %1963 = vrot.lane.b32.xlu0 %v871, 64
    %v1964 = vpop.permute.xlu0 %1963
    %1965 = vrot.lane.b32.xlu0 %v877, 64
    %v1966 = vpop.permute.xlu0 %1965
    %1967 = vrot.lane.b32.xlu0 %v883, 64
    %v1968 = vpop.permute.xlu0 %1967
    %1969 = vrot.lane.b32.xlu0 %v889, 64
    %v1970 = vpop.permute.xlu0 %1969
    %1971 = vrot.lane.b32.xlu0 %v895, 64
    %v1972 = vpop.permute.xlu0 %1971
    %1973 = vrot.lane.b32.xlu0 %v901, 64
    %v1974 = vpop.permute.xlu0 %1973
    %1975 = vrot.lane.b32.xlu0 %v907, 64
    %v1976 = vpop.permute.xlu0 %1975
    %1977 = vrot.lane.b32.xlu0 %v913, 64
    %v1978 = vpop.permute.xlu0 %1977
    %v1979 = vmul.f32 %v1964, %v1086
    %v1980 = vmul.f32 %v1966, %v1087
    %v1981 = vmul.f32 %v1968, %v1088
    %v1982 = vmul.f32 %v1970, %v1089
    %v1983 = vmul.f32 %v1972, %v1090
    %v1984 = vmul.f32 %v1974, %v1091
    %v1985 = vmul.f32 %v1976, %v1092
    %v1986 = vmul.f32 %v1978, %v1093
    %v1987 = vadd.f32 %v1955, %v1979
    %v1988 = vadd.f32 %v1956, %v1980
    %v1989 = vadd.f32 %v1957, %v1981
    %v1990 = vadd.f32 %v1958, %v1982
    %v1991 = vadd.f32 %v1959, %v1983
    %v1992 = vadd.f32 %v1960, %v1984
    %v1993 = vadd.f32 %v1961, %v1985
    %v1994 = vadd.f32 %v1962, %v1986
    %1995 = vmatprep.subr.mxu0 0.0
    %1996 = vmatpush1.xpose.msra.mxu0 0.0
    %1997 = vmatprep.subr.mxu0 0.0
    %1998 = vmatpush1.xpose.msra.mxu0 0.0
    %1999 = vmatprep.subr.mxu0 0.0
    %2000 = vmatpush1.xpose.msra.mxu0 0.0
    %2001 = vmatprep.subr.mxu0 0.0
    %2002 = vmatpush1.xpose.msra.mxu0 0.0
    %2003 = vmatprep.subr.mxu0 0.0
    %2004 = vmatpush1.xpose.msra.mxu0 0.0
    %2005 = vmatprep.subr.mxu0 0.0
    %2006 = vmatpush1.xpose.msra.mxu0 0.0
    %2007 = vmatprep.subr.mxu0 0.0
    %2008 = vmatpush1.xpose.msra.mxu0 0.0
    %2009 = vmatprep.subr.mxu0 0.0
    %2010 = vmatpush1.xpose.msra.mxu0 0.0
    %2011 = vmatprep.subr.mxu0 0.0
    %2012 = vmatpush1.xpose.msra.mxu0 %v1994
    %2013 = vmatprep.subr.mxu0 0.0
    %2014 = vmatpush1.xpose.msra.mxu0 %v1993
    %2015 = vmatprep.subr.mxu0 0.0
    %2016 = vmatpush1.xpose.msra.mxu0 %v1992
    %2017 = vmatprep.subr.mxu0 0.0
    %2018 = vmatpush1.xpose.msra.mxu0 %v1991
    %2019 = vmatprep.subr.mxu0 0.0
    %2020 = vmatpush1.xpose.msra.mxu0 %v1990
    %2021 = vmatprep.subr.mxu0 0.0
    %2022 = vmatpush1.xpose.msra.mxu0 %v1989
    %2023 = vmatprep.subr.mxu0 0.0
    %2024 = vmatpush1.xpose.msra.mxu0 %v1988
    %2025 = vmatprep.subr.mxu0 0.0
    %2026 = vmatpush1.xpose.msra.mxu0 %v1987
    %2027 = vmatprep.subr.mxu0 0.0
    %2028 = vmatpush2.xpose.msra.mxu0 0.0
    %2029 = vmatprep.subr.mxu0 0.0
    %2030 = vmatpush2.xpose.msra.mxu0 0.0
    %2031 = vmatprep.subr.mxu0 0.0
    %2032 = vmatpush2.xpose.msra.mxu0 0.0
    %2033 = vmatprep.subr.mxu0 0.0
    %2034 = vmatpush2.xpose.msra.mxu0 0.0
    %2035 = vmatprep.subr.mxu0 0.0
    %2036 = vmatpush2.xpose.msra.mxu0 0.0
    %2037 = vmatprep.subr.mxu0 0.0
    %2038 = vmatpush2.xpose.msra.mxu0 0.0
    %2039 = vmatprep.subr.mxu0 0.0
    %2040 = vmatpush2.xpose.msra.mxu0 0.0
    %2041 = vmatprep.subr.mxu0 0.0
    %2042 = vmatpush2.xpose.msra.mxu0 0.0
    %2043 = vmatprep.subr.mxu0 0.0
    %2044 = vmatpush2.xpose.msra.mxu0 0.0
    %2045 = vmatprep.subr.mxu0 0.0
    %2046 = vmatpush2.xpose.msra.mxu0 0.0
    %2047 = vmatprep.subr.mxu0 0.0
    %2048 = vmatpush2.xpose.msra.mxu0 0.0
    %2049 = vmatprep.subr.mxu0 0.0
    %2050 = vmatpush2.xpose.msra.mxu0 0.0
    %2051 = vmatprep.subr.mxu0 0.0
    %2052 = vmatpush2.xpose.msra.mxu0 0.0
    %2053 = vmatprep.subr.mxu0 0.0
    %2054 = vmatpush2.xpose.msra.mxu0 0.0
    %2055 = vmatprep.subr.mxu0 0.0
    %2056 = vmatpush2.xpose.msra.mxu0 0.0
    %2057 = vmatprep.subr.mxu0 0.0
    %2058 = vmatpush2.xpose.msra.mxu0 0.0
    %2059 = vmatprep.mubr.f32.mxu0 0.0
    %2060 = vmatmul.mubr.f32.gmra.mxu0 %v1947
    %v2061 = vpop.f32.mrf.mxu0
    %v2062 = vadd.f32 0.0, %v2061
    %v2063 = vpop.f32.mrf.mxu0
    %2064 = vmatprep.mubr.f32.mxu0 0.0
    %2065 = vmatmul.mubr.f32.gmra.mxu0 %v1948
    %v2066 = vpop.f32.mrf.mxu0
    %v2067 = vadd.f32 0.0, %v2066
    %v2068 = vpop.f32.mrf.mxu0
    %2069 = vmatprep.mubr.f32.mxu0 0.0
    %2070 = vmatmul.mubr.f32.gmra.mxu0 %v1949
    %v2071 = vpop.f32.mrf.mxu0
    %v2072 = vadd.f32 0.0, %v2071
    %v2073 = vpop.f32.mrf.mxu0
    %2074 = vmatprep.mubr.f32.mxu0 0.0
    %2075 = vmatmul.mubr.f32.gmra.mxu0 %v1950
    %v2076 = vpop.f32.mrf.mxu0
    %v2077 = vadd.f32 0.0, %v2076
    %v2078 = vpop.f32.mrf.mxu0
    %2079 = vmatprep.mubr.f32.mxu0 0.0
    %2080 = vmatmul.mubr.f32.gmra.mxu0 %v1951
    %v2081 = vpop.f32.mrf.mxu0
    %v2082 = vadd.f32 0.0, %v2081
    %v2083 = vpop.f32.mrf.mxu0
    %2084 = vmatprep.mubr.f32.mxu0 0.0
    %2085 = vmatmul.mubr.f32.gmra.mxu0 %v1952
    %v2086 = vpop.f32.mrf.mxu0
    %v2087 = vadd.f32 0.0, %v2086
    %v2088 = vpop.f32.mrf.mxu0
    %2089 = vmatprep.mubr.f32.mxu0 0.0
    %2090 = vmatmul.mubr.f32.gmra.mxu0 %v1953
    %v2091 = vpop.f32.mrf.mxu0
    %v2092 = vadd.f32 0.0, %v2091
    %v2093 = vpop.f32.mrf.mxu0
    %2094 = vmatprep.mubr.f32.mxu0 0.0
    %2095 = vmatmul.mubr.f32.gmra.mxu0 %v1954
    %v2096 = vpop.f32.mrf.mxu0
    %v2097 = vadd.f32 0.0, %v2096
    %v2098 = vpop.f32.mrf.mxu0
    %2099 = vdwg.mxu0
    %v2100 = vsel %vm1279, %v2062, -inf
    %2101 = vmax.xlane.f32.xlu0 %v2100
    %v2102 = vpop.xlane.xlu0 %2101
    %v2103 = vsel %vm1279, %v2067, -inf
    %2104 = vmax.xlane.f32.xlu0 %v2103
    %v2105 = vpop.xlane.xlu0 %2104
    %v2106 = vsel %vm1279, %v2072, -inf
    %2107 = vmax.xlane.f32.xlu0 %v2106
    %v2108 = vpop.xlane.xlu0 %2107
    %v2109 = vsel %vm1279, %v2077, -inf
    %2110 = vmax.xlane.f32.xlu0 %v2109
    %v2111 = vpop.xlane.xlu0 %2110
    %v2112 = vsel %vm1279, %v2082, -inf
    %2113 = vmax.xlane.f32.xlu0 %v2112
    %v2114 = vpop.xlane.xlu0 %2113
    %v2115 = vsel %vm1279, %v2087, -inf
    %2116 = vmax.xlane.f32.xlu0 %v2115
    %v2117 = vpop.xlane.xlu0 %2116
    %v2118 = vsel %vm1279, %v2092, -inf
    %2119 = vmax.xlane.f32.xlu0 %v2118
    %v2120 = vpop.xlane.xlu0 %2119
    %v2121 = vsel %vm1279, %v2097, -inf
    %2122 = vmax.xlane.f32.xlu0 %v2121
    %v2123 = vpop.xlane.xlu0 %2122
    %v2124 = vsub.f32 %v2062, %v2102
    %v2125 = vsub.f32 %v2067, %v2105
    %v2126 = vsub.f32 %v2072, %v2108
    %v2127 = vsub.f32 %v2077, %v2111
    %v2128 = vsub.f32 %v2082, %v2114
    %v2129 = vsub.f32 %v2087, %v2117
    %v2130 = vsub.f32 %v2092, %v2120
    %v2131 = vsub.f32 %v2097, %v2123
    %v2132 = vmul.f32 %v2124, 1.442695
    %v2133 = vpow.pop %v2132
    %v2134 = vmul.f32 %v2125, 1.442695
    %v2135 = vpow.pop %v2134
    %v2136 = vmul.f32 %v2126, 1.442695
    %v2137 = vpow.pop %v2136
    %v2138 = vmul.f32 %v2127, 1.442695
    %v2139 = vpow.pop %v2138
    %v2140 = vmul.f32 %v2128, 1.442695
    %v2141 = vpow.pop %v2140
    %v2142 = vmul.f32 %v2129, 1.442695
    %v2143 = vpow.pop %v2142
    %v2144 = vmul.f32 %v2130, 1.442695
    %v2145 = vpow.pop %v2144
    %v2146 = vmul.f32 %v2131, 1.442695
    %v2147 = vpow.pop %v2146
    %v2148 = vsel %vm1279, %v2133, 0.0
    %2149 = vadd.xlane.f32.xlu0 %v2148
    %v2150 = vpop.xlane.xlu0 %2149
    %v2151 = vsel %vm1279, %v2135, 0.0
    %2152 = vadd.xlane.f32.xlu0 %v2151
    %v2153 = vpop.xlane.xlu0 %2152
    %v2154 = vsel %vm1279, %v2137, 0.0
    %2155 = vadd.xlane.f32.xlu0 %v2154
    %v2156 = vpop.xlane.xlu0 %2155
    %v2157 = vsel %vm1279, %v2139, 0.0
    %2158 = vadd.xlane.f32.xlu0 %v2157
    %v2159 = vpop.xlane.xlu0 %2158
    %v2160 = vsel %vm1279, %v2141, 0.0
    %2161 = vadd.xlane.f32.xlu0 %v2160
    %v2162 = vpop.xlane.xlu0 %2161
    %v2163 = vsel %vm1279, %v2143, 0.0
    %2164 = vadd.xlane.f32.xlu0 %v2163
    %v2165 = vpop.xlane.xlu0 %2164
    %v2166 = vsel %vm1279, %v2145, 0.0
    %2167 = vadd.xlane.f32.xlu0 %v2166
    %v2168 = vpop.xlane.xlu0 %2167
    %v2169 = vsel %vm1279, %v2147, 0.0
    %2170 = vadd.xlane.f32.xlu0 %v2169
    %v2171 = vpop.xlane.xlu0 %2170
    %v2172 = vrcp.pop %v2150
    %v2173 = vmul.f32 %v2133, %v2172
    %v2174 = vrcp.pop %v2153
    %v2175 = vmul.f32 %v2135, %v2174
    %v2176 = vrcp.pop %v2156
    %v2177 = vmul.f32 %v2137, %v2176
    %v2178 = vrcp.pop %v2159
    %v2179 = vmul.f32 %v2139, %v2178
    %v2180 = vrcp.pop %v2162
    %v2181 = vmul.f32 %v2141, %v2180
    %v2182 = vrcp.pop %v2165
    %v2183 = vmul.f32 %v2143, %v2182
    %v2184 = vrcp.pop %v2168
    %v2185 = vmul.f32 %v2145, %v2184
    %v2186 = vrcp.pop %v2171
    %v2187 = vmul.f32 %v2147, %v2186
    %v2189 = vsel %vm1279, %v2173, 0
    %v2192 = vsel %vm1279, %v2175, 0
    %v2195 = vsel %vm1279, %v2177, 0
    %v2198 = vsel %vm1279, %v2179, 0
    %v2201 = vsel %vm1279, %v2181, 0
    %v2204 = vsel %vm1279, %v2183, 0
    %v2207 = vsel %vm1279, %v2185, 0
    %v2210 = vsel %vm1279, %v2187, 0
    %2212 = vmatprep.subr.mxu0 0.0
    %2213 = vmatpush1.msra.mxu0 0.0
    %2214 = vmatprep.subr.mxu0 0.0
    %2215 = vmatpush1.msra.mxu0 0.0
    %2216 = vmatprep.subr.mxu0 0.0
    %2217 = vmatpush1.msra.mxu0 0.0
    %2218 = vmatprep.subr.mxu0 0.0
    %2219 = vmatpush1.msra.mxu0 0.0
    %2220 = vmatprep.subr.mxu0 0.0
    %2221 = vmatpush1.msra.mxu0 0.0
    %2222 = vmatprep.subr.mxu0 0.0
    %2223 = vmatpush1.msra.mxu0 0.0
    %2224 = vmatprep.subr.mxu0 0.0
    %2225 = vmatpush1.msra.mxu0 0.0
    %2226 = vmatprep.subr.mxu0 0.0
    %2227 = vmatpush1.msra.mxu0 0.0
    %2228 = vmatprep.subr.mxu0 0.0
    %2229 = vmatpush1.msra.mxu0 %v1074
    %2230 = vmatprep.subr.mxu0 0.0
    %2231 = vmatpush1.msra.mxu0 %v1068
    %2232 = vmatprep.subr.mxu0 0.0
    %2233 = vmatpush1.msra.mxu0 %v1062
    %2234 = vmatprep.subr.mxu0 0.0
    %2235 = vmatpush1.msra.mxu0 %v1056
    %2236 = vmatprep.subr.mxu0 0.0
    %2237 = vmatpush1.msra.mxu0 %v1050
    %2238 = vmatprep.subr.mxu0 0.0
    %2239 = vmatpush1.msra.mxu0 %v1044
    %2240 = vmatprep.subr.mxu0 0.0
    %2241 = vmatpush1.msra.mxu0 %v1038
    %2242 = vmatprep.subr.mxu0 0.0
    %2243 = vmatpush1.msra.mxu0 %v1032
    %2244 = vmatprep.subr.mxu0 0.0
    %2245 = vmatpush2.msra.mxu0 0.0
    %2246 = vmatprep.subr.mxu0 0.0
    %2247 = vmatpush2.msra.mxu0 0.0
    %2248 = vmatprep.subr.mxu0 0.0
    %2249 = vmatpush2.msra.mxu0 0.0
    %2250 = vmatprep.subr.mxu0 0.0
    %2251 = vmatpush2.msra.mxu0 0.0
    %2252 = vmatprep.subr.mxu0 0.0
    %2253 = vmatpush2.msra.mxu0 0.0
    %2254 = vmatprep.subr.mxu0 0.0
    %2255 = vmatpush2.msra.mxu0 0.0
    %2256 = vmatprep.subr.mxu0 0.0
    %2257 = vmatpush2.msra.mxu0 0.0
    %2258 = vmatprep.subr.mxu0 0.0
    %2259 = vmatpush2.msra.mxu0 0.0
    %2260 = vmatprep.subr.mxu0 0.0
    %2261 = vmatpush2.msra.mxu0 0.0
    %2262 = vmatprep.subr.mxu0 0.0
    %2263 = vmatpush2.msra.mxu0 0.0
    %2264 = vmatprep.subr.mxu0 0.0
    %2265 = vmatpush2.msra.mxu0 0.0
    %2266 = vmatprep.subr.mxu0 0.0
    %2267 = vmatpush2.msra.mxu0 0.0
    %2268 = vmatprep.subr.mxu0 0.0
    %2269 = vmatpush2.msra.mxu0 0.0
    %2270 = vmatprep.subr.mxu0 0.0
    %2271 = vmatpush2.msra.mxu0 0.0
    %2272 = vmatprep.subr.mxu0 0.0
    %2273 = vmatpush2.msra.mxu0 0.0
    %2274 = vmatprep.subr.mxu0 0.0
    %2275 = vmatpush2.msra.mxu0 0.0
    %2276 = vmatprep.mubr.f32.mxu0 0.0
    %2277 = vmatmul.mubr.f32.gmra.mxu0 %v2189
    %v2278 = vpop.f32.mrf.mxu0
    %v2279 = vadd.f32 0.0, %v2278
    %v2280 = vpop.f32.mrf.mxu0
    %2281 = vmatprep.mubr.f32.mxu0 0.0
    %2282 = vmatmul.mubr.f32.gmra.mxu0 %v2192
    %v2283 = vpop.f32.mrf.mxu0
    %v2284 = vadd.f32 0.0, %v2283
    %v2285 = vpop.f32.mrf.mxu0
    %2286 = vmatprep.mubr.f32.mxu0 0.0
    %2287 = vmatmul.mubr.f32.gmra.mxu0 %v2195
    %v2288 = vpop.f32.mrf.mxu0
    %v2289 = vadd.f32 0.0, %v2288
    %v2290 = vpop.f32.mrf.mxu0
    %2291 = vmatprep.mubr.f32.mxu0 0.0
    %2292 = vmatmul.mubr.f32.gmra.mxu0 %v2198
    %v2293 = vpop.f32.mrf.mxu0
    %v2294 = vadd.f32 0.0, %v2293
    %v2295 = vpop.f32.mrf.mxu0
    %2296 = vmatprep.mubr.f32.mxu0 0.0
    %2297 = vmatmul.mubr.f32.gmra.mxu0 %v2201
    %v2298 = vpop.f32.mrf.mxu0
    %v2299 = vadd.f32 0.0, %v2298
    %v2300 = vpop.f32.mrf.mxu0
    %2301 = vmatprep.mubr.f32.mxu0 0.0
    %2302 = vmatmul.mubr.f32.gmra.mxu0 %v2204
    %v2303 = vpop.f32.mrf.mxu0
    %v2304 = vadd.f32 0.0, %v2303
    %v2305 = vpop.f32.mrf.mxu0
    %2306 = vmatprep.mubr.f32.mxu0 0.0
    %2307 = vmatmul.mubr.f32.gmra.mxu0 %v2207
    %v2308 = vpop.f32.mrf.mxu0
    %v2309 = vadd.f32 0.0, %v2308
    %v2310 = vpop.f32.mrf.mxu0
    %2311 = vmatprep.mubr.f32.mxu0 0.0
    %2312 = vmatmul.mubr.f32.gmra.mxu0 %v2210
    %v2313 = vpop.f32.mrf.mxu0
    %v2314 = vadd.f32 0.0, %v2313
    %v2315 = vpop.f32.mrf.mxu0
    %2316 = vdwg.mxu0
    %2317 = vst [vmem:[#allocation2 + $0x80] sm:$0xff] %v2279
    %2318 = vst [vmem:[#allocation2 + $0x90] sm:$0xff] %v2284
    %2319 = vst [vmem:[#allocation2 + $0xa0] sm:$0xff] %v2289
    %2320 = vst [vmem:[#allocation2 + $0xb0] sm:$0xff] %v2294
    %2321 = vst [vmem:[#allocation2 + $0xc0] sm:$0xff] %v2299
    %2322 = vst [vmem:[#allocation2 + $0xd0] sm:$0xff] %v2304
    %2323 = vst [vmem:[#allocation2 + $0xe0] sm:$0xff] %v2309
    %2324 = vst [vmem:[#allocation2 + $0xf0] sm:$0xff] %v2314
    %v2325 = vmul.f32 %v712, %v1078
    %v2326 = vmul.f32 %v718, %v1079
    %v2327 = vmul.f32 %v724, %v1080
    %v2328 = vmul.f32 %v730, %v1081
    %v2329 = vmul.f32 %v736, %v1082
    %v2330 = vmul.f32 %v742, %v1083
    %v2331 = vmul.f32 %v748, %v1084
    %v2332 = vmul.f32 %v754, %v1085
    %2333 = vrot.lane.b32.xlu0 %v712, 64
    %v2334 = vpop.permute.xlu0 %2333
    %2335 = vrot.lane.b32.xlu0 %v718, 64
    %v2336 = vpop.permute.xlu0 %2335
    %2337 = vrot.lane.b32.xlu0 %v724, 64
    %v2338 = vpop.permute.xlu0 %2337
    %2339 = vrot.lane.b32.xlu0 %v730, 64
    %v2340 = vpop.permute.xlu0 %2339
    %2341 = vrot.lane.b32.xlu0 %v736, 64
    %v2342 = vpop.permute.xlu0 %2341
    %2343 = vrot.lane.b32.xlu0 %v742, 64
    %v2344 = vpop.permute.xlu0 %2343
    %2345 = vrot.lane.b32.xlu0 %v748, 64
    %v2346 = vpop.permute.xlu0 %2345
    %2347 = vrot.lane.b32.xlu0 %v754, 64
    %v2348 = vpop.permute.xlu0 %2347
    %v2349 = vmul.f32 %v2334, %v1086
    %v2350 = vmul.f32 %v2336, %v1087
    %v2351 = vmul.f32 %v2338, %v1088
    %v2352 = vmul.f32 %v2340, %v1089
    %v2353 = vmul.f32 %v2342, %v1090
    %v2354 = vmul.f32 %v2344, %v1091
    %v2355 = vmul.f32 %v2346, %v1092
    %v2356 = vmul.f32 %v2348, %v1093
    %v2357 = vadd.f32 %v2325, %v2349
    %v2358 = vadd.f32 %v2326, %v2350
    %v2359 = vadd.f32 %v2327, %v2351
    %v2360 = vadd.f32 %v2328, %v2352
    %v2361 = vadd.f32 %v2329, %v2353
    %v2362 = vadd.f32 %v2330, %v2354
    %v2363 = vadd.f32 %v2331, %v2355
    %v2364 = vadd.f32 %v2332, %v2356
    %v2365 = vmul.f32 %v873, %v1078
    %v2366 = vmul.f32 %v879, %v1079
    %v2367 = vmul.f32 %v885, %v1080
    %v2368 = vmul.f32 %v891, %v1081
    %v2369 = vmul.f32 %v897, %v1082
    %v2370 = vmul.f32 %v903, %v1083
    %v2371 = vmul.f32 %v909, %v1084
    %v2372 = vmul.f32 %v915, %v1085
    %2373 = vrot.lane.b32.xlu0 %v873, 64
    %v2374 = vpop.permute.xlu0 %2373
    %2375 = vrot.lane.b32.xlu0 %v879, 64
    %v2376 = vpop.permute.xlu0 %2375
    %2377 = vrot.lane.b32.xlu0 %v885, 64
    %v2378 = vpop.permute.xlu0 %2377
    %2379 = vrot.lane.b32.xlu0 %v891, 64
    %v2380 = vpop.permute.xlu0 %2379
    %2381 = vrot.lane.b32.xlu0 %v897, 64
    %v2382 = vpop.permute.xlu0 %2381
    %2383 = vrot.lane.b32.xlu0 %v903, 64
    %v2384 = vpop.permute.xlu0 %2383
    %2385 = vrot.lane.b32.xlu0 %v909, 64
    %v2386 = vpop.permute.xlu0 %2385
    %2387 = vrot.lane.b32.xlu0 %v915, 64
    %v2388 = vpop.permute.xlu0 %2387
    %v2389 = vmul.f32 %v2374, %v1086
    %v2390 = vmul.f32 %v2376, %v1087
    %v2391 = vmul.f32 %v2378, %v1088
    %v2392 = vmul.f32 %v2380, %v1089
    %v2393 = vmul.f32 %v2382, %v1090
    %v2394 = vmul.f32 %v2384, %v1091
    %v2395 = vmul.f32 %v2386, %v1092
    %v2396 = vmul.f32 %v2388, %v1093
    %v2397 = vadd.f32 %v2365, %v2389
    %v2398 = vadd.f32 %v2366, %v2390
    %v2399 = vadd.f32 %v2367, %v2391
    %v2400 = vadd.f32 %v2368, %v2392
    %v2401 = vadd.f32 %v2369, %v2393
    %v2402 = vadd.f32 %v2370, %v2394
    %v2403 = vadd.f32 %v2371, %v2395
    %v2404 = vadd.f32 %v2372, %v2396
    %2405 = vmatprep.subr.mxu0 0.0
    %2406 = vmatpush1.xpose.msra.mxu0 0.0
    %2407 = vmatprep.subr.mxu0 0.0
    %2408 = vmatpush1.xpose.msra.mxu0 0.0
    %2409 = vmatprep.subr.mxu0 0.0
    %2410 = vmatpush1.xpose.msra.mxu0 0.0
    %2411 = vmatprep.subr.mxu0 0.0
    %2412 = vmatpush1.xpose.msra.mxu0 0.0
    %2413 = vmatprep.subr.mxu0 0.0
    %2414 = vmatpush1.xpose.msra.mxu0 0.0
    %2415 = vmatprep.subr.mxu0 0.0
    %2416 = vmatpush1.xpose.msra.mxu0 0.0
    %2417 = vmatprep.subr.mxu0 0.0
    %2418 = vmatpush1.xpose.msra.mxu0 0.0
    %2419 = vmatprep.subr.mxu0 0.0
    %2420 = vmatpush1.xpose.msra.mxu0 0.0
    %2421 = vmatprep.subr.mxu0 0.0
    %2422 = vmatpush1.xpose.msra.mxu0 %v2404
    %2423 = vmatprep.subr.mxu0 0.0
    %2424 = vmatpush1.xpose.msra.mxu0 %v2403
    %2425 = vmatprep.subr.mxu0 0.0
    %2426 = vmatpush1.xpose.msra.mxu0 %v2402
    %2427 = vmatprep.subr.mxu0 0.0
    %2428 = vmatpush1.xpose.msra.mxu0 %v2401
    %2429 = vmatprep.subr.mxu0 0.0
    %2430 = vmatpush1.xpose.msra.mxu0 %v2400
    %2431 = vmatprep.subr.mxu0 0.0
    %2432 = vmatpush1.xpose.msra.mxu0 %v2399
    %2433 = vmatprep.subr.mxu0 0.0
    %2434 = vmatpush1.xpose.msra.mxu0 %v2398
    %2435 = vmatprep.subr.mxu0 0.0
    %2436 = vmatpush1.xpose.msra.mxu0 %v2397
    %2437 = vmatprep.subr.mxu0 0.0
    %2438 = vmatpush2.xpose.msra.mxu0 0.0
    %2439 = vmatprep.subr.mxu0 0.0
    %2440 = vmatpush2.xpose.msra.mxu0 0.0
    %2441 = vmatprep.subr.mxu0 0.0
    %2442 = vmatpush2.xpose.msra.mxu0 0.0
    %2443 = vmatprep.subr.mxu0 0.0
    %2444 = vmatpush2.xpose.msra.mxu0 0.0
    %2445 = vmatprep.subr.mxu0 0.0
    %2446 = vmatpush2.xpose.msra.mxu0 0.0
    %2447 = vmatprep.subr.mxu0 0.0
    %2448 = vmatpush2.xpose.msra.mxu0 0.0
    %2449 = vmatprep.subr.mxu0 0.0
    %2450 = vmatpush2.xpose.msra.mxu0 0.0
    %2451 = vmatprep.subr.mxu0 0.0
    %2452 = vmatpush2.xpose.msra.mxu0 0.0
    %2453 = vmatprep.subr.mxu0 0.0
    %2454 = vmatpush2.xpose.msra.mxu0 0.0
    %2455 = vmatprep.subr.mxu0 0.0
    %2456 = vmatpush2.xpose.msra.mxu0 0.0
    %2457 = vmatprep.subr.mxu0 0.0
    %2458 = vmatpush2.xpose.msra.mxu0 0.0
    %2459 = vmatprep.subr.mxu0 0.0
    %2460 = vmatpush2.xpose.msra.mxu0 0.0
    %2461 = vmatprep.subr.mxu0 0.0
    %2462 = vmatpush2.xpose.msra.mxu0 0.0
    %2463 = vmatprep.subr.mxu0 0.0
    %2464 = vmatpush2.xpose.msra.mxu0 0.0
    %2465 = vmatprep.subr.mxu0 0.0
    %2466 = vmatpush2.xpose.msra.mxu0 0.0
    %2467 = vmatprep.subr.mxu0 0.0
    %2468 = vmatpush2.xpose.msra.mxu0 0.0
    %2469 = vmatprep.mubr.f32.mxu0 0.0
    %2470 = vmatmul.mubr.f32.gmra.mxu0 %v2357
    %v2471 = vpop.f32.mrf.mxu0
    %v2472 = vadd.f32 0.0, %v2471
    %v2473 = vpop.f32.mrf.mxu0
    %2474 = vmatprep.mubr.f32.mxu0 0.0
    %2475 = vmatmul.mubr.f32.gmra.mxu0 %v2358
    %v2476 = vpop.f32.mrf.mxu0
    %v2477 = vadd.f32 0.0, %v2476
    %v2478 = vpop.f32.mrf.mxu0
    %2479 = vmatprep.mubr.f32.mxu0 0.0
    %2480 = vmatmul.mubr.f32.gmra.mxu0 %v2359
    %v2481 = vpop.f32.mrf.mxu0
    %v2482 = vadd.f32 0.0, %v2481
    %v2483 = vpop.f32.mrf.mxu0
    %2484 = vmatprep.mubr.f32.mxu0 0.0
    %2485 = vmatmul.mubr.f32.gmra.mxu0 %v2360
    %v2486 = vpop.f32.mrf.mxu0
    %v2487 = vadd.f32 0.0, %v2486
    %v2488 = vpop.f32.mrf.mxu0
    %2489 = vmatprep.mubr.f32.mxu0 0.0
    %2490 = vmatmul.mubr.f32.gmra.mxu0 %v2361
    %v2491 = vpop.f32.mrf.mxu0
    %v2492 = vadd.f32 0.0, %v2491
    %v2493 = vpop.f32.mrf.mxu0
    %2494 = vmatprep.mubr.f32.mxu0 0.0
    %2495 = vmatmul.mubr.f32.gmra.mxu0 %v2362
    %v2496 = vpop.f32.mrf.mxu0
    %v2497 = vadd.f32 0.0, %v2496
    %v2498 = vpop.f32.mrf.mxu0
    %2499 = vmatprep.mubr.f32.mxu0 0.0
    %2500 = vmatmul.mubr.f32.gmra.mxu0 %v2363
    %v2501 = vpop.f32.mrf.mxu0
    %v2502 = vadd.f32 0.0, %v2501
    %v2503 = vpop.f32.mrf.mxu0
    %2504 = vmatprep.mubr.f32.mxu0 0.0
    %2505 = vmatmul.mubr.f32.gmra.mxu0 %v2364
    %v2506 = vpop.f32.mrf.mxu0
    %v2507 = vadd.f32 0.0, %v2506
    %v2508 = vpop.f32.mrf.mxu0
    %2509 = vdwg.mxu0
    %v2510 = vsel %vm1279, %v2472, -inf
    %2511 = vmax.xlane.f32.xlu0 %v2510
    %v2512 = vpop.xlane.xlu0 %2511
    %v2513 = vsel %vm1279, %v2477, -inf
    %2514 = vmax.xlane.f32.xlu0 %v2513
    %v2515 = vpop.xlane.xlu0 %2514
    %v2516 = vsel %vm1279, %v2482, -inf
    %2517 = vmax.xlane.f32.xlu0 %v2516
    %v2518 = vpop.xlane.xlu0 %2517
    %v2519 = vsel %vm1279, %v2487, -inf
    %2520 = vmax.xlane.f32.xlu0 %v2519
    %v2521 = vpop.xlane.xlu0 %2520
    %v2522 = vsel %vm1279, %v2492, -inf
    %2523 = vmax.xlane.f32.xlu0 %v2522
    %v2524 = vpop.xlane.xlu0 %2523
    %v2525 = vsel %vm1279, %v2497, -inf
    %2526 = vmax.xlane.f32.xlu0 %v2525
    %v2527 = vpop.xlane.xlu0 %2526
    %v2528 = vsel %vm1279, %v2502, -inf
    %2529 = vmax.xlane.f32.xlu0 %v2528
    %v2530 = vpop.xlane.xlu0 %2529
    %v2531 = vsel %vm1279, %v2507, -inf
    %2532 = vmax.xlane.f32.xlu0 %v2531
    %v2533 = vpop.xlane.xlu0 %2532
    %v2534 = vsub.f32 %v2472, %v2512
    %v2535 = vsub.f32 %v2477, %v2515
    %v2536 = vsub.f32 %v2482, %v2518
    %v2537 = vsub.f32 %v2487, %v2521
    %v2538 = vsub.f32 %v2492, %v2524
    %v2539 = vsub.f32 %v2497, %v2527
    %v2540 = vsub.f32 %v2502, %v2530
    %v2541 = vsub.f32 %v2507, %v2533
    %v2542 = vmul.f32 %v2534, 1.442695
    %v2543 = vpow.pop %v2542
    %v2544 = vmul.f32 %v2535, 1.442695
    %v2545 = vpow.pop %v2544
    %v2546 = vmul.f32 %v2536, 1.442695
    %v2547 = vpow.pop %v2546
    %v2548 = vmul.f32 %v2537, 1.442695
    %v2549 = vpow.pop %v2548
    %v2550 = vmul.f32 %v2538, 1.442695
    %v2551 = vpow.pop %v2550
    %v2552 = vmul.f32 %v2539, 1.442695
    %v2553 = vpow.pop %v2552
    %v2554 = vmul.f32 %v2540, 1.442695
    %v2555 = vpow.pop %v2554
    %v2556 = vmul.f32 %v2541, 1.442695
    %v2557 = vpow.pop %v2556
    %v2558 = vsel %vm1279, %v2543, 0.0
    %2559 = vadd.xlane.f32.xlu0 %v2558
    %v2560 = vpop.xlane.xlu0 %2559
    %v2561 = vsel %vm1279, %v2545, 0.0
    %2562 = vadd.xlane.f32.xlu0 %v2561
    %v2563 = vpop.xlane.xlu0 %2562
    %v2564 = vsel %vm1279, %v2547, 0.0
    %2565 = vadd.xlane.f32.xlu0 %v2564
    %v2566 = vpop.xlane.xlu0 %2565
    %v2567 = vsel %vm1279, %v2549, 0.0
    %2568 = vadd.xlane.f32.xlu0 %v2567
    %v2569 = vpop.xlane.xlu0 %2568
    %v2570 = vsel %vm1279, %v2551, 0.0
    %2571 = vadd.xlane.f32.xlu0 %v2570
    %v2572 = vpop.xlane.xlu0 %2571
    %v2573 = vsel %vm1279, %v2553, 0.0
    %2574 = vadd.xlane.f32.xlu0 %v2573
    %v2575 = vpop.xlane.xlu0 %2574
    %v2576 = vsel %vm1279, %v2555, 0.0
    %2577 = vadd.xlane.f32.xlu0 %v2576
    %v2578 = vpop.xlane.xlu0 %2577
    %v2579 = vsel %vm1279, %v2557, 0.0
    %2580 = vadd.xlane.f32.xlu0 %v2579
    %v2581 = vpop.xlane.xlu0 %2580
    %v2582 = vrcp.pop %v2560
    %v2583 = vmul.f32 %v2543, %v2582
    %v2584 = vrcp.pop %v2563
    %v2585 = vmul.f32 %v2545, %v2584
    %v2586 = vrcp.pop %v2566
    %v2587 = vmul.f32 %v2547, %v2586
    %v2588 = vrcp.pop %v2569
    %v2589 = vmul.f32 %v2549, %v2588
    %v2590 = vrcp.pop %v2572
    %v2591 = vmul.f32 %v2551, %v2590
    %v2592 = vrcp.pop %v2575
    %v2593 = vmul.f32 %v2553, %v2592
    %v2594 = vrcp.pop %v2578
    %v2595 = vmul.f32 %v2555, %v2594
    %v2596 = vrcp.pop %v2581
    %v2597 = vmul.f32 %v2557, %v2596
    %v2599 = vsel %vm1279, %v2583, 0
    %v2602 = vsel %vm1279, %v2585, 0
    %v2605 = vsel %vm1279, %v2587, 0
    %v2608 = vsel %vm1279, %v2589, 0
    %v2611 = vsel %vm1279, %v2591, 0
    %v2614 = vsel %vm1279, %v2593, 0
    %v2617 = vsel %vm1279, %v2595, 0
    %v2620 = vsel %vm1279, %v2597, 0
    %2622 = vmatprep.subr.mxu0 0.0
    %2623 = vmatpush1.msra.mxu0 0.0
    %2624 = vmatprep.subr.mxu0 0.0
    %2625 = vmatpush1.msra.mxu0 0.0
    %2626 = vmatprep.subr.mxu0 0.0
    %2627 = vmatpush1.msra.mxu0 0.0
    %2628 = vmatprep.subr.mxu0 0.0
    %2629 = vmatpush1.msra.mxu0 0.0
    %2630 = vmatprep.subr.mxu0 0.0
    %2631 = vmatpush1.msra.mxu0 0.0
    %2632 = vmatprep.subr.mxu0 0.0
    %2633 = vmatpush1.msra.mxu0 0.0
    %2634 = vmatprep.subr.mxu0 0.0
    %2635 = vmatpush1.msra.mxu0 0.0
    %2636 = vmatprep.subr.mxu0 0.0
    %2637 = vmatpush1.msra.mxu0 0.0
    %2638 = vmatprep.subr.mxu0 0.0
    %2639 = vmatpush1.msra.mxu0 %v1076
    %2640 = vmatprep.subr.mxu0 0.0
    %2641 = vmatpush1.msra.mxu0 %v1070
    %2642 = vmatprep.subr.mxu0 0.0
    %2643 = vmatpush1.msra.mxu0 %v1064
    %2644 = vmatprep.subr.mxu0 0.0
    %2645 = vmatpush1.msra.mxu0 %v1058
    %2646 = vmatprep.subr.mxu0 0.0
    %2647 = vmatpush1.msra.mxu0 %v1052
    %2648 = vmatprep.subr.mxu0 0.0
    %2649 = vmatpush1.msra.mxu0 %v1046
    %2650 = vmatprep.subr.mxu0 0.0
    %2651 = vmatpush1.msra.mxu0 %v1040
    %2652 = vmatprep.subr.mxu0 0.0
    %2653 = vmatpush1.msra.mxu0 %v1034
    %2654 = vmatprep.subr.mxu0 0.0
    %2655 = vmatpush2.msra.mxu0 0.0
    %2656 = vmatprep.subr.mxu0 0.0
    %2657 = vmatpush2.msra.mxu0 0.0
    %2658 = vmatprep.subr.mxu0 0.0
    %2659 = vmatpush2.msra.mxu0 0.0
    %2660 = vmatprep.subr.mxu0 0.0
    %2661 = vmatpush2.msra.mxu0 0.0
    %2662 = vmatprep.subr.mxu0 0.0
    %2663 = vmatpush2.msra.mxu0 0.0
    %2664 = vmatprep.subr.mxu0 0.0
    %2665 = vmatpush2.msra.mxu0 0.0
    %2666 = vmatprep.subr.mxu0 0.0
    %2667 = vmatpush2.msra.mxu0 0.0
    %2668 = vmatprep.subr.mxu0 0.0
    %2669 = vmatpush2.msra.mxu0 0.0
    %2670 = vmatprep.subr.mxu0 0.0
    %2671 = vmatpush2.msra.mxu0 0.0
    %2672 = vmatprep.subr.mxu0 0.0
    %2673 = vmatpush2.msra.mxu0 0.0
    %2674 = vmatprep.subr.mxu0 0.0
    %2675 = vmatpush2.msra.mxu0 0.0
    %2676 = vmatprep.subr.mxu0 0.0
    %2677 = vmatpush2.msra.mxu0 0.0
    %2678 = vmatprep.subr.mxu0 0.0
    %2679 = vmatpush2.msra.mxu0 0.0
    %2680 = vmatprep.subr.mxu0 0.0
    %2681 = vmatpush2.msra.mxu0 0.0
    %2682 = vmatprep.subr.mxu0 0.0
    %2683 = vmatpush2.msra.mxu0 0.0
    %2684 = vmatprep.subr.mxu0 0.0
    %2685 = vmatpush2.msra.mxu0 0.0
    %2686 = vmatprep.mubr.f32.mxu0 0.0
    %2687 = vmatmul.mubr.f32.gmra.mxu0 %v2599
    %v2688 = vpop.f32.mrf.mxu0
    %v2689 = vadd.f32 0.0, %v2688
    %v2690 = vpop.f32.mrf.mxu0
    %2691 = vmatprep.mubr.f32.mxu0 0.0
    %2692 = vmatmul.mubr.f32.gmra.mxu0 %v2602
    %v2693 = vpop.f32.mrf.mxu0
    %v2694 = vadd.f32 0.0, %v2693
    %v2695 = vpop.f32.mrf.mxu0
    %2696 = vmatprep.mubr.f32.mxu0 0.0
    %2697 = vmatmul.mubr.f32.gmra.mxu0 %v2605
    %v2698 = vpop.f32.mrf.mxu0
    %v2699 = vadd.f32 0.0, %v2698
    %v2700 = vpop.f32.mrf.mxu0
    %2701 = vmatprep.mubr.f32.mxu0 0.0
    %2702 = vmatmul.mubr.f32.gmra.mxu0 %v2608
    %v2703 = vpop.f32.mrf.mxu0
    %v2704 = vadd.f32 0.0, %v2703
    %v2705 = vpop.f32.mrf.mxu0
    %2706 = vmatprep.mubr.f32.mxu0 0.0
    %2707 = vmatmul.mubr.f32.gmra.mxu0 %v2611
    %v2708 = vpop.f32.mrf.mxu0
    %v2709 = vadd.f32 0.0, %v2708
    %v2710 = vpop.f32.mrf.mxu0
    %2711 = vmatprep.mubr.f32.mxu0 0.0
    %2712 = vmatmul.mubr.f32.gmra.mxu0 %v2614
    %v2713 = vpop.f32.mrf.mxu0
    %v2714 = vadd.f32 0.0, %v2713
    %v2715 = vpop.f32.mrf.mxu0
    %2716 = vmatprep.mubr.f32.mxu0 0.0
    %2717 = vmatmul.mubr.f32.gmra.mxu0 %v2617
    %v2718 = vpop.f32.mrf.mxu0
    %v2719 = vadd.f32 0.0, %v2718
    %v2720 = vpop.f32.mrf.mxu0
    %2721 = vmatprep.mubr.f32.mxu0 0.0
    %2722 = vmatmul.mubr.f32.gmra.mxu0 %v2620
    %v2723 = vpop.f32.mrf.mxu0
    %v2724 = vadd.f32 0.0, %v2723
    %v2725 = vpop.f32.mrf.mxu0
    %2726 = vdwg.mxu0
    %2727 = vst [vmem:[#allocation2 + $0x88] sm:$0xff] %v2689
    %2728 = vst [vmem:[#allocation2 + $0x98] sm:$0xff] %v2694
    %2729 = vst [vmem:[#allocation2 + $0xa8] sm:$0xff] %v2699
    %2730 = vst [vmem:[#allocation2 + $0xb8] sm:$0xff] %v2704
    %2731 = vst [vmem:[#allocation2 + $0xc8] sm:$0xff] %v2709
    %2732 = vst [vmem:[#allocation2 + $0xd8] sm:$0xff] %v2714
    %2733 = vst [vmem:[#allocation2 + $0xe8] sm:$0xff] %v2719
    %2734 = vst [vmem:[#allocation2 + $0xf8] sm:$0xff] %v2724
    %v2735 = vld [vmem:[#allocation2] sm:$0xff]
    %v2736 = vld [vmem:[#allocation2 + $0x8] sm:$0xff]
    %v2737 = vld [vmem:[#allocation2 + $0x10] sm:$0xff]
    %v2738 = vld [vmem:[#allocation2 + $0x18] sm:$0xff]
    %v2739 = vld [vmem:[#allocation2 + $0x20] sm:$0xff]
    %v2740 = vld [vmem:[#allocation2 + $0x28] sm:$0xff]
    %v2741 = vld [vmem:[#allocation2 + $0x30] sm:$0xff]
    %v2742 = vld [vmem:[#allocation2 + $0x38] sm:$0xff]
    %v2743 = vld [vmem:[#allocation2 + $0x40] sm:$0xff]
    %v2744 = vld [vmem:[#allocation2 + $0x48] sm:$0xff]
    %v2745 = vld [vmem:[#allocation2 + $0x50] sm:$0xff]
    %v2746 = vld [vmem:[#allocation2 + $0x58] sm:$0xff]
    %v2747 = vld [vmem:[#allocation2 + $0x60] sm:$0xff]
    %v2748 = vld [vmem:[#allocation2 + $0x68] sm:$0xff]
    %v2749 = vld [vmem:[#allocation2 + $0x70] sm:$0xff]
    %v2750 = vld [vmem:[#allocation2 + $0x78] sm:$0xff]
    %v2751 = vld [vmem:[#allocation2 + $0x80] sm:$0xff]
    %v2752 = vld [vmem:[#allocation2 + $0x88] sm:$0xff]
    %v2753 = vld [vmem:[#allocation2 + $0x90] sm:$0xff]
    %v2754 = vld [vmem:[#allocation2 + $0x98] sm:$0xff]
    %v2755 = vld [vmem:[#allocation2 + $0xa0] sm:$0xff]
    %v2756 = vld [vmem:[#allocation2 + $0xa8] sm:$0xff]
    %v2757 = vld [vmem:[#allocation2 + $0xb0] sm:$0xff]
    %v2758 = vld [vmem:[#allocation2 + $0xb8] sm:$0xff]
    %v2759 = vld [vmem:[#allocation2 + $0xc0] sm:$0xff]
    %v2760 = vld [vmem:[#allocation2 + $0xc8] sm:$0xff]
    %v2761 = vld [vmem:[#allocation2 + $0xd0] sm:$0xff]
    %v2762 = vld [vmem:[#allocation2 + $0xd8] sm:$0xff]
    %v2763 = vld [vmem:[#allocation2 + $0xe0] sm:$0xff]
    %v2764 = vld [vmem:[#allocation2 + $0xe8] sm:$0xff]
    %v2765 = vld [vmem:[#allocation2 + $0xf0] sm:$0xff]
    %v2766 = vld [vmem:[#allocation2 + $0xf8] sm:$0xff]
    %v2767 = vld [vmem:[#allocation11] sm:$0xff]
    %v2768 = vld [vmem:[#allocation11 + $0x8] sm:$0xff]
    %v2769 = vld [vmem:[#allocation11 + $0x10] sm:$0xff]
    %v2770 = vld [vmem:[#allocation11 + $0x18] sm:$0xff]
    %v2771 = vld [vmem:[#allocation11 + $0x20] sm:$0xff]
    %v2772 = vld [vmem:[#allocation11 + $0x28] sm:$0xff]
    %v2773 = vld [vmem:[#allocation11 + $0x30] sm:$0xff]
    %v2774 = vld [vmem:[#allocation11 + $0x38] sm:$0xff]
    %v2775 = vld [vmem:[#allocation11 + $0x40] sm:$0xff]
    %v2776 = vld [vmem:[#allocation11 + $0x48] sm:$0xff]
    %v2777 = vld [vmem:[#allocation11 + $0x50] sm:$0xff]
    %v2778 = vld [vmem:[#allocation11 + $0x58] sm:$0xff]
    %v2779 = vld [vmem:[#allocation11 + $0x60] sm:$0xff]
    %v2780 = vld [vmem:[#allocation11 + $0x68] sm:$0xff]
    %v2781 = vld [vmem:[#allocation11 + $0x70] sm:$0xff]
    %v2782 = vld [vmem:[#allocation11 + $0x78] sm:$0xff]
    %v2783 = vld [vmem:[#allocation11 + $0x80] sm:$0xff]
    %v2784 = vld [vmem:[#allocation11 + $0x88] sm:$0xff]
    %v2785 = vld [vmem:[#allocation11 + $0x90] sm:$0xff]
    %v2786 = vld [vmem:[#allocation11 + $0x98] sm:$0xff]
    %v2787 = vld [vmem:[#allocation11 + $0xa0] sm:$0xff]
    %v2788 = vld [vmem:[#allocation11 + $0xa8] sm:$0xff]
    %v2789 = vld [vmem:[#allocation11 + $0xb0] sm:$0xff]
    %v2790 = vld [vmem:[#allocation11 + $0xb8] sm:$0xff]
    %v2791 = vld [vmem:[#allocation11 + $0xc0] sm:$0xff]
    %v2792 = vld [vmem:[#allocation11 + $0xc8] sm:$0xff]
    %v2793 = vld [vmem:[#allocation11 + $0xd0] sm:$0xff]
    %v2794 = vld [vmem:[#allocation11 + $0xd8] sm:$0xff]
    %v2795 = vld [vmem:[#allocation11 + $0xe0] sm:$0xff]
    %v2796 = vld [vmem:[#allocation11 + $0xe8] sm:$0xff]
    %v2797 = vld [vmem:[#allocation11 + $0xf0] sm:$0xff]
    %v2798 = vld [vmem:[#allocation11 + $0xf8] sm:$0xff]
    %v2799 = vld [vmem:[#allocation11 + $0x100] sm:$0xff]
    %v2800 = vld [vmem:[#allocation11 + $0x108] sm:$0xff]
    %v2801 = vld [vmem:[#allocation11 + $0x110] sm:$0xff]
    %v2802 = vld [vmem:[#allocation11 + $0x118] sm:$0xff]
    %v2803 = vld [vmem:[#allocation11 + $0x120] sm:$0xff]
    %v2804 = vld [vmem:[#allocation11 + $0x128] sm:$0xff]
    %v2805 = vld [vmem:[#allocation11 + $0x130] sm:$0xff]
    %v2806 = vld [vmem:[#allocation11 + $0x138] sm:$0xff]
    %v2807 = vld [vmem:[#allocation11 + $0x140] sm:$0xff]
    %v2808 = vld [vmem:[#allocation11 + $0x148] sm:$0xff]
    %v2809 = vld [vmem:[#allocation11 + $0x150] sm:$0xff]
    %v2810 = vld [vmem:[#allocation11 + $0x158] sm:$0xff]
    %v2811 = vld [vmem:[#allocation11 + $0x160] sm:$0xff]
    %v2812 = vld [vmem:[#allocation11 + $0x168] sm:$0xff]
    %v2813 = vld [vmem:[#allocation11 + $0x170] sm:$0xff]
    %v2814 = vld [vmem:[#allocation11 + $0x178] sm:$0xff]
    %v2815 = vld [vmem:[#allocation11 + $0x180] sm:$0xff]
    %v2816 = vld [vmem:[#allocation11 + $0x188] sm:$0xff]
    %v2817 = vld [vmem:[#allocation11 + $0x190] sm:$0xff]
    %v2818 = vld [vmem:[#allocation11 + $0x198] sm:$0xff]
    %v2819 = vld [vmem:[#allocation11 + $0x1a0] sm:$0xff]
    %v2820 = vld [vmem:[#allocation11 + $0x1a8] sm:$0xff]
    %v2821 = vld [vmem:[#allocation11 + $0x1b0] sm:$0xff]
    %v2822 = vld [vmem:[#allocation11 + $0x1b8] sm:$0xff]
    %v2823 = vld [vmem:[#allocation11 + $0x1c0] sm:$0xff]
    %v2824 = vld [vmem:[#allocation11 + $0x1c8] sm:$0xff]
    %v2825 = vld [vmem:[#allocation11 + $0x1d0] sm:$0xff]
    %v2826 = vld [vmem:[#allocation11 + $0x1d8] sm:$0xff]
    %v2827 = vld [vmem:[#allocation11 + $0x1e0] sm:$0xff]
    %v2828 = vld [vmem:[#allocation11 + $0x1e8] sm:$0xff]
    %v2829 = vld [vmem:[#allocation11 + $0x1f0] sm:$0xff]
    %v2830 = vld [vmem:[#allocation11 + $0x1f8] sm:$0xff]
    %2831 = vmatprep.subr.mxu0 %v2798
    %2832 = vmatpush1.msra.mxu0 %v2797
    %2833 = vmatprep.subr.mxu0 %v2796
    %2834 = vmatpush1.msra.mxu0 %v2795
    %2835 = vmatprep.subr.mxu0 %v2794
    %2836 = vmatpush1.msra.mxu0 %v2793
    %2837 = vmatprep.subr.mxu0 %v2792
    %2838 = vmatpush1.msra.mxu0 %v2791
    %2839 = vmatprep.subr.mxu0 %v2790
    %2840 = vmatpush1.msra.mxu0 %v2789
    %2841 = vmatprep.subr.mxu0 %v2788
    %2842 = vmatpush1.msra.mxu0 %v2787
    %2843 = vmatprep.subr.mxu0 %v2786
    %2844 = vmatpush1.msra.mxu0 %v2785
    %2845 = vmatprep.subr.mxu0 %v2784
    %2846 = vmatpush1.msra.mxu0 %v2783
    %2847 = vmatprep.subr.mxu0 %v2782
    %2848 = vmatpush1.msra.mxu0 %v2781
    %2849 = vmatprep.subr.mxu0 %v2780
    %2850 = vmatpush1.msra.mxu0 %v2779
    %2851 = vmatprep.subr.mxu0 %v2778
    %2852 = vmatpush1.msra.mxu0 %v2777
    %2853 = vmatprep.subr.mxu0 %v2776
    %2854 = vmatpush1.msra.mxu0 %v2775
    %2855 = vmatprep.subr.mxu0 %v2774
    %2856 = vmatpush1.msra.mxu0 %v2773
    %2857 = vmatprep.subr.mxu0 %v2772
    %2858 = vmatpush1.msra.mxu0 %v2771
    %2859 = vmatprep.subr.mxu0 %v2770
    %2860 = vmatpush1.msra.mxu0 %v2769
    %2861 = vmatprep.subr.mxu0 %v2768
    %2862 = vmatpush1.msra.mxu0 %v2767
    %2863 = vmatprep.subr.mxu0 %v2830
    %2864 = vmatpush2.msra.mxu0 %v2829
    %2865 = vmatprep.subr.mxu0 %v2828
    %2866 = vmatpush2.msra.mxu0 %v2827
    %2867 = vmatprep.subr.mxu0 %v2826
    %2868 = vmatpush2.msra.mxu0 %v2825
    %2869 = vmatprep.subr.mxu0 %v2824
    %2870 = vmatpush2.msra.mxu0 %v2823
    %2871 = vmatprep.subr.mxu0 %v2822
    %2872 = vmatpush2.msra.mxu0 %v2821
    %2873 = vmatprep.subr.mxu0 %v2820
    %2874 = vmatpush2.msra.mxu0 %v2819
    %2875 = vmatprep.subr.mxu0 %v2818
    %2876 = vmatpush2.msra.mxu0 %v2817
    %2877 = vmatprep.subr.mxu0 %v2816
    %2878 = vmatpush2.msra.mxu0 %v2815
    %2879 = vmatprep.subr.mxu0 %v2814
    %2880 = vmatpush2.msra.mxu0 %v2813
    %2881 = vmatprep.subr.mxu0 %v2812
    %2882 = vmatpush2.msra.mxu0 %v2811
    %2883 = vmatprep.subr.mxu0 %v2810
    %2884 = vmatpush2.msra.mxu0 %v2809
    %2885 = vmatprep.subr.mxu0 %v2808
    %2886 = vmatpush2.msra.mxu0 %v2807
    %2887 = vmatprep.subr.mxu0 %v2806
    %2888 = vmatpush2.msra.mxu0 %v2805
    %2889 = vmatprep.subr.mxu0 %v2804
    %2890 = vmatpush2.msra.mxu0 %v2803
    %2891 = vmatprep.subr.mxu0 %v2802
    %2892 = vmatpush2.msra.mxu0 %v2801
    %2893 = vmatprep.subr.mxu0 %v2800
    %2894 = vmatpush2.msra.mxu0 %v2799
    %2895 = vmatprep.mubr.f32.mxu0 %v2736
    %2896 = vmatmul.mubr.f32.gmra.mxu0 %v2735
    %v2897 = vpop.f32.mrf.mxu0
    %v2898 = vadd.f32 0.0, %v2897
    %v2899 = vpop.f32.mrf.mxu0
    %v2900 = vadd.f32 0.0, %v2899
    %2901 = vmatprep.mubr.f32.mxu0 %v2738
    %2902 = vmatmul.mubr.f32.gmra.mxu0 %v2737
    %v2903 = vpop.f32.mrf.mxu0
    %v2904 = vadd.f32 0.0, %v2903
    %v2905 = vpop.f32.mrf.mxu0
    %v2906 = vadd.f32 0.0, %v2905
    %2907 = vmatprep.mubr.f32.mxu0 %v2740
    %2908 = vmatmul.mubr.f32.gmra.mxu0 %v2739
    %v2909 = vpop.f32.mrf.mxu0
    %v2910 = vadd.f32 0.0, %v2909
    %v2911 = vpop.f32.mrf.mxu0
    %v2912 = vadd.f32 0.0, %v2911
    %2913 = vmatprep.mubr.f32.mxu0 %v2742
    %2914 = vmatmul.mubr.f32.gmra.mxu0 %v2741
    %v2915 = vpop.f32.mrf.mxu0
    %v2916 = vadd.f32 0.0, %v2915
    %v2917 = vpop.f32.mrf.mxu0
    %v2918 = vadd.f32 0.0, %v2917
    %2919 = vmatprep.mubr.f32.mxu0 %v2744
    %2920 = vmatmul.mubr.f32.gmra.mxu0 %v2743
    %v2921 = vpop.f32.mrf.mxu0
    %v2922 = vadd.f32 0.0, %v2921
    %v2923 = vpop.f32.mrf.mxu0
    %v2924 = vadd.f32 0.0, %v2923
    %2925 = vmatprep.mubr.f32.mxu0 %v2746
    %2926 = vmatmul.mubr.f32.gmra.mxu0 %v2745
    %v2927 = vpop.f32.mrf.mxu0
    %v2928 = vadd.f32 0.0, %v2927
    %v2929 = vpop.f32.mrf.mxu0
    %v2930 = vadd.f32 0.0, %v2929
    %2931 = vmatprep.mubr.f32.mxu0 %v2748
    %2932 = vmatmul.mubr.f32.gmra.mxu0 %v2747
    %v2933 = vpop.f32.mrf.mxu0
    %v2934 = vadd.f32 0.0, %v2933
    %v2935 = vpop.f32.mrf.mxu0
    %v2936 = vadd.f32 0.0, %v2935
    %2937 = vmatprep.mubr.f32.mxu0 %v2750
    %2938 = vmatmul.mubr.f32.gmra.mxu0 %v2749
    %v2939 = vpop.f32.mrf.mxu0
    %v2940 = vadd.f32 0.0, %v2939
    %v2941 = vpop.f32.mrf.mxu0
    %v2942 = vadd.f32 0.0, %v2941
    %2943 = vmatprep.mubr.f32.mxu0 %v2752
    %2944 = vmatmul.mubr.f32.gmra.mxu0 %v2751
    %v2945 = vpop.f32.mrf.mxu0
    %v2946 = vadd.f32 0.0, %v2945
    %v2947 = vpop.f32.mrf.mxu0
    %v2948 = vadd.f32 0.0, %v2947
    %2949 = vmatprep.mubr.f32.mxu0 %v2754
    %2950 = vmatmul.mubr.f32.gmra.mxu0 %v2753
    %v2951 = vpop.f32.mrf.mxu0
    %v2952 = vadd.f32 0.0, %v2951
    %v2953 = vpop.f32.mrf.mxu0
    %v2954 = vadd.f32 0.0, %v2953
    %2955 = vmatprep.mubr.f32.mxu0 %v2756
    %2956 = vmatmul.mubr.f32.gmra.mxu0 %v2755
    %v2957 = vpop.f32.mrf.mxu0
    %v2958 = vadd.f32 0.0, %v2957
    %v2959 = vpop.f32.mrf.mxu0
    %v2960 = vadd.f32 0.0, %v2959
    %2961 = vmatprep.mubr.f32.mxu0 %v2758
    %2962 = vmatmul.mubr.f32.gmra.mxu0 %v2757
    %v2963 = vpop.f32.mrf.mxu0
    %v2964 = vadd.f32 0.0, %v2963
    %v2965 = vpop.f32.mrf.mxu0
    %v2966 = vadd.f32 0.0, %v2965
    %2967 = vmatprep.mubr.f32.mxu0 %v2760
    %2968 = vmatmul.mubr.f32.gmra.mxu0 %v2759
    %v2969 = vpop.f32.mrf.mxu0
    %v2970 = vadd.f32 0.0, %v2969
    %v2971 = vpop.f32.mrf.mxu0
    %v2972 = vadd.f32 0.0, %v2971
    %2973 = vmatprep.mubr.f32.mxu0 %v2762
    %2974 = vmatmul.mubr.f32.gmra.mxu0 %v2761
    %v2975 = vpop.f32.mrf.mxu0
    %v2976 = vadd.f32 0.0, %v2975
    %v2977 = vpop.f32.mrf.mxu0
    %v2978 = vadd.f32 0.0, %v2977
    %2979 = vmatprep.mubr.f32.mxu0 %v2764
    %2980 = vmatmul.mubr.f32.gmra.mxu0 %v2763
    %v2981 = vpop.f32.mrf.mxu0
    %v2982 = vadd.f32 0.0, %v2981
    %v2983 = vpop.f32.mrf.mxu0
    %v2984 = vadd.f32 0.0, %v2983
    %2985 = vmatprep.mubr.f32.mxu0 %v2766
    %2986 = vmatmul.mubr.f32.gmra.mxu0 %v2765
    %v2987 = vpop.f32.mrf.mxu0
    %v2988 = vadd.f32 0.0, %v2987
    %v2989 = vpop.f32.mrf.mxu0
    %v2990 = vadd.f32 0.0, %v2989
    %2991 = vdwg.mxu0
    %v2992 = vadd.f32 %v134, %v2898
    %v2993 = vadd.f32 %v135, %v2900
    %v2994 = vadd.f32 %v136, %v2904
    %v2995 = vadd.f32 %v137, %v2906
    %v2996 = vadd.f32 %v138, %v2910
    %v2997 = vadd.f32 %v139, %v2912
    %v2998 = vadd.f32 %v140, %v2916
    %v2999 = vadd.f32 %v141, %v2918
    %v3000 = vadd.f32 %v142, %v2922
    %v3001 = vadd.f32 %v143, %v2924
    %v3002 = vadd.f32 %v144, %v2928
    %v3003 = vadd.f32 %v145, %v2930
    %v3004 = vadd.f32 %v146, %v2934
    %v3005 = vadd.f32 %v147, %v2936
    %v3006 = vadd.f32 %v148, %v2940
    %v3007 = vadd.f32 %v149, %v2942
    %v3008 = vadd.f32 %v150, %v2946
    %v3009 = vadd.f32 %v151, %v2948
    %v3010 = vadd.f32 %v152, %v2952
    %v3011 = vadd.f32 %v153, %v2954
    %v3012 = vadd.f32 %v154, %v2958
    %v3013 = vadd.f32 %v155, %v2960
    %v3014 = vadd.f32 %v156, %v2964
    %v3015 = vadd.f32 %v157, %v2966
    %v3016 = vadd.f32 %v158, %v2970
    %v3017 = vadd.f32 %v159, %v2972
    %v3018 = vadd.f32 %v160, %v2976
    %v3019 = vadd.f32 %v161, %v2978
    %v3020 = vadd.f32 %v162, %v2982
    %v3021 = vadd.f32 %v163, %v2984
    %v3022 = vadd.f32 %v164, %v2988
    %v3023 = vadd.f32 %v165, %v2990
    %v3024 = vld [vmem:[%s7] sm:$0x3]
    %v3026 = vlaneseq
    %v3027 = vshrl.u32 %v3026, 7
    %v3028 = vsub.s32 0, %v3027
    %v3029 = vrot.slane %v3024, %v3028
    %v3030 = vlaneseq
    %v3031 = vshrl.u32 %v3030, 7
    %v3032 = vsub.s32 1, %v3031
    %v3033 = vrot.slane %v3024, %v3032
    %v3036 = vadd.f32 %v2992, %v3029
    %v3037 = vadd.f32 %v2993, %v3033
    %v3038 = vadd.f32 %v2994, %v3029
    %v3039 = vadd.f32 %v2995, %v3033
    %v3040 = vadd.f32 %v2996, %v3029
    %v3041 = vadd.f32 %v2997, %v3033
    %v3042 = vadd.f32 %v2998, %v3029
    %v3043 = vadd.f32 %v2999, %v3033
    %v3044 = vadd.f32 %v3000, %v3029
    %v3045 = vadd.f32 %v3001, %v3033
    %v3046 = vadd.f32 %v3002, %v3029
    %v3047 = vadd.f32 %v3003, %v3033
    %v3048 = vadd.f32 %v3004, %v3029
    %v3049 = vadd.f32 %v3005, %v3033
    %v3050 = vadd.f32 %v3006, %v3029
    %v3051 = vadd.f32 %v3007, %v3033
    %v3052 = vadd.f32 %v3008, %v3029
    %v3053 = vadd.f32 %v3009, %v3033
    %v3054 = vadd.f32 %v3010, %v3029
    %v3055 = vadd.f32 %v3011, %v3033
    %v3056 = vadd.f32 %v3012, %v3029
    %v3057 = vadd.f32 %v3013, %v3033
    %v3058 = vadd.f32 %v3014, %v3029
    %v3059 = vadd.f32 %v3015, %v3033
    %v3060 = vadd.f32 %v3016, %v3029
    %v3061 = vadd.f32 %v3017, %v3033
    %v3062 = vadd.f32 %v3018, %v3029
    %v3063 = vadd.f32 %v3019, %v3033
    %v3064 = vadd.f32 %v3020, %v3029
    %v3065 = vadd.f32 %v3021, %v3033
    %v3066 = vadd.f32 %v3022, %v3029
    %v3067 = vadd.f32 %v3023, %v3033
    %v3068 = vmul.f32 %v3036, %v3036
    %v3069 = vmul.f32 %v3037, %v3037
    %v3070 = vmul.f32 %v3038, %v3038
    %v3071 = vmul.f32 %v3039, %v3039
    %v3072 = vmul.f32 %v3040, %v3040
    %v3073 = vmul.f32 %v3041, %v3041
    %v3074 = vmul.f32 %v3042, %v3042
    %v3075 = vmul.f32 %v3043, %v3043
    %v3076 = vmul.f32 %v3044, %v3044
    %v3077 = vmul.f32 %v3045, %v3045
    %v3078 = vmul.f32 %v3046, %v3046
    %v3079 = vmul.f32 %v3047, %v3047
    %v3080 = vmul.f32 %v3048, %v3048
    %v3081 = vmul.f32 %v3049, %v3049
    %v3082 = vmul.f32 %v3050, %v3050
    %v3083 = vmul.f32 %v3051, %v3051
    %v3084 = vmul.f32 %v3052, %v3052
    %v3085 = vmul.f32 %v3053, %v3053
    %v3086 = vmul.f32 %v3054, %v3054
    %v3087 = vmul.f32 %v3055, %v3055
    %v3088 = vmul.f32 %v3056, %v3056
    %v3089 = vmul.f32 %v3057, %v3057
    %v3090 = vmul.f32 %v3058, %v3058
    %v3091 = vmul.f32 %v3059, %v3059
    %v3092 = vmul.f32 %v3060, %v3060
    %v3093 = vmul.f32 %v3061, %v3061
    %v3094 = vmul.f32 %v3062, %v3062
    %v3095 = vmul.f32 %v3063, %v3063
    %v3096 = vmul.f32 %v3064, %v3064
    %v3097 = vmul.f32 %v3065, %v3065
    %v3098 = vmul.f32 %v3066, %v3066
    %v3099 = vmul.f32 %v3067, %v3067
    %v3100 = vadd.f32 %v3068, %v3069
    %3101 = vadd.xlane.f32.xlu0 %v3100
    %v3102 = vpop.xlane.xlu0 %3101
    %v3103 = vadd.f32 %v3070, %v3071
    %3104 = vadd.xlane.f32.xlu0 %v3103
    %v3105 = vpop.xlane.xlu0 %3104
    %v3106 = vadd.f32 %v3072, %v3073
    %3107 = vadd.xlane.f32.xlu0 %v3106
    %v3108 = vpop.xlane.xlu0 %3107
    %v3109 = vadd.f32 %v3074, %v3075
    %3110 = vadd.xlane.f32.xlu0 %v3109
    %v3111 = vpop.xlane.xlu0 %3110
    %v3112 = vadd.f32 %v3076, %v3077
    %3113 = vadd.xlane.f32.xlu0 %v3112
    %v3114 = vpop.xlane.xlu0 %3113
    %v3115 = vadd.f32 %v3078, %v3079
    %3116 = vadd.xlane.f32.xlu0 %v3115
    %v3117 = vpop.xlane.xlu0 %3116
    %v3118 = vadd.f32 %v3080, %v3081
    %3119 = vadd.xlane.f32.xlu0 %v3118
    %v3120 = vpop.xlane.xlu0 %3119
    %v3121 = vadd.f32 %v3082, %v3083
    %3122 = vadd.xlane.f32.xlu0 %v3121
    %v3123 = vpop.xlane.xlu0 %3122
    %v3124 = vadd.f32 %v3084, %v3085
    %3125 = vadd.xlane.f32.xlu0 %v3124
    %v3126 = vpop.xlane.xlu0 %3125
    %v3127 = vadd.f32 %v3086, %v3087
    %3128 = vadd.xlane.f32.xlu0 %v3127
    %v3129 = vpop.xlane.xlu0 %3128
    %v3130 = vadd.f32 %v3088, %v3089
    %3131 = vadd.xlane.f32.xlu0 %v3130
    %v3132 = vpop.xlane.xlu0 %3131
    %v3133 = vadd.f32 %v3090, %v3091
    %3134 = vadd.xlane.f32.xlu0 %v3133
    %v3135 = vpop.xlane.xlu0 %3134
    %v3136 = vadd.f32 %v3092, %v3093
    %3137 = vadd.xlane.f32.xlu0 %v3136
    %v3138 = vpop.xlane.xlu0 %3137
    %v3139 = vadd.f32 %v3094, %v3095
    %3140 = vadd.xlane.f32.xlu0 %v3139
    %v3141 = vpop.xlane.xlu0 %3140
    %v3142 = vadd.f32 %v3096, %v3097
    %3143 = vadd.xlane.f32.xlu0 %v3142
    %v3144 = vpop.xlane.xlu0 %3143
    %v3145 = vadd.f32 %v3098, %v3099
    %3146 = vadd.xlane.f32.xlu0 %v3145
    %v3147 = vpop.xlane.xlu0 %3146
    %v3148 = vmul.f32 %v3102, %v246
    %v3149 = vmul.f32 %v3105, %v246
    %v3150 = vmul.f32 %v3108, %v246
    %v3151 = vmul.f32 %v3111, %v246
    %v3152 = vmul.f32 %v3114, %v246
    %v3153 = vmul.f32 %v3117, %v246
    %v3154 = vmul.f32 %v3120, %v246
    %v3155 = vmul.f32 %v3123, %v246
    %v3156 = vmul.f32 %v3126, %v246
    %v3157 = vmul.f32 %v3129, %v246
    %v3158 = vmul.f32 %v3132, %v246
    %v3159 = vmul.f32 %v3135, %v246
    %v3160 = vmul.f32 %v3138, %v246
    %v3161 = vmul.f32 %v3141, %v246
    %v3162 = vmul.f32 %v3144, %v246
    %v3163 = vmul.f32 %v3147, %v246
    %v3164 = vadd.f32 %v3148, 1e-05
    %v3165 = vadd.f32 %v3149, 1e-05
    %v3166 = vadd.f32 %v3150, 1e-05
    %v3167 = vadd.f32 %v3151, 1e-05
    %v3168 = vadd.f32 %v3152, 1e-05
    %v3169 = vadd.f32 %v3153, 1e-05
    %v3170 = vadd.f32 %v3154, 1e-05
    %v3171 = vadd.f32 %v3155, 1e-05
    %v3172 = vadd.f32 %v3156, 1e-05
    %v3173 = vadd.f32 %v3157, 1e-05
    %v3174 = vadd.f32 %v3158, 1e-05
    %v3175 = vadd.f32 %v3159, 1e-05
    %v3176 = vadd.f32 %v3160, 1e-05
    %v3177 = vadd.f32 %v3161, 1e-05
    %v3178 = vadd.f32 %v3162, 1e-05
    %v3179 = vadd.f32 %v3163, 1e-05
    %v3180 = vrsqrt.pop %v3164
    %v3181 = vrsqrt.pop %v3165
    %v3182 = vrsqrt.pop %v3166
    %v3183 = vrsqrt.pop %v3167
    %v3184 = vrsqrt.pop %v3168
    %v3185 = vrsqrt.pop %v3169
    %v3186 = vrsqrt.pop %v3170
    %v3187 = vrsqrt.pop %v3171
    %v3188 = vrsqrt.pop %v3172
    %v3189 = vrsqrt.pop %v3173
    %v3190 = vrsqrt.pop %v3174
    %v3191 = vrsqrt.pop %v3175
    %v3192 = vrsqrt.pop %v3176
    %v3193 = vrsqrt.pop %v3177
    %v3194 = vrsqrt.pop %v3178
    %v3195 = vrsqrt.pop %v3179
    %v3196 = vmul.f32 %v3036, %v3180
    %v3197 = vmul.f32 %v3037, %v3180
    %v3198 = vmul.f32 %v3038, %v3181
    %v3199 = vmul.f32 %v3039, %v3181
    %v3200 = vmul.f32 %v3040, %v3182
    %v3201 = vmul.f32 %v3041, %v3182
    %v3202 = vmul.f32 %v3042, %v3183
    %v3203 = vmul.f32 %v3043, %v3183
    %v3204 = vmul.f32 %v3044, %v3184
    %v3205 = vmul.f32 %v3045, %v3184
    %v3206 = vmul.f32 %v3046, %v3185
    %v3207 = vmul.f32 %v3047, %v3185
    %v3208 = vmul.f32 %v3048, %v3186
    %v3209 = vmul.f32 %v3049, %v3186
    %v3210 = vmul.f32 %v3050, %v3187
    %v3211 = vmul.f32 %v3051, %v3187
    %v3212 = vmul.f32 %v3052, %v3188
    %v3213 = vmul.f32 %v3053, %v3188
    %v3214 = vmul.f32 %v3054, %v3189
    %v3215 = vmul.f32 %v3055, %v3189
    %v3216 = vmul.f32 %v3056, %v3190
    %v3217 = vmul.f32 %v3057, %v3190
    %v3218 = vmul.f32 %v3058, %v3191
    %v3219 = vmul.f32 %v3059, %v3191
    %v3220 = vmul.f32 %v3060, %v3192
    %v3221 = vmul.f32 %v3061, %v3192
    %v3222 = vmul.f32 %v3062, %v3193
    %v3223 = vmul.f32 %v3063, %v3193
    %v3224 = vmul.f32 %v3064, %v3194
    %v3225 = vmul.f32 %v3065, %v3194
    %v3226 = vmul.f32 %v3066, %v3195
    %v3227 = vmul.f32 %v3067, %v3195
    %v3228 = vld [vmem:[%s8] sm:$0x3]
    %v3230 = vlaneseq
    %v3231 = vshrl.u32 %v3230, 7
    %v3232 = vsub.s32 0, %v3231
    %v3233 = vrot.slane %v3228, %v3232
    %v3234 = vlaneseq
    %v3235 = vshrl.u32 %v3234, 7
    %v3236 = vsub.s32 1, %v3235
    %v3237 = vrot.slane %v3228, %v3236
    %v3240 = vmul.f32 %v3196, %v3233
    %v3241 = vmul.f32 %v3197, %v3237
    %v3242 = vmul.f32 %v3198, %v3233
    %v3243 = vmul.f32 %v3199, %v3237
    %v3244 = vmul.f32 %v3200, %v3233
    %v3245 = vmul.f32 %v3201, %v3237
    %v3246 = vmul.f32 %v3202, %v3233
    %v3247 = vmul.f32 %v3203, %v3237
    %v3248 = vmul.f32 %v3204, %v3233
    %v3249 = vmul.f32 %v3205, %v3237
    %v3250 = vmul.f32 %v3206, %v3233
    %v3251 = vmul.f32 %v3207, %v3237
    %v3252 = vmul.f32 %v3208, %v3233
    %v3253 = vmul.f32 %v3209, %v3237
    %v3254 = vmul.f32 %v3210, %v3233
    %v3255 = vmul.f32 %v3211, %v3237
    %v3256 = vmul.f32 %v3212, %v3233
    %v3257 = vmul.f32 %v3213, %v3237
    %v3258 = vmul.f32 %v3214, %v3233
    %v3259 = vmul.f32 %v3215, %v3237
    %v3260 = vmul.f32 %v3216, %v3233
    %v3261 = vmul.f32 %v3217, %v3237
    %v3262 = vmul.f32 %v3218, %v3233
    %v3263 = vmul.f32 %v3219, %v3237
    %v3264 = vmul.f32 %v3220, %v3233
    %v3265 = vmul.f32 %v3221, %v3237
    %v3266 = vmul.f32 %v3222, %v3233
    %v3267 = vmul.f32 %v3223, %v3237
    %v3268 = vmul.f32 %v3224, %v3233
    %v3269 = vmul.f32 %v3225, %v3237
    %v3270 = vmul.f32 %v3226, %v3233
    %v3271 = vmul.f32 %v3227, %v3237
    %v3272 = vld [vmem:[#allocation12] sm:$0xff]
    %v3273 = vld [vmem:[#allocation12 + $0x8] sm:$0xff]
    %v3274 = vld [vmem:[#allocation12 + $0x40] sm:$0xff]
    %v3275 = vld [vmem:[#allocation12 + $0x48] sm:$0xff]
    %v3276 = vld [vmem:[#allocation12 + $0x80] sm:$0xff]
    %v3277 = vld [vmem:[#allocation12 + $0x88] sm:$0xff]
    %v3278 = vld [vmem:[#allocation12 + $0xc0] sm:$0xff]
    %v3279 = vld [vmem:[#allocation12 + $0xc8] sm:$0xff]
    %v3280 = vld [vmem:[#allocation12 + $0x100] sm:$0xff]
    %v3281 = vld [vmem:[#allocation12 + $0x108] sm:$0xff]
    %v3282 = vld [vmem:[#allocation12 + $0x140] sm:$0xff]
    %v3283 = vld [vmem:[#allocation12 + $0x148] sm:$0xff]
    %v3284 = vld [vmem:[#allocation12 + $0x180] sm:$0xff]
    %v3285 = vld [vmem:[#allocation12 + $0x188] sm:$0xff]
    %v3286 = vld [vmem:[#allocation12 + $0x1c0] sm:$0xff]
    %v3287 = vld [vmem:[#allocation12 + $0x1c8] sm:$0xff]
    %v3288 = vld [vmem:[#allocation12 + $0x200] sm:$0xff]
    %v3289 = vld [vmem:[#allocation12 + $0x208] sm:$0xff]
    %v3290 = vld [vmem:[#allocation12 + $0x240] sm:$0xff]
    %v3291 = vld [vmem:[#allocation12 + $0x248] sm:$0xff]
    %v3292 = vld [vmem:[#allocation12 + $0x280] sm:$0xff]
    %v3293 = vld [vmem:[#allocation12 + $0x288] sm:$0xff]
    %v3294 = vld [vmem:[#allocation12 + $0x2c0] sm:$0xff]
    %v3295 = vld [vmem:[#allocation12 + $0x2c8] sm:$0xff]
    %v3296 = vld [vmem:[#allocation12 + $0x300] sm:$0xff]
    %v3297 = vld [vmem:[#allocation12 + $0x308] sm:$0xff]
    %v3298 = vld [vmem:[#allocation12 + $0x340] sm:$0xff]
    %v3299 = vld [vmem:[#allocation12 + $0x348] sm:$0xff]
    %v3300 = vld [vmem:[#allocation12 + $0x380] sm:$0xff]
    %v3301 = vld [vmem:[#allocation12 + $0x388] sm:$0xff]
    %v3302 = vld [vmem:[#allocation12 + $0x3c0] sm:$0xff]
    %v3303 = vld [vmem:[#allocation12 + $0x3c8] sm:$0xff]
    %v3304 = vld [vmem:[#allocation12 + $0x400] sm:$0xff]
    %v3305 = vld [vmem:[#allocation12 + $0x408] sm:$0xff]
    %v3306 = vld [vmem:[#allocation12 + $0x440] sm:$0xff]
    %v3307 = vld [vmem:[#allocation12 + $0x448] sm:$0xff]
    %v3308 = vld [vmem:[#allocation12 + $0x480] sm:$0xff]
    %v3309 = vld [vmem:[#allocation12 + $0x488] sm:$0xff]
    %v3310 = vld [vmem:[#allocation12 + $0x4c0] sm:$0xff]
    %v3311 = vld [vmem:[#allocation12 + $0x4c8] sm:$0xff]
    %v3312 = vld [vmem:[#allocation12 + $0x500] sm:$0xff]
    %v3313 = vld [vmem:[#allocation12 + $0x508] sm:$0xff]
    %v3314 = vld [vmem:[#allocation12 + $0x540] sm:$0xff]
    %v3315 = vld [vmem:[#allocation12 + $0x548] sm:$0xff]
    %v3316 = vld [vmem:[#allocation12 + $0x580] sm:$0xff]
    %v3317 = vld [vmem:[#allocation12 + $0x588] sm:$0xff]
    %v3318 = vld [vmem:[#allocation12 + $0x5c0] sm:$0xff]
    %v3319 = vld [vmem:[#allocation12 + $0x5c8] sm:$0xff]
    %v3320 = vld [vmem:[#allocation12 + $0x600] sm:$0xff]
    %v3321 = vld [vmem:[#allocation12 + $0x608] sm:$0xff]
    %v3322 = vld [vmem:[#allocation12 + $0x640] sm:$0xff]
    %v3323 = vld [vmem:[#allocation12 + $0x648] sm:$0xff]
    %v3324 = vld [vmem:[#allocation12 + $0x680] sm:$0xff]
    %v3325 = vld [vmem:[#allocation12 + $0x688] sm:$0xff]
    %v3326 = vld [vmem:[#allocation12 + $0x6c0] sm:$0xff]
    %v3327 = vld [vmem:[#allocation12 + $0x6c8] sm:$0xff]
    %v3328 = vld [vmem:[#allocation12 + $0x700] sm:$0xff]
    %v3329 = vld [vmem:[#allocation12 + $0x708] sm:$0xff]
    %v3330 = vld [vmem:[#allocation12 + $0x740] sm:$0xff]
    %v3331 = vld [vmem:[#allocation12 + $0x748] sm:$0xff]
    %v3332 = vld [vmem:[#allocation12 + $0x780] sm:$0xff]
    %v3333 = vld [vmem:[#allocation12 + $0x788] sm:$0xff]
    %v3334 = vld [vmem:[#allocation12 + $0x7c0] sm:$0xff]
    %v3335 = vld [vmem:[#allocation12 + $0x7c8] sm:$0xff]
    %3336 = vmatprep.subr.mxu0 %v3303
    %3337 = vmatpush1.msra.mxu0 %v3302
    %3338 = vmatprep.subr.mxu0 %v3301
    %3339 = vmatpush1.msra.mxu0 %v3300
    %3340 = vmatprep.subr.mxu0 %v3299
    %3341 = vmatpush1.msra.mxu0 %v3298
    %3342 = vmatprep.subr.mxu0 %v3297
    %3343 = vmatpush1.msra.mxu0 %v3296
    %3344 = vmatprep.subr.mxu0 %v3295
    %3345 = vmatpush1.msra.mxu0 %v3294
    %3346 = vmatprep.subr.mxu0 %v3293
    %3347 = vmatpush1.msra.mxu0 %v3292
    %3348 = vmatprep.subr.mxu0 %v3291
    %3349 = vmatpush1.msra.mxu0 %v3290
    %3350 = vmatprep.subr.mxu0 %v3289
    %3351 = vmatpush1.msra.mxu0 %v3288
    %3352 = vmatprep.subr.mxu0 %v3287
    %3353 = vmatpush1.msra.mxu0 %v3286
    %3354 = vmatprep.subr.mxu0 %v3285
    %3355 = vmatpush1.msra.mxu0 %v3284
    %3356 = vmatprep.subr.mxu0 %v3283
    %3357 = vmatpush1.msra.mxu0 %v3282
    %3358 = vmatprep.subr.mxu0 %v3281
    %3359 = vmatpush1.msra.mxu0 %v3280
    %3360 = vmatprep.subr.mxu0 %v3279
    %3361 = vmatpush1.msra.mxu0 %v3278
    %3362 = vmatprep.subr.mxu0 %v3277
    %3363 = vmatpush1.msra.mxu0 %v3276
    %3364 = vmatprep.subr.mxu0 %v3275
    %3365 = vmatpush1.msra.mxu0 %v3274
    %3366 = vmatprep.subr.mxu0 %v3273
    %3367 = vmatpush1.msra.mxu0 %v3272
    %3368 = vmatprep.subr.mxu0 %v3335
    %3369 = vmatpush2.msra.mxu0 %v3334
    %3370 = vmatprep.subr.mxu0 %v3333
    %3371 = vmatpush2.msra.mxu0 %v3332
    %3372 = vmatprep.subr.mxu0 %v3331
    %3373 = vmatpush2.msra.mxu0 %v3330
    %3374 = vmatprep.subr.mxu0 %v3329
    %3375 = vmatpush2.msra.mxu0 %v3328
    %3376 = vmatprep.subr.mxu0 %v3327
    %3377 = vmatpush2.msra.mxu0 %v3326
    %3378 = vmatprep.subr.mxu0 %v3325
    %3379 = vmatpush2.msra.mxu0 %v3324
    %3380 = vmatprep.subr.mxu0 %v3323
    %3381 = vmatpush2.msra.mxu0 %v3322
    %3382 = vmatprep.subr.mxu0 %v3321
    %3383 = vmatpush2.msra.mxu0 %v3320
    %3384 = vmatprep.subr.mxu0 %v3319
    %3385 = vmatpush2.msra.mxu0 %v3318
    %3386 = vmatprep.subr.mxu0 %v3317
    %3387 = vmatpush2.msra.mxu0 %v3316
    %3388 = vmatprep.subr.mxu0 %v3315
    %3389 = vmatpush2.msra.mxu0 %v3314
    %3390 = vmatprep.subr.mxu0 %v3313
    %3391 = vmatpush2.msra.mxu0 %v3312
    %3392 = vmatprep.subr.mxu0 %v3311
    %3393 = vmatpush2.msra.mxu0 %v3310
    %3394 = vmatprep.subr.mxu0 %v3309
    %3395 = vmatpush2.msra.mxu0 %v3308
    %3396 = vmatprep.subr.mxu0 %v3307
    %3397 = vmatpush2.msra.mxu0 %v3306
    %3398 = vmatprep.subr.mxu0 %v3305
    %3399 = vmatpush2.msra.mxu0 %v3304
    %3400 = vmatprep.mubr.f32.mxu0 %v3241
    %3401 = vmatmul.mubr.f32.gmra.mxu0 %v3240
    %v3402 = vpop.f32.mrf.mxu0
    %v3403 = vadd.f32 0.0, %v3402
    %v3404 = vpop.f32.mrf.mxu0
    %v3405 = vadd.f32 0.0, %v3404
    %3406 = vmatprep.mubr.f32.mxu0 %v3243
    %3407 = vmatmul.mubr.f32.gmra.mxu0 %v3242
    %v3408 = vpop.f32.mrf.mxu0
    %v3409 = vadd.f32 0.0, %v3408
    %v3410 = vpop.f32.mrf.mxu0
    %v3411 = vadd.f32 0.0, %v3410
    %3412 = vmatprep.mubr.f32.mxu0 %v3245
    %3413 = vmatmul.mubr.f32.gmra.mxu0 %v3244
    %v3414 = vpop.f32.mrf.mxu0
    %v3415 = vadd.f32 0.0, %v3414
    %v3416 = vpop.f32.mrf.mxu0
    %v3417 = vadd.f32 0.0, %v3416
    %3418 = vmatprep.mubr.f32.mxu0 %v3247
    %3419 = vmatmul.mubr.f32.gmra.mxu0 %v3246
    %v3420 = vpop.f32.mrf.mxu0
    %v3421 = vadd.f32 0.0, %v3420
    %v3422 = vpop.f32.mrf.mxu0
    %v3423 = vadd.f32 0.0, %v3422
    %3424 = vmatprep.mubr.f32.mxu0 %v3249
    %3425 = vmatmul.mubr.f32.gmra.mxu0 %v3248
    %v3426 = vpop.f32.mrf.mxu0
    %v3427 = vadd.f32 0.0, %v3426
    %v3428 = vpop.f32.mrf.mxu0
    %v3429 = vadd.f32 0.0, %v3428
    %3430 = vmatprep.mubr.f32.mxu0 %v3251
    %3431 = vmatmul.mubr.f32.gmra.mxu0 %v3250
    %v3432 = vpop.f32.mrf.mxu0
    %v3433 = vadd.f32 0.0, %v3432
    %v3434 = vpop.f32.mrf.mxu0
    %v3435 = vadd.f32 0.0, %v3434
    %3436 = vmatprep.mubr.f32.mxu0 %v3253
    %3437 = vmatmul.mubr.f32.gmra.mxu0 %v3252
    %v3438 = vpop.f32.mrf.mxu0
    %v3439 = vadd.f32 0.0, %v3438
    %v3440 = vpop.f32.mrf.mxu0
    %v3441 = vadd.f32 0.0, %v3440
    %3442 = vmatprep.mubr.f32.mxu0 %v3255
    %3443 = vmatmul.mubr.f32.gmra.mxu0 %v3254
    %v3444 = vpop.f32.mrf.mxu0
    %v3445 = vadd.f32 0.0, %v3444
    %v3446 = vpop.f32.mrf.mxu0
    %v3447 = vadd.f32 0.0, %v3446
    %3448 = vmatprep.mubr.f32.mxu0 %v3257
    %3449 = vmatmul.mubr.f32.gmra.mxu0 %v3256
    %v3450 = vpop.f32.mrf.mxu0
    %v3451 = vadd.f32 0.0, %v3450
    %v3452 = vpop.f32.mrf.mxu0
    %v3453 = vadd.f32 0.0, %v3452
    %3454 = vmatprep.mubr.f32.mxu0 %v3259
    %3455 = vmatmul.mubr.f32.gmra.mxu0 %v3258
    %v3456 = vpop.f32.mrf.mxu0
    %v3457 = vadd.f32 0.0, %v3456
    %v3458 = vpop.f32.mrf.mxu0
    %v3459 = vadd.f32 0.0, %v3458
    %3460 = vmatprep.mubr.f32.mxu0 %v3261
    %3461 = vmatmul.mubr.f32.gmra.mxu0 %v3260
    %v3462 = vpop.f32.mrf.mxu0
    %v3463 = vadd.f32 0.0, %v3462
    %v3464 = vpop.f32.mrf.mxu0
    %v3465 = vadd.f32 0.0, %v3464
    %3466 = vmatprep.mubr.f32.mxu0 %v3263
    %3467 = vmatmul.mubr.f32.gmra.mxu0 %v3262
    %v3468 = vpop.f32.mrf.mxu0
    %v3469 = vadd.f32 0.0, %v3468
    %v3470 = vpop.f32.mrf.mxu0
    %v3471 = vadd.f32 0.0, %v3470
    %3472 = vmatprep.mubr.f32.mxu0 %v3265
    %3473 = vmatmul.mubr.f32.gmra.mxu0 %v3264
    %v3474 = vpop.f32.mrf.mxu0
    %v3475 = vadd.f32 0.0, %v3474
    %v3476 = vpop.f32.mrf.mxu0
    %v3477 = vadd.f32 0.0, %v3476
    %3478 = vmatprep.mubr.f32.mxu0 %v3267
    %3479 = vmatmul.mubr.f32.gmra.mxu0 %v3266
    %v3480 = vpop.f32.mrf.mxu0
    %v3481 = vadd.f32 0.0, %v3480
    %v3482 = vpop.f32.mrf.mxu0
    %v3483 = vadd.f32 0.0, %v3482
    %3484 = vmatprep.mubr.f32.mxu0 %v3269
    %3485 = vmatmul.mubr.f32.gmra.mxu0 %v3268
    %v3486 = vpop.f32.mrf.mxu0
    %v3487 = vadd.f32 0.0, %v3486
    %v3488 = vpop.f32.mrf.mxu0
    %v3489 = vadd.f32 0.0, %v3488
    %3490 = vmatprep.mubr.f32.mxu0 %v3271
    %3491 = vmatmul.mubr.f32.gmra.mxu0 %v3270
    %v3492 = vpop.f32.mrf.mxu0
    %v3493 = vadd.f32 0.0, %v3492
    %v3494 = vpop.f32.mrf.mxu0
    %v3495 = vadd.f32 0.0, %v3494
    %3496 = vdwg.mxu0
    %v3497 = vld [vmem:[#allocation12 + $0x20] sm:$0xff]
    %v3498 = vld [vmem:[#allocation12 + $0x28] sm:$0xff]
    %v3499 = vld [vmem:[#allocation12 + $0x60] sm:$0xff]
    %v3500 = vld [vmem:[#allocation12 + $0x68] sm:$0xff]
    %v3501 = vld [vmem:[#allocation12 + $0xa0] sm:$0xff]
    %v3502 = vld [vmem:[#allocation12 + $0xa8] sm:$0xff]
    %v3503 = vld [vmem:[#allocation12 + $0xe0] sm:$0xff]
    %v3504 = vld [vmem:[#allocation12 + $0xe8] sm:$0xff]
    %v3505 = vld [vmem:[#allocation12 + $0x120] sm:$0xff]
    %v3506 = vld [vmem:[#allocation12 + $0x128] sm:$0xff]
    %v3507 = vld [vmem:[#allocation12 + $0x160] sm:$0xff]
    %v3508 = vld [vmem:[#allocation12 + $0x168] sm:$0xff]
    %v3509 = vld [vmem:[#allocation12 + $0x1a0] sm:$0xff]
    %v3510 = vld [vmem:[#allocation12 + $0x1a8] sm:$0xff]
    %v3511 = vld [vmem:[#allocation12 + $0x1e0] sm:$0xff]
    %v3512 = vld [vmem:[#allocation12 + $0x1e8] sm:$0xff]
    %v3513 = vld [vmem:[#allocation12 + $0x220] sm:$0xff]
    %v3514 = vld [vmem:[#allocation12 + $0x228] sm:$0xff]
    %v3515 = vld [vmem:[#allocation12 + $0x260] sm:$0xff]
    %v3516 = vld [vmem:[#allocation12 + $0x268] sm:$0xff]
    %v3517 = vld [vmem:[#allocation12 + $0x2a0] sm:$0xff]
    %v3518 = vld [vmem:[#allocation12 + $0x2a8] sm:$0xff]
    %v3519 = vld [vmem:[#allocation12 + $0x2e0] sm:$0xff]
    %v3520 = vld [vmem:[#allocation12 + $0x2e8] sm:$0xff]
    %v3521 = vld [vmem:[#allocation12 + $0x320] sm:$0xff]
    %v3522 = vld [vmem:[#allocation12 + $0x328] sm:$0xff]
    %v3523 = vld [vmem:[#allocation12 + $0x360] sm:$0xff]
    %v3524 = vld [vmem:[#allocation12 + $0x368] sm:$0xff]
    %v3525 = vld [vmem:[#allocation12 + $0x3a0] sm:$0xff]
    %v3526 = vld [vmem:[#allocation12 + $0x3a8] sm:$0xff]
    %v3527 = vld [vmem:[#allocation12 + $0x3e0] sm:$0xff]
    %v3528 = vld [vmem:[#allocation12 + $0x3e8] sm:$0xff]
    %v3529 = vld [vmem:[#allocation12 + $0x420] sm:$0xff]
    %v3530 = vld [vmem:[#allocation12 + $0x428] sm:$0xff]
    %v3531 = vld [vmem:[#allocation12 + $0x460] sm:$0xff]
    %v3532 = vld [vmem:[#allocation12 + $0x468] sm:$0xff]
    %v3533 = vld [vmem:[#allocation12 + $0x4a0] sm:$0xff]
    %v3534 = vld [vmem:[#allocation12 + $0x4a8] sm:$0xff]
    %v3535 = vld [vmem:[#allocation12 + $0x4e0] sm:$0xff]
    %v3536 = vld [vmem:[#allocation12 + $0x4e8] sm:$0xff]
    %v3537 = vld [vmem:[#allocation12 + $0x520] sm:$0xff]
    %v3538 = vld [vmem:[#allocation12 + $0x528] sm:$0xff]
    %v3539 = vld [vmem:[#allocation12 + $0x560] sm:$0xff]
    %v3540 = vld [vmem:[#allocation12 + $0x568] sm:$0xff]
    %v3541 = vld [vmem:[#allocation12 + $0x5a0] sm:$0xff]
    %v3542 = vld [vmem:[#allocation12 + $0x5a8] sm:$0xff]
    %v3543 = vld [vmem:[#allocation12 + $0x5e0] sm:$0xff]
    %v3544 = vld [vmem:[#allocation12 + $0x5e8] sm:$0xff]
    %v3545 = vld [vmem:[#allocation12 + $0x620] sm:$0xff]
    %v3546 = vld [vmem:[#allocation12 + $0x628] sm:$0xff]
    %v3547 = vld [vmem:[#allocation12 + $0x660] sm:$0xff]
    %v3548 = vld [vmem:[#allocation12 + $0x668] sm:$0xff]
    %v3549 = vld [vmem:[#allocation12 + $0x6a0] sm:$0xff]
    %v3550 = vld [vmem:[#allocation12 + $0x6a8] sm:$0xff]
    %v3551 = vld [vmem:[#allocation12 + $0x6e0] sm:$0xff]
    %v3552 = vld [vmem:[#allocation12 + $0x6e8] sm:$0xff]
    %v3553 = vld [vmem:[#allocation12 + $0x720] sm:$0xff]
    %v3554 = vld [vmem:[#allocation12 + $0x728] sm:$0xff]
    %v3555 = vld [vmem:[#allocation12 + $0x760] sm:$0xff]
    %v3556 = vld [vmem:[#allocation12 + $0x768] sm:$0xff]
    %v3557 = vld [vmem:[#allocation12 + $0x7a0] sm:$0xff]
    %v3558 = vld [vmem:[#allocation12 + $0x7a8] sm:$0xff]
    %v3559 = vld [vmem:[#allocation12 + $0x7e0] sm:$0xff]
    %v3560 = vld [vmem:[#allocation12 + $0x7e8] sm:$0xff]
    %3561 = vmatprep.subr.mxu0 %v3528
    %3562 = vmatpush1.msra.mxu0 %v3527
    %3563 = vmatprep.subr.mxu0 %v3526
    %3564 = vmatpush1.msra.mxu0 %v3525
    %3565 = vmatprep.subr.mxu0 %v3524
    %3566 = vmatpush1.msra.mxu0 %v3523
    %3567 = vmatprep.subr.mxu0 %v3522
    %3568 = vmatpush1.msra.mxu0 %v3521
    %3569 = vmatprep.subr.mxu0 %v3520
    %3570 = vmatpush1.msra.mxu0 %v3519
    %3571 = vmatprep.subr.mxu0 %v3518
    %3572 = vmatpush1.msra.mxu0 %v3517
    %3573 = vmatprep.subr.mxu0 %v3516
    %3574 = vmatpush1.msra.mxu0 %v3515
    %3575 = vmatprep.subr.mxu0 %v3514
    %3576 = vmatpush1.msra.mxu0 %v3513
    %3577 = vmatprep.subr.mxu0 %v3512
    %3578 = vmatpush1.msra.mxu0 %v3511
    %3579 = vmatprep.subr.mxu0 %v3510
    %3580 = vmatpush1.msra.mxu0 %v3509
    %3581 = vmatprep.subr.mxu0 %v3508
    %3582 = vmatpush1.msra.mxu0 %v3507
    %3583 = vmatprep.subr.mxu0 %v3506
    %3584 = vmatpush1.msra.mxu0 %v3505
    %3585 = vmatprep.subr.mxu0 %v3504
    %3586 = vmatpush1.msra.mxu0 %v3503
    %3587 = vmatprep.subr.mxu0 %v3502
    %3588 = vmatpush1.msra.mxu0 %v3501
    %3589 = vmatprep.subr.mxu0 %v3500
    %3590 = vmatpush1.msra.mxu0 %v3499
    %3591 = vmatprep.subr.mxu0 %v3498
    %3592 = vmatpush1.msra.mxu0 %v3497
    %3593 = vmatprep.subr.mxu0 %v3560
    %3594 = vmatpush2.msra.mxu0 %v3559
    %3595 = vmatprep.subr.mxu0 %v3558
    %3596 = vmatpush2.msra.mxu0 %v3557
    %3597 = vmatprep.subr.mxu0 %v3556
    %3598 = vmatpush2.msra.mxu0 %v3555
    %3599 = vmatprep.subr.mxu0 %v3554
    %3600 = vmatpush2.msra.mxu0 %v3553
    %3601 = vmatprep.subr.mxu0 %v3552
    %3602 = vmatpush2.msra.mxu0 %v3551
    %3603 = vmatprep.subr.mxu0 %v3550
    %3604 = vmatpush2.msra.mxu0 %v3549
    %3605 = vmatprep.subr.mxu0 %v3548
    %3606 = vmatpush2.msra.mxu0 %v3547
    %3607 = vmatprep.subr.mxu0 %v3546
    %3608 = vmatpush2.msra.mxu0 %v3545
    %3609 = vmatprep.subr.mxu0 %v3544
    %3610 = vmatpush2.msra.mxu0 %v3543
    %3611 = vmatprep.subr.mxu0 %v3542
    %3612 = vmatpush2.msra.mxu0 %v3541
    %3613 = vmatprep.subr.mxu0 %v3540
    %3614 = vmatpush2.msra.mxu0 %v3539
    %3615 = vmatprep.subr.mxu0 %v3538
    %3616 = vmatpush2.msra.mxu0 %v3537
    %3617 = vmatprep.subr.mxu0 %v3536
    %3618 = vmatpush2.msra.mxu0 %v3535
    %3619 = vmatprep.subr.mxu0 %v3534
    %3620 = vmatpush2.msra.mxu0 %v3533
    %3621 = vmatprep.subr.mxu0 %v3532
    %3622 = vmatpush2.msra.mxu0 %v3531
    %3623 = vmatprep.subr.mxu0 %v3530
    %3624 = vmatpush2.msra.mxu0 %v3529
    %3625 = vmatprep.mubr.f32.mxu0 %v3241
    %3626 = vmatmul.mubr.f32.gmra.mxu0 %v3240
    %v3627 = vpop.f32.mrf.mxu0
    %v3628 = vadd.f32 0.0, %v3627
    %v3629 = vpop.f32.mrf.mxu0
    %v3630 = vadd.f32 0.0, %v3629
    %3631 = vmatprep.mubr.f32.mxu0 %v3243
    %3632 = vmatmul.mubr.f32.gmra.mxu0 %v3242
    %v3633 = vpop.f32.mrf.mxu0
    %v3634 = vadd.f32 0.0, %v3633
    %v3635 = vpop.f32.mrf.mxu0
    %v3636 = vadd.f32 0.0, %v3635
    %3637 = vmatprep.mubr.f32.mxu0 %v3245
    %3638 = vmatmul.mubr.f32.gmra.mxu0 %v3244
    %v3639 = vpop.f32.mrf.mxu0
    %v3640 = vadd.f32 0.0, %v3639
    %v3641 = vpop.f32.mrf.mxu0
    %v3642 = vadd.f32 0.0, %v3641
    %3643 = vmatprep.mubr.f32.mxu0 %v3247
    %3644 = vmatmul.mubr.f32.gmra.mxu0 %v3246
    %v3645 = vpop.f32.mrf.mxu0
    %v3646 = vadd.f32 0.0, %v3645
    %v3647 = vpop.f32.mrf.mxu0
    %v3648 = vadd.f32 0.0, %v3647
    %3649 = vmatprep.mubr.f32.mxu0 %v3249
    %3650 = vmatmul.mubr.f32.gmra.mxu0 %v3248
    %v3651 = vpop.f32.mrf.mxu0
    %v3652 = vadd.f32 0.0, %v3651
    %v3653 = vpop.f32.mrf.mxu0
    %v3654 = vadd.f32 0.0, %v3653
    %3655 = vmatprep.mubr.f32.mxu0 %v3251
    %3656 = vmatmul.mubr.f32.gmra.mxu0 %v3250
    %v3657 = vpop.f32.mrf.mxu0
    %v3658 = vadd.f32 0.0, %v3657
    %v3659 = vpop.f32.mrf.mxu0
    %v3660 = vadd.f32 0.0, %v3659
    %3661 = vmatprep.mubr.f32.mxu0 %v3253
    %3662 = vmatmul.mubr.f32.gmra.mxu0 %v3252
    %v3663 = vpop.f32.mrf.mxu0
    %v3664 = vadd.f32 0.0, %v3663
    %v3665 = vpop.f32.mrf.mxu0
    %v3666 = vadd.f32 0.0, %v3665
    %3667 = vmatprep.mubr.f32.mxu0 %v3255
    %3668 = vmatmul.mubr.f32.gmra.mxu0 %v3254
    %v3669 = vpop.f32.mrf.mxu0
    %v3670 = vadd.f32 0.0, %v3669
    %v3671 = vpop.f32.mrf.mxu0
    %v3672 = vadd.f32 0.0, %v3671
    %3673 = vmatprep.mubr.f32.mxu0 %v3257
    %3674 = vmatmul.mubr.f32.gmra.mxu0 %v3256
    %v3675 = vpop.f32.mrf.mxu0
    %v3676 = vadd.f32 0.0, %v3675
    %v3677 = vpop.f32.mrf.mxu0
    %v3678 = vadd.f32 0.0, %v3677
    %3679 = vmatprep.mubr.f32.mxu0 %v3259
    %3680 = vmatmul.mubr.f32.gmra.mxu0 %v3258
    %v3681 = vpop.f32.mrf.mxu0
    %v3682 = vadd.f32 0.0, %v3681
    %v3683 = vpop.f32.mrf.mxu0
    %v3684 = vadd.f32 0.0, %v3683
    %3685 = vmatprep.mubr.f32.mxu0 %v3261
    %3686 = vmatmul.mubr.f32.gmra.mxu0 %v3260
    %v3687 = vpop.f32.mrf.mxu0
    %v3688 = vadd.f32 0.0, %v3687
    %v3689 = vpop.f32.mrf.mxu0
    %v3690 = vadd.f32 0.0, %v3689
    %3691 = vmatprep.mubr.f32.mxu0 %v3263
    %3692 = vmatmul.mubr.f32.gmra.mxu0 %v3262
    %v3693 = vpop.f32.mrf.mxu0
    %v3694 = vadd.f32 0.0, %v3693
    %v3695 = vpop.f32.mrf.mxu0
    %v3696 = vadd.f32 0.0, %v3695
    %3697 = vmatprep.mubr.f32.mxu0 %v3265
    %3698 = vmatmul.mubr.f32.gmra.mxu0 %v3264
    %v3699 = vpop.f32.mrf.mxu0
    %v3700 = vadd.f32 0.0, %v3699
    %v3701 = vpop.f32.mrf.mxu0
    %v3702 = vadd.f32 0.0, %v3701
    %3703 = vmatprep.mubr.f32.mxu0 %v3267
    %3704 = vmatmul.mubr.f32.gmra.mxu0 %v3266
    %v3705 = vpop.f32.mrf.mxu0
    %v3706 = vadd.f32 0.0, %v3705
    %v3707 = vpop.f32.mrf.mxu0
    %v3708 = vadd.f32 0.0, %v3707
    %3709 = vmatprep.mubr.f32.mxu0 %v3269
    %3710 = vmatmul.mubr.f32.gmra.mxu0 %v3268
    %v3711 = vpop.f32.mrf.mxu0
    %v3712 = vadd.f32 0.0, %v3711
    %v3713 = vpop.f32.mrf.mxu0
    %v3714 = vadd.f32 0.0, %v3713
    %3715 = vmatprep.mubr.f32.mxu0 %v3271
    %3716 = vmatmul.mubr.f32.gmra.mxu0 %v3270
    %v3717 = vpop.f32.mrf.mxu0
    %v3718 = vadd.f32 0.0, %v3717
    %v3719 = vpop.f32.mrf.mxu0
    %v3720 = vadd.f32 0.0, %v3719
    %3721 = vdwg.mxu0
    %v3722 = vxor.u32 %v3403, 2147483648
    %v3723 = vxor.u32 %v3405, 2147483648
    %v3724 = vxor.u32 %v3409, 2147483648
    %v3725 = vxor.u32 %v3411, 2147483648
    %v3726 = vxor.u32 %v3415, 2147483648
    %v3727 = vxor.u32 %v3417, 2147483648
    %v3728 = vxor.u32 %v3421, 2147483648
    %v3729 = vxor.u32 %v3423, 2147483648
    %v3730 = vxor.u32 %v3427, 2147483648
    %v3731 = vxor.u32 %v3429, 2147483648
    %v3732 = vxor.u32 %v3433, 2147483648
    %v3733 = vxor.u32 %v3435, 2147483648
    %v3734 = vxor.u32 %v3439, 2147483648
    %v3735 = vxor.u32 %v3441, 2147483648
    %v3736 = vxor.u32 %v3445, 2147483648
    %v3737 = vxor.u32 %v3447, 2147483648
    %v3738 = vxor.u32 %v3451, 2147483648
    %v3739 = vxor.u32 %v3453, 2147483648
    %v3740 = vxor.u32 %v3457, 2147483648
    %v3741 = vxor.u32 %v3459, 2147483648
    %v3742 = vxor.u32 %v3463, 2147483648
    %v3743 = vxor.u32 %v3465, 2147483648
    %v3744 = vxor.u32 %v3469, 2147483648
    %v3745 = vxor.u32 %v3471, 2147483648
    %v3746 = vxor.u32 %v3475, 2147483648
    %v3747 = vxor.u32 %v3477, 2147483648
    %v3748 = vxor.u32 %v3481, 2147483648
    %v3749 = vxor.u32 %v3483, 2147483648
    %v3750 = vxor.u32 %v3487, 2147483648
    %v3751 = vxor.u32 %v3489, 2147483648
    %v3752 = vxor.u32 %v3493, 2147483648
    %v3753 = vxor.u32 %v3495, 2147483648
    %v3754 = vmul.f32 %v3722, 1.442695
    %v3755 = vpow.pop %v3754
    %v3756 = vmul.f32 %v3723, 1.442695
    %v3757 = vpow.pop %v3756
    %v3758 = vmul.f32 %v3724, 1.442695
    %v3759 = vpow.pop %v3758
    %v3760 = vmul.f32 %v3725, 1.442695
    %v3761 = vpow.pop %v3760
    %v3762 = vmul.f32 %v3726, 1.442695
    %v3763 = vpow.pop %v3762
    %v3764 = vmul.f32 %v3727, 1.442695
    %v3765 = vpow.pop %v3764
    %v3766 = vmul.f32 %v3728, 1.442695
    %v3767 = vpow.pop %v3766
    %v3768 = vmul.f32 %v3729, 1.442695
    %v3769 = vpow.pop %v3768
    %v3770 = vmul.f32 %v3730, 1.442695
    %v3771 = vpow.pop %v3770
    %v3772 = vmul.f32 %v3731, 1.442695
    %v3773 = vpow.pop %v3772
    %v3774 = vmul.f32 %v3732, 1.442695
    %v3775 = vpow.pop %v3774
    %v3776 = vmul.f32 %v3733, 1.442695
    %v3777 = vpow.pop %v3776
    %v3778 = vmul.f32 %v3734, 1.442695
    %v3779 = vpow.pop %v3778
    %v3780 = vmul.f32 %v3735, 1.442695
    %v3781 = vpow.pop %v3780
    %v3782 = vmul.f32 %v3736, 1.442695
    %v3783 = vpow.pop %v3782
    %v3784 = vmul.f32 %v3737, 1.442695
    %v3785 = vpow.pop %v3784
    %v3786 = vmul.f32 %v3738, 1.442695
    %v3787 = vpow.pop %v3786
    %v3788 = vmul.f32 %v3739, 1.442695
    %v3789 = vpow.pop %v3788
    %v3790 = vmul.f32 %v3740, 1.442695
    %v3791 = vpow.pop %v3790
    %v3792 = vmul.f32 %v3741, 1.442695
    %v3793 = vpow.pop %v3792
    %v3794 = vmul.f32 %v3742, 1.442695
    %v3795 = vpow.pop %v3794
    %v3796 = vmul.f32 %v3743, 1.442695
    %v3797 = vpow.pop %v3796
    %v3798 = vmul.f32 %v3744, 1.442695
    %v3799 = vpow.pop %v3798
    %v3800 = vmul.f32 %v3745, 1.442695
    %v3801 = vpow.pop %v3800
    %v3802 = vmul.f32 %v3746, 1.442695
    %v3803 = vpow.pop %v3802
    %v3804 = vmul.f32 %v3747, 1.442695
    %v3805 = vpow.pop %v3804
    %v3806 = vmul.f32 %v3748, 1.442695
    %v3807 = vpow.pop %v3806
    %v3808 = vmul.f32 %v3749, 1.442695
    %v3809 = vpow.pop %v3808
    %v3810 = vmul.f32 %v3750, 1.442695
    %v3811 = vpow.pop %v3810
    %v3812 = vmul.f32 %v3751, 1.442695
    %v3813 = vpow.pop %v3812
    %v3814 = vmul.f32 %v3752, 1.442695
    %v3815 = vpow.pop %v3814
    %v3816 = vmul.f32 %v3753, 1.442695
    %v3817 = vpow.pop %v3816
    %v3818 = vadd.f32 %v3755, 1.0
    %v3819 = vadd.f32 %v3757, 1.0
    %v3820 = vadd.f32 %v3759, 1.0
    %v3821 = vadd.f32 %v3761, 1.0
    %v3822 = vadd.f32 %v3763, 1.0
    %v3823 = vadd.f32 %v3765, 1.0
    %v3824 = vadd.f32 %v3767, 1.0
    %v3825 = vadd.f32 %v3769, 1.0
    %v3826 = vadd.f32 %v3771, 1.0
    %v3827 = vadd.f32 %v3773, 1.0
    %v3828 = vadd.f32 %v3775, 1.0
    %v3829 = vadd.f32 %v3777, 1.0
    %v3830 = vadd.f32 %v3779, 1.0
    %v3831 = vadd.f32 %v3781, 1.0
    %v3832 = vadd.f32 %v3783, 1.0
    %v3833 = vadd.f32 %v3785, 1.0
    %v3834 = vadd.f32 %v3787, 1.0
    %v3835 = vadd.f32 %v3789, 1.0
    %v3836 = vadd.f32 %v3791, 1.0
    %v3837 = vadd.f32 %v3793, 1.0
    %v3838 = vadd.f32 %v3795, 1.0
    %v3839 = vadd.f32 %v3797, 1.0
    %v3840 = vadd.f32 %v3799, 1.0
    %v3841 = vadd.f32 %v3801, 1.0
    %v3842 = vadd.f32 %v3803, 1.0
    %v3843 = vadd.f32 %v3805, 1.0
    %v3844 = vadd.f32 %v3807, 1.0
    %v3845 = vadd.f32 %v3809, 1.0
    %v3846 = vadd.f32 %v3811, 1.0
    %v3847 = vadd.f32 %v3813, 1.0
    %v3848 = vadd.f32 %v3815, 1.0
    %v3849 = vadd.f32 %v3817, 1.0
    %v3850 = vrcp.pop %v3818
    %v3851 = vmul.f32 1.0, %v3850
    %v3852 = vrcp.pop %v3819
    %v3853 = vmul.f32 1.0, %v3852
    %v3854 = vrcp.pop %v3820
    %v3855 = vmul.f32 1.0, %v3854
    %v3856 = vrcp.pop %v3821
    %v3857 = vmul.f32 1.0, %v3856
    %v3858 = vrcp.pop %v3822
    %v3859 = vmul.f32 1.0, %v3858
    %v3860 = vrcp.pop %v3823
    %v3861 = vmul.f32 1.0, %v3860
    %v3862 = vrcp.pop %v3824
    %v3863 = vmul.f32 1.0, %v3862
    %v3864 = vrcp.pop %v3825
    %v3865 = vmul.f32 1.0, %v3864
    %v3866 = vrcp.pop %v3826
    %v3867 = vmul.f32 1.0, %v3866
    %v3868 = vrcp.pop %v3827
    %v3869 = vmul.f32 1.0, %v3868
    %v3870 = vrcp.pop %v3828
    %v3871 = vmul.f32 1.0, %v3870
    %v3872 = vrcp.pop %v3829
    %v3873 = vmul.f32 1.0, %v3872
    %v3874 = vrcp.pop %v3830
    %v3875 = vmul.f32 1.0, %v3874
    %v3876 = vrcp.pop %v3831
    %v3877 = vmul.f32 1.0, %v3876
    %v3878 = vrcp.pop %v3832
    %v3879 = vmul.f32 1.0, %v3878
    %v3880 = vrcp.pop %v3833
    %v3881 = vmul.f32 1.0, %v3880
    %v3882 = vrcp.pop %v3834
    %v3883 = vmul.f32 1.0, %v3882
    %v3884 = vrcp.pop %v3835
    %v3885 = vmul.f32 1.0, %v3884
    %v3886 = vrcp.pop %v3836
    %v3887 = vmul.f32 1.0, %v3886
    %v3888 = vrcp.pop %v3837
    %v3889 = vmul.f32 1.0, %v3888
    %v3890 = vrcp.pop %v3838
    %v3891 = vmul.f32 1.0, %v3890
    %v3892 = vrcp.pop %v3839
    %v3893 = vmul.f32 1.0, %v3892
    %v3894 = vrcp.pop %v3840
    %v3895 = vmul.f32 1.0, %v3894
    %v3896 = vrcp.pop %v3841
    %v3897 = vmul.f32 1.0, %v3896
    %v3898 = vrcp.pop %v3842
    %v3899 = vmul.f32 1.0, %v3898
    %v3900 = vrcp.pop %v3843
    %v3901 = vmul.f32 1.0, %v3900
    %v3902 = vrcp.pop %v3844
    %v3903 = vmul.f32 1.0, %v3902
    %v3904 = vrcp.pop %v3845
    %v3905 = vmul.f32 1.0, %v3904
    %v3906 = vrcp.pop %v3846
    %v3907 = vmul.f32 1.0, %v3906
    %v3908 = vrcp.pop %v3847
    %v3909 = vmul.f32 1.0, %v3908
    %v3910 = vrcp.pop %v3848
    %v3911 = vmul.f32 1.0, %v3910
    %v3912 = vrcp.pop %v3849
    %v3913 = vmul.f32 1.0, %v3912
    %v3914 = vmul.f32 %v3403, %v3851
    %v3915 = vmul.f32 %v3405, %v3853
    %v3916 = vmul.f32 %v3409, %v3855
    %v3917 = vmul.f32 %v3411, %v3857
    %v3918 = vmul.f32 %v3415, %v3859
    %v3919 = vmul.f32 %v3417, %v3861
    %v3920 = vmul.f32 %v3421, %v3863
    %v3921 = vmul.f32 %v3423, %v3865
    %v3922 = vmul.f32 %v3427, %v3867
    %v3923 = vmul.f32 %v3429, %v3869
    %v3924 = vmul.f32 %v3433, %v3871
    %v3925 = vmul.f32 %v3435, %v3873
    %v3926 = vmul.f32 %v3439, %v3875
    %v3927 = vmul.f32 %v3441, %v3877
    %v3928 = vmul.f32 %v3445, %v3879
    %v3929 = vmul.f32 %v3447, %v3881
    %v3930 = vmul.f32 %v3451, %v3883
    %v3931 = vmul.f32 %v3453, %v3885
    %v3932 = vmul.f32 %v3457, %v3887
    %v3933 = vmul.f32 %v3459, %v3889
    %v3934 = vmul.f32 %v3463, %v3891
    %v3935 = vmul.f32 %v3465, %v3893
    %v3936 = vmul.f32 %v3469, %v3895
    %v3937 = vmul.f32 %v3471, %v3897
    %v3938 = vmul.f32 %v3475, %v3899
    %v3939 = vmul.f32 %v3477, %v3901
    %v3940 = vmul.f32 %v3481, %v3903
    %v3941 = vmul.f32 %v3483, %v3905
    %v3942 = vmul.f32 %v3487, %v3907
    %v3943 = vmul.f32 %v3489, %v3909
    %v3944 = vmul.f32 %v3493, %v3911
    %v3945 = vmul.f32 %v3495, %v3913
    %v3946 = vmul.f32 %v3914, %v3628
    %v3947 = vmul.f32 %v3915, %v3630
    %v3948 = vmul.f32 %v3916, %v3634
    %v3949 = vmul.f32 %v3917, %v3636
    %v3950 = vmul.f32 %v3918, %v3640
    %v3951 = vmul.f32 %v3919, %v3642
    %v3952 = vmul.f32 %v3920, %v3646
    %v3953 = vmul.f32 %v3921, %v3648
    %v3954 = vmul.f32 %v3922, %v3652
    %v3955 = vmul.f32 %v3923, %v3654
    %v3956 = vmul.f32 %v3924, %v3658
    %v3957 = vmul.f32 %v3925, %v3660
    %v3958 = vmul.f32 %v3926, %v3664
    %v3959 = vmul.f32 %v3927, %v3666
    %v3960 = vmul.f32 %v3928, %v3670
    %v3961 = vmul.f32 %v3929, %v3672
    %v3962 = vmul.f32 %v3930, %v3676
    %v3963 = vmul.f32 %v3931, %v3678
    %v3964 = vmul.f32 %v3932, %v3682
    %v3965 = vmul.f32 %v3933, %v3684
    %v3966 = vmul.f32 %v3934, %v3688
    %v3967 = vmul.f32 %v3935, %v3690
    %v3968 = vmul.f32 %v3936, %v3694
    %v3969 = vmul.f32 %v3937, %v3696
    %v3970 = vmul.f32 %v3938, %v3700
    %v3971 = vmul.f32 %v3939, %v3702
    %v3972 = vmul.f32 %v3940, %v3706
    %v3973 = vmul.f32 %v3941, %v3708
    %v3974 = vmul.f32 %v3942, %v3712
    %v3975 = vmul.f32 %v3943, %v3714
    %v3976 = vmul.f32 %v3944, %v3718
    %v3977 = vmul.f32 %v3945, %v3720
    %v3978 = vld [vmem:[#allocation14] sm:$0xff]
    %v3979 = vld [vmem:[#allocation14 + $0x8] sm:$0xff]
    %v3980 = vld [vmem:[#allocation14 + $0x10] sm:$0xff]
    %v3981 = vld [vmem:[#allocation14 + $0x18] sm:$0xff]
    %v3982 = vld [vmem:[#allocation14 + $0x20] sm:$0xff]
    %v3983 = vld [vmem:[#allocation14 + $0x28] sm:$0xff]
    %v3984 = vld [vmem:[#allocation14 + $0x30] sm:$0xff]
    %v3985 = vld [vmem:[#allocation14 + $0x38] sm:$0xff]
    %v3986 = vld [vmem:[#allocation14 + $0x40] sm:$0xff]
    %v3987 = vld [vmem:[#allocation14 + $0x48] sm:$0xff]
    %v3988 = vld [vmem:[#allocation14 + $0x50] sm:$0xff]
    %v3989 = vld [vmem:[#allocation14 + $0x58] sm:$0xff]
    %v3990 = vld [vmem:[#allocation14 + $0x60] sm:$0xff]
    %v3991 = vld [vmem:[#allocation14 + $0x68] sm:$0xff]
    %v3992 = vld [vmem:[#allocation14 + $0x70] sm:$0xff]
    %v3993 = vld [vmem:[#allocation14 + $0x78] sm:$0xff]
    %v3994 = vld [vmem:[#allocation14 + $0x80] sm:$0xff]
    %v3995 = vld [vmem:[#allocation14 + $0x88] sm:$0xff]
    %v3996 = vld [vmem:[#allocation14 + $0x90] sm:$0xff]
    %v3997 = vld [vmem:[#allocation14 + $0x98] sm:$0xff]
    %v3998 = vld [vmem:[#allocation14 + $0xa0] sm:$0xff]
    %v3999 = vld [vmem:[#allocation14 + $0xa8] sm:$0xff]
    %v4000 = vld [vmem:[#allocation14 + $0xb0] sm:$0xff]
    %v4001 = vld [vmem:[#allocation14 + $0xb8] sm:$0xff]
    %v4002 = vld [vmem:[#allocation14 + $0xc0] sm:$0xff]
    %v4003 = vld [vmem:[#allocation14 + $0xc8] sm:$0xff]
    %v4004 = vld [vmem:[#allocation14 + $0xd0] sm:$0xff]
    %v4005 = vld [vmem:[#allocation14 + $0xd8] sm:$0xff]
    %v4006 = vld [vmem:[#allocation14 + $0xe0] sm:$0xff]
    %v4007 = vld [vmem:[#allocation14 + $0xe8] sm:$0xff]
    %v4008 = vld [vmem:[#allocation14 + $0xf0] sm:$0xff]
    %v4009 = vld [vmem:[#allocation14 + $0xf8] sm:$0xff]
    %v4010 = vld [vmem:[#allocation14 + $0x100] sm:$0xff]
    %v4011 = vld [vmem:[#allocation14 + $0x108] sm:$0xff]
    %v4012 = vld [vmem:[#allocation14 + $0x110] sm:$0xff]
    %v4013 = vld [vmem:[#allocation14 + $0x118] sm:$0xff]
    %v4014 = vld [vmem:[#allocation14 + $0x120] sm:$0xff]
    %v4015 = vld [vmem:[#allocation14 + $0x128] sm:$0xff]
    %v4016 = vld [vmem:[#allocation14 + $0x130] sm:$0xff]
    %v4017 = vld [vmem:[#allocation14 + $0x138] sm:$0xff]
    %v4018 = vld [vmem:[#allocation14 + $0x140] sm:$0xff]
    %v4019 = vld [vmem:[#allocation14 + $0x148] sm:$0xff]
    %v4020 = vld [vmem:[#allocation14 + $0x150] sm:$0xff]
    %v4021 = vld [vmem:[#allocation14 + $0x158] sm:$0xff]
    %v4022 = vld [vmem:[#allocation14 + $0x160] sm:$0xff]
    %v4023 = vld [vmem:[#allocation14 + $0x168] sm:$0xff]
    %v4024 = vld [vmem:[#allocation14 + $0x170] sm:$0xff]
    %v4025 = vld [vmem:[#allocation14 + $0x178] sm:$0xff]
    %v4026 = vld [vmem:[#allocation14 + $0x180] sm:$0xff]
    %v4027 = vld [vmem:[#allocation14 + $0x188] sm:$0xff]
    %v4028 = vld [vmem:[#allocation14 + $0x190] sm:$0xff]
    %v4029 = vld [vmem:[#allocation14 + $0x198] sm:$0xff]
    %v4030 = vld [vmem:[#allocation14 + $0x1a0] sm:$0xff]
    %v4031 = vld [vmem:[#allocation14 + $0x1a8] sm:$0xff]
    %v4032 = vld [vmem:[#allocation14 + $0x1b0] sm:$0xff]
    %v4033 = vld [vmem:[#allocation14 + $0x1b8] sm:$0xff]
    %v4034 = vld [vmem:[#allocation14 + $0x1c0] sm:$0xff]
    %v4035 = vld [vmem:[#allocation14 + $0x1c8] sm:$0xff]
    %v4036 = vld [vmem:[#allocation14 + $0x1d0] sm:$0xff]
    %v4037 = vld [vmem:[#allocation14 + $0x1d8] sm:$0xff]
    %v4038 = vld [vmem:[#allocation14 + $0x1e0] sm:$0xff]
    %v4039 = vld [vmem:[#allocation14 + $0x1e8] sm:$0xff]
    %v4040 = vld [vmem:[#allocation14 + $0x1f0] sm:$0xff]
    %v4041 = vld [vmem:[#allocation14 + $0x1f8] sm:$0xff]
    %4042 = vmatprep.subr.mxu0 %v4009
    %4043 = vmatpush1.msra.mxu0 %v4008
    %4044 = vmatprep.subr.mxu0 %v4007
    %4045 = vmatpush1.msra.mxu0 %v4006
    %4046 = vmatprep.subr.mxu0 %v4005
    %4047 = vmatpush1.msra.mxu0 %v4004
    %4048 = vmatprep.subr.mxu0 %v4003
    %4049 = vmatpush1.msra.mxu0 %v4002
    %4050 = vmatprep.subr.mxu0 %v4001
    %4051 = vmatpush1.msra.mxu0 %v4000
    %4052 = vmatprep.subr.mxu0 %v3999
    %4053 = vmatpush1.msra.mxu0 %v3998
    %4054 = vmatprep.subr.mxu0 %v3997
    %4055 = vmatpush1.msra.mxu0 %v3996
    %4056 = vmatprep.subr.mxu0 %v3995
    %4057 = vmatpush1.msra.mxu0 %v3994
    %4058 = vmatprep.subr.mxu0 %v3993
    %4059 = vmatpush1.msra.mxu0 %v3992
    %4060 = vmatprep.subr.mxu0 %v3991
    %4061 = vmatpush1.msra.mxu0 %v3990
    %4062 = vmatprep.subr.mxu0 %v3989
    %4063 = vmatpush1.msra.mxu0 %v3988
    %4064 = vmatprep.subr.mxu0 %v3987
    %4065 = vmatpush1.msra.mxu0 %v3986
    %4066 = vmatprep.subr.mxu0 %v3985
    %4067 = vmatpush1.msra.mxu0 %v3984
    %4068 = vmatprep.subr.mxu0 %v3983
    %4069 = vmatpush1.msra.mxu0 %v3982
    %4070 = vmatprep.subr.mxu0 %v3981
    %4071 = vmatpush1.msra.mxu0 %v3980
    %4072 = vmatprep.subr.mxu0 %v3979
    %4073 = vmatpush1.msra.mxu0 %v3978
    %4074 = vmatprep.subr.mxu0 %v4041
    %4075 = vmatpush2.msra.mxu0 %v4040
    %4076 = vmatprep.subr.mxu0 %v4039
    %4077 = vmatpush2.msra.mxu0 %v4038
    %4078 = vmatprep.subr.mxu0 %v4037
    %4079 = vmatpush2.msra.mxu0 %v4036
    %4080 = vmatprep.subr.mxu0 %v4035
    %4081 = vmatpush2.msra.mxu0 %v4034
    %4082 = vmatprep.subr.mxu0 %v4033
    %4083 = vmatpush2.msra.mxu0 %v4032
    %4084 = vmatprep.subr.mxu0 %v4031
    %4085 = vmatpush2.msra.mxu0 %v4030
    %4086 = vmatprep.subr.mxu0 %v4029
    %4087 = vmatpush2.msra.mxu0 %v4028
    %4088 = vmatprep.subr.mxu0 %v4027
    %4089 = vmatpush2.msra.mxu0 %v4026
    %4090 = vmatprep.subr.mxu0 %v4025
    %4091 = vmatpush2.msra.mxu0 %v4024
    %4092 = vmatprep.subr.mxu0 %v4023
    %4093 = vmatpush2.msra.mxu0 %v4022
    %4094 = vmatprep.subr.mxu0 %v4021
    %4095 = vmatpush2.msra.mxu0 %v4020
    %4096 = vmatprep.subr.mxu0 %v4019
    %4097 = vmatpush2.msra.mxu0 %v4018
    %4098 = vmatprep.subr.mxu0 %v4017
    %4099 = vmatpush2.msra.mxu0 %v4016
    %4100 = vmatprep.subr.mxu0 %v4015
    %4101 = vmatpush2.msra.mxu0 %v4014
    %4102 = vmatprep.subr.mxu0 %v4013
    %4103 = vmatpush2.msra.mxu0 %v4012
    %4104 = vmatprep.subr.mxu0 %v4011
    %4105 = vmatpush2.msra.mxu0 %v4010
    %4106 = vmatprep.mubr.f32.mxu0 %v3947
    %4107 = vmatmul.mubr.f32.gmra.mxu0 %v3946
    %v4108 = vpop.f32.mrf.mxu0
    %v4109 = vadd.f32 0.0, %v4108
    %v4110 = vpop.f32.mrf.mxu0
    %v4111 = vadd.f32 0.0, %v4110
    %4112 = vmatprep.mubr.f32.mxu0 %v3949
    %4113 = vmatmul.mubr.f32.gmra.mxu0 %v3948
    %v4114 = vpop.f32.mrf.mxu0
    %v4115 = vadd.f32 0.0, %v4114
    %v4116 = vpop.f32.mrf.mxu0
    %v4117 = vadd.f32 0.0, %v4116
    %4118 = vmatprep.mubr.f32.mxu0 %v3951
    %4119 = vmatmul.mubr.f32.gmra.mxu0 %v3950
    %v4120 = vpop.f32.mrf.mxu0
    %v4121 = vadd.f32 0.0, %v4120
    %v4122 = vpop.f32.mrf.mxu0
    %v4123 = vadd.f32 0.0, %v4122
    %4124 = vmatprep.mubr.f32.mxu0 %v3953
    %4125 = vmatmul.mubr.f32.gmra.mxu0 %v3952
    %v4126 = vpop.f32.mrf.mxu0
    %v4127 = vadd.f32 0.0, %v4126
    %v4128 = vpop.f32.mrf.mxu0
    %v4129 = vadd.f32 0.0, %v4128
    %4130 = vmatprep.mubr.f32.mxu0 %v3955
    %4131 = vmatmul.mubr.f32.gmra.mxu0 %v3954
    %v4132 = vpop.f32.mrf.mxu0
    %v4133 = vadd.f32 0.0, %v4132
    %v4134 = vpop.f32.mrf.mxu0
    %v4135 = vadd.f32 0.0, %v4134
    %4136 = vmatprep.mubr.f32.mxu0 %v3957
    %4137 = vmatmul.mubr.f32.gmra.mxu0 %v3956
    %v4138 = vpop.f32.mrf.mxu0
    %v4139 = vadd.f32 0.0, %v4138
    %v4140 = vpop.f32.mrf.mxu0
    %v4141 = vadd.f32 0.0, %v4140
    %4142 = vmatprep.mubr.f32.mxu0 %v3959
    %4143 = vmatmul.mubr.f32.gmra.mxu0 %v3958
    %v4144 = vpop.f32.mrf.mxu0
    %v4145 = vadd.f32 0.0, %v4144
    %v4146 = vpop.f32.mrf.mxu0
    %v4147 = vadd.f32 0.0, %v4146
    %4148 = vmatprep.mubr.f32.mxu0 %v3961
    %4149 = vmatmul.mubr.f32.gmra.mxu0 %v3960
    %v4150 = vpop.f32.mrf.mxu0
    %v4151 = vadd.f32 0.0, %v4150
    %v4152 = vpop.f32.mrf.mxu0
    %v4153 = vadd.f32 0.0, %v4152
    %4154 = vmatprep.mubr.f32.mxu0 %v3963
    %4155 = vmatmul.mubr.f32.gmra.mxu0 %v3962
    %v4156 = vpop.f32.mrf.mxu0
    %v4157 = vadd.f32 0.0, %v4156
    %v4158 = vpop.f32.mrf.mxu0
    %v4159 = vadd.f32 0.0, %v4158
    %4160 = vmatprep.mubr.f32.mxu0 %v3965
    %4161 = vmatmul.mubr.f32.gmra.mxu0 %v3964
    %v4162 = vpop.f32.mrf.mxu0
    %v4163 = vadd.f32 0.0, %v4162
    %v4164 = vpop.f32.mrf.mxu0
    %v4165 = vadd.f32 0.0, %v4164
    %4166 = vmatprep.mubr.f32.mxu0 %v3967
    %4167 = vmatmul.mubr.f32.gmra.mxu0 %v3966
    %v4168 = vpop.f32.mrf.mxu0
    %v4169 = vadd.f32 0.0, %v4168
    %v4170 = vpop.f32.mrf.mxu0
    %v4171 = vadd.f32 0.0, %v4170
    %4172 = vmatprep.mubr.f32.mxu0 %v3969
    %4173 = vmatmul.mubr.f32.gmra.mxu0 %v3968
    %v4174 = vpop.f32.mrf.mxu0
    %v4175 = vadd.f32 0.0, %v4174
    %v4176 = vpop.f32.mrf.mxu0
    %v4177 = vadd.f32 0.0, %v4176
    %4178 = vmatprep.mubr.f32.mxu0 %v3971
    %4179 = vmatmul.mubr.f32.gmra.mxu0 %v3970
    %v4180 = vpop.f32.mrf.mxu0
    %v4181 = vadd.f32 0.0, %v4180
    %v4182 = vpop.f32.mrf.mxu0
    %v4183 = vadd.f32 0.0, %v4182
    %4184 = vmatprep.mubr.f32.mxu0 %v3973
    %4185 = vmatmul.mubr.f32.gmra.mxu0 %v3972
    %v4186 = vpop.f32.mrf.mxu0
    %v4187 = vadd.f32 0.0, %v4186
    %v4188 = vpop.f32.mrf.mxu0
    %v4189 = vadd.f32 0.0, %v4188
    %4190 = vmatprep.mubr.f32.mxu0 %v3975
    %4191 = vmatmul.mubr.f32.gmra.mxu0 %v3974
    %v4192 = vpop.f32.mrf.mxu0
    %v4193 = vadd.f32 0.0, %v4192
    %v4194 = vpop.f32.mrf.mxu0
    %v4195 = vadd.f32 0.0, %v4194
    %4196 = vmatprep.mubr.f32.mxu0 %v3977
    %4197 = vmatmul.mubr.f32.gmra.mxu0 %v3976
    %v4198 = vpop.f32.mrf.mxu0
    %v4199 = vadd.f32 0.0, %v4198
    %v4200 = vpop.f32.mrf.mxu0
    %v4201 = vadd.f32 0.0, %v4200
    %4202 = vdwg.mxu0
    %v4203 = vadd.f32 %v3036, %v4109
    %v4204 = vadd.f32 %v3037, %v4111
    %v4205 = vadd.f32 %v3038, %v4115
    %v4206 = vadd.f32 %v3039, %v4117
    %v4207 = vadd.f32 %v3040, %v4121
    %v4208 = vadd.f32 %v3041, %v4123
    %v4209 = vadd.f32 %v3042, %v4127
    %v4210 = vadd.f32 %v3043, %v4129
    %v4211 = vadd.f32 %v3044, %v4133
    %v4212 = vadd.f32 %v3045, %v4135
    %v4213 = vadd.f32 %v3046, %v4139
    %v4214 = vadd.f32 %v3047, %v4141
    %v4215 = vadd.f32 %v3048, %v4145
    %v4216 = vadd.f32 %v3049, %v4147
    %v4217 = vadd.f32 %v3050, %v4151
    %v4218 = vadd.f32 %v3051, %v4153
    %v4219 = vadd.f32 %v3052, %v4157
    %v4220 = vadd.f32 %v3053, %v4159
    %v4221 = vadd.f32 %v3054, %v4163
    %v4222 = vadd.f32 %v3055, %v4165
    %v4223 = vadd.f32 %v3056, %v4169
    %v4224 = vadd.f32 %v3057, %v4171
    %v4225 = vadd.f32 %v3058, %v4175
    %v4226 = vadd.f32 %v3059, %v4177
    %v4227 = vadd.f32 %v3060, %v4181
    %v4228 = vadd.f32 %v3061, %v4183
    %v4229 = vadd.f32 %v3062, %v4187
    %v4230 = vadd.f32 %v3063, %v4189
    %v4231 = vadd.f32 %v3064, %v4193
    %v4232 = vadd.f32 %v3065, %v4195
    %v4233 = vadd.f32 %v3066, %v4199
    %v4234 = vadd.f32 %v3067, %v4201
    %v4235 = vld [vmem:[#allocation12 + $0x10] sm:$0xff]
    %v4236 = vld [vmem:[#allocation12 + $0x18] sm:$0xff]
    %v4237 = vld [vmem:[#allocation12 + $0x50] sm:$0xff]
    %v4238 = vld [vmem:[#allocation12 + $0x58] sm:$0xff]
    %v4239 = vld [vmem:[#allocation12 + $0x90] sm:$0xff]
    %v4240 = vld [vmem:[#allocation12 + $0x98] sm:$0xff]
    %v4241 = vld [vmem:[#allocation12 + $0xd0] sm:$0xff]
    %v4242 = vld [vmem:[#allocation12 + $0xd8] sm:$0xff]
    %v4243 = vld [vmem:[#allocation12 + $0x110] sm:$0xff]
    %v4244 = vld [vmem:[#allocation12 + $0x118] sm:$0xff]
    %v4245 = vld [vmem:[#allocation12 + $0x150] sm:$0xff]
    %v4246 = vld [vmem:[#allocation12 + $0x158] sm:$0xff]
    %v4247 = vld [vmem:[#allocation12 + $0x190] sm:$0xff]
    %v4248 = vld [vmem:[#allocation12 + $0x198] sm:$0xff]
    %v4249 = vld [vmem:[#allocation12 + $0x1d0] sm:$0xff]
    %v4250 = vld [vmem:[#allocation12 + $0x1d8] sm:$0xff]
    %v4251 = vld [vmem:[#allocation12 + $0x210] sm:$0xff]
    %v4252 = vld [vmem:[#allocation12 + $0x218] sm:$0xff]
    %v4253 = vld [vmem:[#allocation12 + $0x250] sm:$0xff]
    %v4254 = vld [vmem:[#allocation12 + $0x258] sm:$0xff]
    %v4255 = vld [vmem:[#allocation12 + $0x290] sm:$0xff]
    %v4256 = vld [vmem:[#allocation12 + $0x298] sm:$0xff]
    %v4257 = vld [vmem:[#allocation12 + $0x2d0] sm:$0xff]
    %v4258 = vld [vmem:[#allocation12 + $0x2d8] sm:$0xff]
    %v4259 = vld [vmem:[#allocation12 + $0x310] sm:$0xff]
    %v4260 = vld [vmem:[#allocation12 + $0x318] sm:$0xff]
    %v4261 = vld [vmem:[#allocation12 + $0x350] sm:$0xff]
    %v4262 = vld [vmem:[#allocation12 + $0x358] sm:$0xff]
    %v4263 = vld [vmem:[#allocation12 + $0x390] sm:$0xff]
    %v4264 = vld [vmem:[#allocation12 + $0x398] sm:$0xff]
    %v4265 = vld [vmem:[#allocation12 + $0x3d0] sm:$0xff]
    %v4266 = vld [vmem:[#allocation12 + $0x3d8] sm:$0xff]
    %v4267 = vld [vmem:[#allocation12 + $0x410] sm:$0xff]
    %v4268 = vld [vmem:[#allocation12 + $0x418] sm:$0xff]
    %v4269 = vld [vmem:[#allocation12 + $0x450] sm:$0xff]
    %v4270 = vld [vmem:[#allocation12 + $0x458] sm:$0xff]
    %v4271 = vld [vmem:[#allocation12 + $0x490] sm:$0xff]
    %v4272 = vld [vmem:[#allocation12 + $0x498] sm:$0xff]
    %v4273 = vld [vmem:[#allocation12 + $0x4d0] sm:$0xff]
    %v4274 = vld [vmem:[#allocation12 + $0x4d8] sm:$0xff]
    %v4275 = vld [vmem:[#allocation12 + $0x510] sm:$0xff]
    %v4276 = vld [vmem:[#allocation12 + $0x518] sm:$0xff]
    %v4277 = vld [vmem:[#allocation12 + $0x550] sm:$0xff]
    %v4278 = vld [vmem:[#allocation12 + $0x558] sm:$0xff]
    %v4279 = vld [vmem:[#allocation12 + $0x590] sm:$0xff]
    %v4280 = vld [vmem:[#allocation12 + $0x598] sm:$0xff]
    %v4281 = vld [vmem:[#allocation12 + $0x5d0] sm:$0xff]
    %v4282 = vld [vmem:[#allocation12 + $0x5d8] sm:$0xff]
    %v4283 = vld [vmem:[#allocation12 + $0x610] sm:$0xff]
    %v4284 = vld [vmem:[#allocation12 + $0x618] sm:$0xff]
    %v4285 = vld [vmem:[#allocation12 + $0x650] sm:$0xff]
    %v4286 = vld [vmem:[#allocation12 + $0x658] sm:$0xff]
    %v4287 = vld [vmem:[#allocation12 + $0x690] sm:$0xff]
    %v4288 = vld [vmem:[#allocation12 + $0x698] sm:$0xff]
    %v4289 = vld [vmem:[#allocation12 + $0x6d0] sm:$0xff]
    %v4290 = vld [vmem:[#allocation12 + $0x6d8] sm:$0xff]
    %v4291 = vld [vmem:[#allocation12 + $0x710] sm:$0xff]
    %v4292 = vld [vmem:[#allocation12 + $0x718] sm:$0xff]
    %v4293 = vld [vmem:[#allocation12 + $0x750] sm:$0xff]
    %v4294 = vld [vmem:[#allocation12 + $0x758] sm:$0xff]
    %v4295 = vld [vmem:[#allocation12 + $0x790] sm:$0xff]
    %v4296 = vld [vmem:[#allocation12 + $0x798] sm:$0xff]
    %v4297 = vld [vmem:[#allocation12 + $0x7d0] sm:$0xff]
    %v4298 = vld [vmem:[#allocation12 + $0x7d8] sm:$0xff]
    %4299 = vmatprep.subr.mxu0 %v4266
    %4300 = vmatpush1.msra.mxu0 %v4265
    %4301 = vmatprep.subr.mxu0 %v4264
    %4302 = vmatpush1.msra.mxu0 %v4263
    %4303 = vmatprep.subr.mxu0 %v4262
    %4304 = vmatpush1.msra.mxu0 %v4261
    %4305 = vmatprep.subr.mxu0 %v4260
    %4306 = vmatpush1.msra.mxu0 %v4259
    %4307 = vmatprep.subr.mxu0 %v4258
    %4308 = vmatpush1.msra.mxu0 %v4257
    %4309 = vmatprep.subr.mxu0 %v4256
    %4310 = vmatpush1.msra.mxu0 %v4255
    %4311 = vmatprep.subr.mxu0 %v4254
    %4312 = vmatpush1.msra.mxu0 %v4253
    %4313 = vmatprep.subr.mxu0 %v4252
    %4314 = vmatpush1.msra.mxu0 %v4251
    %4315 = vmatprep.subr.mxu0 %v4250
    %4316 = vmatpush1.msra.mxu0 %v4249
    %4317 = vmatprep.subr.mxu0 %v4248
    %4318 = vmatpush1.msra.mxu0 %v4247
    %4319 = vmatprep.subr.mxu0 %v4246
    %4320 = vmatpush1.msra.mxu0 %v4245
    %4321 = vmatprep.subr.mxu0 %v4244
    %4322 = vmatpush1.msra.mxu0 %v4243
    %4323 = vmatprep.subr.mxu0 %v4242
    %4324 = vmatpush1.msra.mxu0 %v4241
    %4325 = vmatprep.subr.mxu0 %v4240
    %4326 = vmatpush1.msra.mxu0 %v4239
    %4327 = vmatprep.subr.mxu0 %v4238
    %4328 = vmatpush1.msra.mxu0 %v4237
    %4329 = vmatprep.subr.mxu0 %v4236
    %4330 = vmatpush1.msra.mxu0 %v4235
    %4331 = vmatprep.subr.mxu0 %v4298
    %4332 = vmatpush2.msra.mxu0 %v4297
    %4333 = vmatprep.subr.mxu0 %v4296
    %4334 = vmatpush2.msra.mxu0 %v4295
    %4335 = vmatprep.subr.mxu0 %v4294
    %4336 = vmatpush2.msra.mxu0 %v4293
    %4337 = vmatprep.subr.mxu0 %v4292
    %4338 = vmatpush2.msra.mxu0 %v4291
    %4339 = vmatprep.subr.mxu0 %v4290
    %4340 = vmatpush2.msra.mxu0 %v4289
    %4341 = vmatprep.subr.mxu0 %v4288
    %4342 = vmatpush2.msra.mxu0 %v4287
    %4343 = vmatprep.subr.mxu0 %v4286
    %4344 = vmatpush2.msra.mxu0 %v4285
    %4345 = vmatprep.subr.mxu0 %v4284
    %4346 = vmatpush2.msra.mxu0 %v4283
    %4347 = vmatprep.subr.mxu0 %v4282
    %4348 = vmatpush2.msra.mxu0 %v4281
    %4349 = vmatprep.subr.mxu0 %v4280
    %4350 = vmatpush2.msra.mxu0 %v4279
    %4351 = vmatprep.subr.mxu0 %v4278
    %4352 = vmatpush2.msra.mxu0 %v4277
    %4353 = vmatprep.subr.mxu0 %v4276
    %4354 = vmatpush2.msra.mxu0 %v4275
    %4355 = vmatprep.subr.mxu0 %v4274
    %4356 = vmatpush2.msra.mxu0 %v4273
    %4357 = vmatprep.subr.mxu0 %v4272
    %4358 = vmatpush2.msra.mxu0 %v4271
    %4359 = vmatprep.subr.mxu0 %v4270
    %4360 = vmatpush2.msra.mxu0 %v4269
    %4361 = vmatprep.subr.mxu0 %v4268
    %4362 = vmatpush2.msra.mxu0 %v4267
    %4363 = vmatprep.mubr.f32.mxu0 %v3241
    %4364 = vmatmul.mubr.f32.gmra.mxu0 %v3240
    %v4365 = vpop.f32.mrf.mxu0
    %v4366 = vadd.f32 0.0, %v4365
    %v4367 = vpop.f32.mrf.mxu0
    %v4368 = vadd.f32 0.0, %v4367
    %4369 = vmatprep.mubr.f32.mxu0 %v3243
    %4370 = vmatmul.mubr.f32.gmra.mxu0 %v3242
    %v4371 = vpop.f32.mrf.mxu0
    %v4372 = vadd.f32 0.0, %v4371
    %v4373 = vpop.f32.mrf.mxu0
    %v4374 = vadd.f32 0.0, %v4373
    %4375 = vmatprep.mubr.f32.mxu0 %v3245
    %4376 = vmatmul.mubr.f32.gmra.mxu0 %v3244
    %v4377 = vpop.f32.mrf.mxu0
    %v4378 = vadd.f32 0.0, %v4377
    %v4379 = vpop.f32.mrf.mxu0
    %v4380 = vadd.f32 0.0, %v4379
    %4381 = vmatprep.mubr.f32.mxu0 %v3247
    %4382 = vmatmul.mubr.f32.gmra.mxu0 %v3246
    %v4383 = vpop.f32.mrf.mxu0
    %v4384 = vadd.f32 0.0, %v4383
    %v4385 = vpop.f32.mrf.mxu0
    %v4386 = vadd.f32 0.0, %v4385
    %4387 = vmatprep.mubr.f32.mxu0 %v3249
    %4388 = vmatmul.mubr.f32.gmra.mxu0 %v3248
    %v4389 = vpop.f32.mrf.mxu0
    %v4390 = vadd.f32 0.0, %v4389
    %v4391 = vpop.f32.mrf.mxu0
    %v4392 = vadd.f32 0.0, %v4391
    %4393 = vmatprep.mubr.f32.mxu0 %v3251
    %4394 = vmatmul.mubr.f32.gmra.mxu0 %v3250
    %v4395 = vpop.f32.mrf.mxu0
    %v4396 = vadd.f32 0.0, %v4395
    %v4397 = vpop.f32.mrf.mxu0
    %v4398 = vadd.f32 0.0, %v4397
    %4399 = vmatprep.mubr.f32.mxu0 %v3253
    %4400 = vmatmul.mubr.f32.gmra.mxu0 %v3252
    %v4401 = vpop.f32.mrf.mxu0
    %v4402 = vadd.f32 0.0, %v4401
    %v4403 = vpop.f32.mrf.mxu0
    %v4404 = vadd.f32 0.0, %v4403
    %4405 = vmatprep.mubr.f32.mxu0 %v3255
    %4406 = vmatmul.mubr.f32.gmra.mxu0 %v3254
    %v4407 = vpop.f32.mrf.mxu0
    %v4408 = vadd.f32 0.0, %v4407
    %v4409 = vpop.f32.mrf.mxu0
    %v4410 = vadd.f32 0.0, %v4409
    %4411 = vmatprep.mubr.f32.mxu0 %v3257
    %4412 = vmatmul.mubr.f32.gmra.mxu0 %v3256
    %v4413 = vpop.f32.mrf.mxu0
    %v4414 = vadd.f32 0.0, %v4413
    %v4415 = vpop.f32.mrf.mxu0
    %v4416 = vadd.f32 0.0, %v4415
    %4417 = vmatprep.mubr.f32.mxu0 %v3259
    %4418 = vmatmul.mubr.f32.gmra.mxu0 %v3258
    %v4419 = vpop.f32.mrf.mxu0
    %v4420 = vadd.f32 0.0, %v4419
    %v4421 = vpop.f32.mrf.mxu0
    %v4422 = vadd.f32 0.0, %v4421
    %4423 = vmatprep.mubr.f32.mxu0 %v3261
    %4424 = vmatmul.mubr.f32.gmra.mxu0 %v3260
    %v4425 = vpop.f32.mrf.mxu0
    %v4426 = vadd.f32 0.0, %v4425
    %v4427 = vpop.f32.mrf.mxu0
    %v4428 = vadd.f32 0.0, %v4427
    %4429 = vmatprep.mubr.f32.mxu0 %v3263
    %4430 = vmatmul.mubr.f32.gmra.mxu0 %v3262
    %v4431 = vpop.f32.mrf.mxu0
    %v4432 = vadd.f32 0.0, %v4431
    %v4433 = vpop.f32.mrf.mxu0
    %v4434 = vadd.f32 0.0, %v4433
    %4435 = vmatprep.mubr.f32.mxu0 %v3265
    %4436 = vmatmul.mubr.f32.gmra.mxu0 %v3264
    %v4437 = vpop.f32.mrf.mxu0
    %v4438 = vadd.f32 0.0, %v4437
    %v4439 = vpop.f32.mrf.mxu0
    %v4440 = vadd.f32 0.0, %v4439
    %4441 = vmatprep.mubr.f32.mxu0 %v3267
    %4442 = vmatmul.mubr.f32.gmra.mxu0 %v3266
    %v4443 = vpop.f32.mrf.mxu0
    %v4444 = vadd.f32 0.0, %v4443
    %v4445 = vpop.f32.mrf.mxu0
    %v4446 = vadd.f32 0.0, %v4445
    %4447 = vmatprep.mubr.f32.mxu0 %v3269
    %4448 = vmatmul.mubr.f32.gmra.mxu0 %v3268
    %v4449 = vpop.f32.mrf.mxu0
    %v4450 = vadd.f32 0.0, %v4449
    %v4451 = vpop.f32.mrf.mxu0
    %v4452 = vadd.f32 0.0, %v4451
    %4453 = vmatprep.mubr.f32.mxu0 %v3271
    %4454 = vmatmul.mubr.f32.gmra.mxu0 %v3270
    %v4455 = vpop.f32.mrf.mxu0
    %v4456 = vadd.f32 0.0, %v4455
    %v4457 = vpop.f32.mrf.mxu0
    %v4458 = vadd.f32 0.0, %v4457
    %4459 = vdwg.mxu0
    %v4460 = vld [vmem:[#allocation12 + $0x30] sm:$0xff]
    %v4461 = vld [vmem:[#allocation12 + $0x38] sm:$0xff]
    %v4462 = vld [vmem:[#allocation12 + $0x70] sm:$0xff]
    %v4463 = vld [vmem:[#allocation12 + $0x78] sm:$0xff]
    %v4464 = vld [vmem:[#allocation12 + $0xb0] sm:$0xff]
    %v4465 = vld [vmem:[#allocation12 + $0xb8] sm:$0xff]
    %v4466 = vld [vmem:[#allocation12 + $0xf0] sm:$0xff]
    %v4467 = vld [vmem:[#allocation12 + $0xf8] sm:$0xff]
    %v4468 = vld [vmem:[#allocation12 + $0x130] sm:$0xff]
    %v4469 = vld [vmem:[#allocation12 + $0x138] sm:$0xff]
    %v4470 = vld [vmem:[#allocation12 + $0x170] sm:$0xff]
    %v4471 = vld [vmem:[#allocation12 + $0x178] sm:$0xff]
    %v4472 = vld [vmem:[#allocation12 + $0x1b0] sm:$0xff]
    %v4473 = vld [vmem:[#allocation12 + $0x1b8] sm:$0xff]
    %v4474 = vld [vmem:[#allocation12 + $0x1f0] sm:$0xff]
    %v4475 = vld [vmem:[#allocation12 + $0x1f8] sm:$0xff]
    %v4476 = vld [vmem:[#allocation12 + $0x230] sm:$0xff]
    %v4477 = vld [vmem:[#allocation12 + $0x238] sm:$0xff]
    %v4478 = vld [vmem:[#allocation12 + $0x270] sm:$0xff]
    %v4479 = vld [vmem:[#allocation12 + $0x278] sm:$0xff]
    %v4480 = vld [vmem:[#allocation12 + $0x2b0] sm:$0xff]
    %v4481 = vld [vmem:[#allocation12 + $0x2b8] sm:$0xff]
    %v4482 = vld [vmem:[#allocation12 + $0x2f0] sm:$0xff]
    %v4483 = vld [vmem:[#allocation12 + $0x2f8] sm:$0xff]
    %v4484 = vld [vmem:[#allocation12 + $0x330] sm:$0xff]
    %v4485 = vld [vmem:[#allocation12 + $0x338] sm:$0xff]
    %v4486 = vld [vmem:[#allocation12 + $0x370] sm:$0xff]
    %v4487 = vld [vmem:[#allocation12 + $0x378] sm:$0xff]
    %v4488 = vld [vmem:[#allocation12 + $0x3b0] sm:$0xff]
    %v4489 = vld [vmem:[#allocation12 + $0x3b8] sm:$0xff]
    %v4490 = vld [vmem:[#allocation12 + $0x3f0] sm:$0xff]
    %v4491 = vld [vmem:[#allocation12 + $0x3f8] sm:$0xff]
    %v4492 = vld [vmem:[#allocation12 + $0x430] sm:$0xff]
    %v4493 = vld [vmem:[#allocation12 + $0x438] sm:$0xff]
    %v4494 = vld [vmem:[#allocation12 + $0x470] sm:$0xff]
    %v4495 = vld [vmem:[#allocation12 + $0x478] sm:$0xff]
    %v4496 = vld [vmem:[#allocation12 + $0x4b0] sm:$0xff]
    %v4497 = vld [vmem:[#allocation12 + $0x4b8] sm:$0xff]
    %v4498 = vld [vmem:[#allocation12 + $0x4f0] sm:$0xff]
    %v4499 = vld [vmem:[#allocation12 + $0x4f8] sm:$0xff]
    %v4500 = vld [vmem:[#allocation12 + $0x530] sm:$0xff]
    %v4501 = vld [vmem:[#allocation12 + $0x538] sm:$0xff]
    %v4502 = vld [vmem:[#allocation12 + $0x570] sm:$0xff]
    %v4503 = vld [vmem:[#allocation12 + $0x578] sm:$0xff]
    %v4504 = vld [vmem:[#allocation12 + $0x5b0] sm:$0xff]
    %v4505 = vld [vmem:[#allocation12 + $0x5b8] sm:$0xff]
    %v4506 = vld [vmem:[#allocation12 + $0x5f0] sm:$0xff]
    %v4507 = vld [vmem:[#allocation12 + $0x5f8] sm:$0xff]
    %v4508 = vld [vmem:[#allocation12 + $0x630] sm:$0xff]
    %v4509 = vld [vmem:[#allocation12 + $0x638] sm:$0xff]
    %v4510 = vld [vmem:[#allocation12 + $0x670] sm:$0xff]
    %v4511 = vld [vmem:[#allocation12 + $0x678] sm:$0xff]
    %v4512 = vld [vmem:[#allocation12 + $0x6b0] sm:$0xff]
    %v4513 = vld [vmem:[#allocation12 + $0x6b8] sm:$0xff]
    %v4514 = vld [vmem:[#allocation12 + $0x6f0] sm:$0xff]
    %v4515 = vld [vmem:[#allocation12 + $0x6f8] sm:$0xff]
    %v4516 = vld [vmem:[#allocation12 + $0x730] sm:$0xff]
    %v4517 = vld [vmem:[#allocation12 + $0x738] sm:$0xff]
    %v4518 = vld [vmem:[#allocation12 + $0x770] sm:$0xff]
    %v4519 = vld [vmem:[#allocation12 + $0x778] sm:$0xff]
    %v4520 = vld [vmem:[#allocation12 + $0x7b0] sm:$0xff]
    %v4521 = vld [vmem:[#allocation12 + $0x7b8] sm:$0xff]
    %v4522 = vld [vmem:[#allocation12 + $0x7f0] sm:$0xff]
    %v4523 = vld [vmem:[#allocation12 + $0x7f8] sm:$0xff]
    %4524 = vmatprep.subr.mxu0 %v4491
    %4525 = vmatpush1.msra.mxu0 %v4490
    %4526 = vmatprep.subr.mxu0 %v4489
    %4527 = vmatpush1.msra.mxu0 %v4488
    %4528 = vmatprep.subr.mxu0 %v4487
    %4529 = vmatpush1.msra.mxu0 %v4486
    %4530 = vmatprep.subr.mxu0 %v4485
    %4531 = vmatpush1.msra.mxu0 %v4484
    %4532 = vmatprep.subr.mxu0 %v4483
    %4533 = vmatpush1.msra.mxu0 %v4482
    %4534 = vmatprep.subr.mxu0 %v4481
    %4535 = vmatpush1.msra.mxu0 %v4480
    %4536 = vmatprep.subr.mxu0 %v4479
    %4537 = vmatpush1.msra.mxu0 %v4478
    %4538 = vmatprep.subr.mxu0 %v4477
    %4539 = vmatpush1.msra.mxu0 %v4476
    %4540 = vmatprep.subr.mxu0 %v4475
    %4541 = vmatpush1.msra.mxu0 %v4474
    %4542 = vmatprep.subr.mxu0 %v4473
    %4543 = vmatpush1.msra.mxu0 %v4472
    %4544 = vmatprep.subr.mxu0 %v4471
    %4545 = vmatpush1.msra.mxu0 %v4470
    %4546 = vmatprep.subr.mxu0 %v4469
    %4547 = vmatpush1.msra.mxu0 %v4468
    %4548 = vmatprep.subr.mxu0 %v4467
    %4549 = vmatpush1.msra.mxu0 %v4466
    %4550 = vmatprep.subr.mxu0 %v4465
    %4551 = vmatpush1.msra.mxu0 %v4464
    %4552 = vmatprep.subr.mxu0 %v4463
    %4553 = vmatpush1.msra.mxu0 %v4462
    %4554 = vmatprep.subr.mxu0 %v4461
    %4555 = vmatpush1.msra.mxu0 %v4460
    %4556 = vmatprep.subr.mxu0 %v4523
    %4557 = vmatpush2.msra.mxu0 %v4522
    %4558 = vmatprep.subr.mxu0 %v4521
    %4559 = vmatpush2.msra.mxu0 %v4520
    %4560 = vmatprep.subr.mxu0 %v4519
    %4561 = vmatpush2.msra.mxu0 %v4518
    %4562 = vmatprep.subr.mxu0 %v4517
    %4563 = vmatpush2.msra.mxu0 %v4516
    %4564 = vmatprep.subr.mxu0 %v4515
    %4565 = vmatpush2.msra.mxu0 %v4514
    %4566 = vmatprep.subr.mxu0 %v4513
    %4567 = vmatpush2.msra.mxu0 %v4512
    %4568 = vmatprep.subr.mxu0 %v4511
    %4569 = vmatpush2.msra.mxu0 %v4510
    %4570 = vmatprep.subr.mxu0 %v4509
    %4571 = vmatpush2.msra.mxu0 %v4508
    %4572 = vmatprep.subr.mxu0 %v4507
    %4573 = vmatpush2.msra.mxu0 %v4506
    %4574 = vmatprep.subr.mxu0 %v4505
    %4575 = vmatpush2.msra.mxu0 %v4504
    %4576 = vmatprep.subr.mxu0 %v4503
    %4577 = vmatpush2.msra.mxu0 %v4502
    %4578 = vmatprep.subr.mxu0 %v4501
    %4579 = vmatpush2.msra.mxu0 %v4500
    %4580 = vmatprep.subr.mxu0 %v4499
    %4581 = vmatpush2.msra.mxu0 %v4498
    %4582 = vmatprep.subr.mxu0 %v4497
    %4583 = vmatpush2.msra.mxu0 %v4496
    %4584 = vmatprep.subr.mxu0 %v4495
    %4585 = vmatpush2.msra.mxu0 %v4494
    %4586 = vmatprep.subr.mxu0 %v4493
    %4587 = vmatpush2.msra.mxu0 %v4492
    %4588 = vmatprep.mubr.f32.mxu0 %v3241
    %4589 = vmatmul.mubr.f32.gmra.mxu0 %v3240
    %v4590 = vpop.f32.mrf.mxu0
    %v4591 = vadd.f32 0.0, %v4590
    %v4592 = vpop.f32.mrf.mxu0
    %v4593 = vadd.f32 0.0, %v4592
    %4594 = vmatprep.mubr.f32.mxu0 %v3243
    %4595 = vmatmul.mubr.f32.gmra.mxu0 %v3242
    %v4596 = vpop.f32.mrf.mxu0
    %v4597 = vadd.f32 0.0, %v4596
    %v4598 = vpop.f32.mrf.mxu0
    %v4599 = vadd.f32 0.0, %v4598
    %4600 = vmatprep.mubr.f32.mxu0 %v3245
    %4601 = vmatmul.mubr.f32.gmra.mxu0 %v3244
    %v4602 = vpop.f32.mrf.mxu0
    %v4603 = vadd.f32 0.0, %v4602
    %v4604 = vpop.f32.mrf.mxu0
    %v4605 = vadd.f32 0.0, %v4604
    %4606 = vmatprep.mubr.f32.mxu0 %v3247
    %4607 = vmatmul.mubr.f32.gmra.mxu0 %v3246
    %v4608 = vpop.f32.mrf.mxu0
    %v4609 = vadd.f32 0.0, %v4608
    %v4610 = vpop.f32.mrf.mxu0
    %v4611 = vadd.f32 0.0, %v4610
    %4612 = vmatprep.mubr.f32.mxu0 %v3249
    %4613 = vmatmul.mubr.f32.gmra.mxu0 %v3248
    %v4614 = vpop.f32.mrf.mxu0
    %v4615 = vadd.f32 0.0, %v4614
    %v4616 = vpop.f32.mrf.mxu0
    %v4617 = vadd.f32 0.0, %v4616
    %4618 = vmatprep.mubr.f32.mxu0 %v3251
    %4619 = vmatmul.mubr.f32.gmra.mxu0 %v3250
    %v4620 = vpop.f32.mrf.mxu0
    %v4621 = vadd.f32 0.0, %v4620
    %v4622 = vpop.f32.mrf.mxu0
    %v4623 = vadd.f32 0.0, %v4622
    %4624 = vmatprep.mubr.f32.mxu0 %v3253
    %4625 = vmatmul.mubr.f32.gmra.mxu0 %v3252
    %v4626 = vpop.f32.mrf.mxu0
    %v4627 = vadd.f32 0.0, %v4626
    %v4628 = vpop.f32.mrf.mxu0
    %v4629 = vadd.f32 0.0, %v4628
    %4630 = vmatprep.mubr.f32.mxu0 %v3255
    %4631 = vmatmul.mubr.f32.gmra.mxu0 %v3254
    %v4632 = vpop.f32.mrf.mxu0
    %v4633 = vadd.f32 0.0, %v4632
    %v4634 = vpop.f32.mrf.mxu0
    %v4635 = vadd.f32 0.0, %v4634
    %4636 = vmatprep.mubr.f32.mxu0 %v3257
    %4637 = vmatmul.mubr.f32.gmra.mxu0 %v3256
    %v4638 = vpop.f32.mrf.mxu0
    %v4639 = vadd.f32 0.0, %v4638
    %v4640 = vpop.f32.mrf.mxu0
    %v4641 = vadd.f32 0.0, %v4640
    %4642 = vmatprep.mubr.f32.mxu0 %v3259
    %4643 = vmatmul.mubr.f32.gmra.mxu0 %v3258
    %v4644 = vpop.f32.mrf.mxu0
    %v4645 = vadd.f32 0.0, %v4644
    %v4646 = vpop.f32.mrf.mxu0
    %v4647 = vadd.f32 0.0, %v4646
    %4648 = vmatprep.mubr.f32.mxu0 %v3261
    %4649 = vmatmul.mubr.f32.gmra.mxu0 %v3260
    %v4650 = vpop.f32.mrf.mxu0
    %v4651 = vadd.f32 0.0, %v4650
    %v4652 = vpop.f32.mrf.mxu0
    %v4653 = vadd.f32 0.0, %v4652
    %4654 = vmatprep.mubr.f32.mxu0 %v3263
    %4655 = vmatmul.mubr.f32.gmra.mxu0 %v3262
    %v4656 = vpop.f32.mrf.mxu0
    %v4657 = vadd.f32 0.0, %v4656
    %v4658 = vpop.f32.mrf.mxu0
    %v4659 = vadd.f32 0.0, %v4658
    %4660 = vmatprep.mubr.f32.mxu0 %v3265
    %4661 = vmatmul.mubr.f32.gmra.mxu0 %v3264
    %v4662 = vpop.f32.mrf.mxu0
    %v4663 = vadd.f32 0.0, %v4662
    %v4664 = vpop.f32.mrf.mxu0
    %v4665 = vadd.f32 0.0, %v4664
    %4666 = vmatprep.mubr.f32.mxu0 %v3267
    %4667 = vmatmul.mubr.f32.gmra.mxu0 %v3266
    %v4668 = vpop.f32.mrf.mxu0
    %v4669 = vadd.f32 0.0, %v4668
    %v4670 = vpop.f32.mrf.mxu0
    %v4671 = vadd.f32 0.0, %v4670
    %4672 = vmatprep.mubr.f32.mxu0 %v3269
    %4673 = vmatmul.mubr.f32.gmra.mxu0 %v3268
    %v4674 = vpop.f32.mrf.mxu0
    %v4675 = vadd.f32 0.0, %v4674
    %v4676 = vpop.f32.mrf.mxu0
    %v4677 = vadd.f32 0.0, %v4676
    %4678 = vmatprep.mubr.f32.mxu0 %v3271
    %4679 = vmatmul.mubr.f32.gmra.mxu0 %v3270
    %v4680 = vpop.f32.mrf.mxu0
    %v4681 = vadd.f32 0.0, %v4680
    %v4682 = vpop.f32.mrf.mxu0
    %v4683 = vadd.f32 0.0, %v4682
    %4684 = vdwg.mxu0
    %v4685 = vxor.u32 %v4366, 2147483648
    %v4686 = vxor.u32 %v4368, 2147483648
    %v4687 = vxor.u32 %v4372, 2147483648
    %v4688 = vxor.u32 %v4374, 2147483648
    %v4689 = vxor.u32 %v4378, 2147483648
    %v4690 = vxor.u32 %v4380, 2147483648
    %v4691 = vxor.u32 %v4384, 2147483648
    %v4692 = vxor.u32 %v4386, 2147483648
    %v4693 = vxor.u32 %v4390, 2147483648
    %v4694 = vxor.u32 %v4392, 2147483648
    %v4695 = vxor.u32 %v4396, 2147483648
    %v4696 = vxor.u32 %v4398, 2147483648
    %v4697 = vxor.u32 %v4402, 2147483648
    %v4698 = vxor.u32 %v4404, 2147483648
    %v4699 = vxor.u32 %v4408, 2147483648
    %v4700 = vxor.u32 %v4410, 2147483648
    %v4701 = vxor.u32 %v4414, 2147483648
    %v4702 = vxor.u32 %v4416, 2147483648
    %v4703 = vxor.u32 %v4420, 2147483648
    %v4704 = vxor.u32 %v4422, 2147483648
    %v4705 = vxor.u32 %v4426, 2147483648
    %v4706 = vxor.u32 %v4428, 2147483648
    %v4707 = vxor.u32 %v4432, 2147483648
    %v4708 = vxor.u32 %v4434, 2147483648
    %v4709 = vxor.u32 %v4438, 2147483648
    %v4710 = vxor.u32 %v4440, 2147483648
    %v4711 = vxor.u32 %v4444, 2147483648
    %v4712 = vxor.u32 %v4446, 2147483648
    %v4713 = vxor.u32 %v4450, 2147483648
    %v4714 = vxor.u32 %v4452, 2147483648
    %v4715 = vxor.u32 %v4456, 2147483648
    %v4716 = vxor.u32 %v4458, 2147483648
    %v4717 = vmul.f32 %v4685, 1.442695
    %v4718 = vpow.pop %v4717
    %v4719 = vmul.f32 %v4686, 1.442695
    %v4720 = vpow.pop %v4719
    %v4721 = vmul.f32 %v4687, 1.442695
    %v4722 = vpow.pop %v4721
    %v4723 = vmul.f32 %v4688, 1.442695
    %v4724 = vpow.pop %v4723
    %v4725 = vmul.f32 %v4689, 1.442695
    %v4726 = vpow.pop %v4725
    %v4727 = vmul.f32 %v4690, 1.442695
    %v4728 = vpow.pop %v4727
    %v4729 = vmul.f32 %v4691, 1.442695
    %v4730 = vpow.pop %v4729
    %v4731 = vmul.f32 %v4692, 1.442695
    %v4732 = vpow.pop %v4731
    %v4733 = vmul.f32 %v4693, 1.442695
    %v4734 = vpow.pop %v4733
    %v4735 = vmul.f32 %v4694, 1.442695
    %v4736 = vpow.pop %v4735
    %v4737 = vmul.f32 %v4695, 1.442695
    %v4738 = vpow.pop %v4737
    %v4739 = vmul.f32 %v4696, 1.442695
    %v4740 = vpow.pop %v4739
    %v4741 = vmul.f32 %v4697, 1.442695
    %v4742 = vpow.pop %v4741
    %v4743 = vmul.f32 %v4698, 1.442695
    %v4744 = vpow.pop %v4743
    %v4745 = vmul.f32 %v4699, 1.442695
    %v4746 = vpow.pop %v4745
    %v4747 = vmul.f32 %v4700, 1.442695
    %v4748 = vpow.pop %v4747
    %v4749 = vmul.f32 %v4701, 1.442695
    %v4750 = vpow.pop %v4749
    %v4751 = vmul.f32 %v4702, 1.442695
    %v4752 = vpow.pop %v4751
    %v4753 = vmul.f32 %v4703, 1.442695
    %v4754 = vpow.pop %v4753
    %v4755 = vmul.f32 %v4704, 1.442695
    %v4756 = vpow.pop %v4755
    %v4757 = vmul.f32 %v4705, 1.442695
    %v4758 = vpow.pop %v4757
    %v4759 = vmul.f32 %v4706, 1.442695
    %v4760 = vpow.pop %v4759
    %v4761 = vmul.f32 %v4707, 1.442695
    %v4762 = vpow.pop %v4761
    %v4763 = vmul.f32 %v4708, 1.442695
    %v4764 = vpow.pop %v4763
    %v4765 = vmul.f32 %v4709, 1.442695
    %v4766 = vpow.pop %v4765
    %v4767 = vmul.f32 %v4710, 1.442695
    %v4768 = vpow.pop %v4767
    %v4769 = vmul.f32 %v4711, 1.442695
    %v4770 = vpow.pop %v4769
    %v4771 = vmul.f32 %v4712, 1.442695
    %v4772 = vpow.pop %v4771
    %v4773 = vmul.f32 %v4713, 1.442695
    %v4774 = vpow.pop %v4773
    %v4775 = vmul.f32 %v4714, 1.442695
    %v4776 = vpow.pop %v4775
    %v4777 = vmul.f32 %v4715, 1.442695
    %v4778 = vpow.pop %v4777
    %v4779 = vmul.f32 %v4716, 1.442695
    %v4780 = vpow.pop %v4779
    %v4781 = vadd.f32 %v4718, 1.0
    %v4782 = vadd.f32 %v4720, 1.0
    %v4783 = vadd.f32 %v4722, 1.0
    %v4784 = vadd.f32 %v4724, 1.0
    %v4785 = vadd.f32 %v4726, 1.0
    %v4786 = vadd.f32 %v4728, 1.0
    %v4787 = vadd.f32 %v4730, 1.0
    %v4788 = vadd.f32 %v4732, 1.0
    %v4789 = vadd.f32 %v4734, 1.0
    %v4790 = vadd.f32 %v4736, 1.0
    %v4791 = vadd.f32 %v4738, 1.0
    %v4792 = vadd.f32 %v4740, 1.0
    %v4793 = vadd.f32 %v4742, 1.0
    %v4794 = vadd.f32 %v4744, 1.0
    %v4795 = vadd.f32 %v4746, 1.0
    %v4796 = vadd.f32 %v4748, 1.0
    %v4797 = vadd.f32 %v4750, 1.0
    %v4798 = vadd.f32 %v4752, 1.0
    %v4799 = vadd.f32 %v4754, 1.0
    %v4800 = vadd.f32 %v4756, 1.0
    %v4801 = vadd.f32 %v4758, 1.0
    %v4802 = vadd.f32 %v4760, 1.0
    %v4803 = vadd.f32 %v4762, 1.0
    %v4804 = vadd.f32 %v4764, 1.0
    %v4805 = vadd.f32 %v4766, 1.0
    %v4806 = vadd.f32 %v4768, 1.0
    %v4807 = vadd.f32 %v4770, 1.0
    %v4808 = vadd.f32 %v4772, 1.0
    %v4809 = vadd.f32 %v4774, 1.0
    %v4810 = vadd.f32 %v4776, 1.0
    %v4811 = vadd.f32 %v4778, 1.0
    %v4812 = vadd.f32 %v4780, 1.0
    %v4813 = vrcp.pop %v4781
    %v4814 = vmul.f32 1.0, %v4813
    %v4815 = vrcp.pop %v4782
    %v4816 = vmul.f32 1.0, %v4815
    %v4817 = vrcp.pop %v4783
    %v4818 = vmul.f32 1.0, %v4817
    %v4819 = vrcp.pop %v4784
    %v4820 = vmul.f32 1.0, %v4819
    %v4821 = vrcp.pop %v4785
    %v4822 = vmul.f32 1.0, %v4821
    %v4823 = vrcp.pop %v4786
    %v4824 = vmul.f32 1.0, %v4823
    %v4825 = vrcp.pop %v4787
    %v4826 = vmul.f32 1.0, %v4825
    %v4827 = vrcp.pop %v4788
    %v4828 = vmul.f32 1.0, %v4827
    %v4829 = vrcp.pop %v4789
    %v4830 = vmul.f32 1.0, %v4829
    %v4831 = vrcp.pop %v4790
    %v4832 = vmul.f32 1.0, %v4831
    %v4833 = vrcp.pop %v4791
    %v4834 = vmul.f32 1.0, %v4833
    %v4835 = vrcp.pop %v4792
    %v4836 = vmul.f32 1.0, %v4835
    %v4837 = vrcp.pop %v4793
    %v4838 = vmul.f32 1.0, %v4837
    %v4839 = vrcp.pop %v4794
    %v4840 = vmul.f32 1.0, %v4839
    %v4841 = vrcp.pop %v4795
    %v4842 = vmul.f32 1.0, %v4841
    %v4843 = vrcp.pop %v4796
    %v4844 = vmul.f32 1.0, %v4843
    %v4845 = vrcp.pop %v4797
    %v4846 = vmul.f32 1.0, %v4845
    %v4847 = vrcp.pop %v4798
    %v4848 = vmul.f32 1.0, %v4847
    %v4849 = vrcp.pop %v4799
    %v4850 = vmul.f32 1.0, %v4849
    %v4851 = vrcp.pop %v4800
    %v4852 = vmul.f32 1.0, %v4851
    %v4853 = vrcp.pop %v4801
    %v4854 = vmul.f32 1.0, %v4853
    %v4855 = vrcp.pop %v4802
    %v4856 = vmul.f32 1.0, %v4855
    %v4857 = vrcp.pop %v4803
    %v4858 = vmul.f32 1.0, %v4857
    %v4859 = vrcp.pop %v4804
    %v4860 = vmul.f32 1.0, %v4859
    %v4861 = vrcp.pop %v4805
    %v4862 = vmul.f32 1.0, %v4861
    %v4863 = vrcp.pop %v4806
    %v4864 = vmul.f32 1.0, %v4863
    %v4865 = vrcp.pop %v4807
    %v4866 = vmul.f32 1.0, %v4865
    %v4867 = vrcp.pop %v4808
    %v4868 = vmul.f32 1.0, %v4867
    %v4869 = vrcp.pop %v4809
    %v4870 = vmul.f32 1.0, %v4869
    %v4871 = vrcp.pop %v4810
    %v4872 = vmul.f32 1.0, %v4871
    %v4873 = vrcp.pop %v4811
    %v4874 = vmul.f32 1.0, %v4873
    %v4875 = vrcp.pop %v4812
    %v4876 = vmul.f32 1.0, %v4875
    %v4877 = vmul.f32 %v4366, %v4814
    %v4878 = vmul.f32 %v4368, %v4816
    %v4879 = vmul.f32 %v4372, %v4818
    %v4880 = vmul.f32 %v4374, %v4820
    %v4881 = vmul.f32 %v4378, %v4822
    %v4882 = vmul.f32 %v4380, %v4824
    %v4883 = vmul.f32 %v4384, %v4826
    %v4884 = vmul.f32 %v4386, %v4828
    %v4885 = vmul.f32 %v4390, %v4830
    %v4886 = vmul.f32 %v4392, %v4832
    %v4887 = vmul.f32 %v4396, %v4834
    %v4888 = vmul.f32 %v4398, %v4836
    %v4889 = vmul.f32 %v4402, %v4838
    %v4890 = vmul.f32 %v4404, %v4840
    %v4891 = vmul.f32 %v4408, %v4842
    %v4892 = vmul.f32 %v4410, %v4844
    %v4893 = vmul.f32 %v4414, %v4846
    %v4894 = vmul.f32 %v4416, %v4848
    %v4895 = vmul.f32 %v4420, %v4850
    %v4896 = vmul.f32 %v4422, %v4852
    %v4897 = vmul.f32 %v4426, %v4854
    %v4898 = vmul.f32 %v4428, %v4856
    %v4899 = vmul.f32 %v4432, %v4858
    %v4900 = vmul.f32 %v4434, %v4860
    %v4901 = vmul.f32 %v4438, %v4862
    %v4902 = vmul.f32 %v4440, %v4864
    %v4903 = vmul.f32 %v4444, %v4866
    %v4904 = vmul.f32 %v4446, %v4868
    %v4905 = vmul.f32 %v4450, %v4870
    %v4906 = vmul.f32 %v4452, %v4872
    %v4907 = vmul.f32 %v4456, %v4874
    %v4908 = vmul.f32 %v4458, %v4876
    %v4909 = vmul.f32 %v4877, %v4591
    %v4910 = vmul.f32 %v4878, %v4593
    %v4911 = vmul.f32 %v4879, %v4597
    %v4912 = vmul.f32 %v4880, %v4599
    %v4913 = vmul.f32 %v4881, %v4603
    %v4914 = vmul.f32 %v4882, %v4605
    %v4915 = vmul.f32 %v4883, %v4609
    %v4916 = vmul.f32 %v4884, %v4611
    %v4917 = vmul.f32 %v4885, %v4615
    %v4918 = vmul.f32 %v4886, %v4617
    %v4919 = vmul.f32 %v4887, %v4621
    %v4920 = vmul.f32 %v4888, %v4623
    %v4921 = vmul.f32 %v4889, %v4627
    %v4922 = vmul.f32 %v4890, %v4629
    %v4923 = vmul.f32 %v4891, %v4633
    %v4924 = vmul.f32 %v4892, %v4635
    %v4925 = vmul.f32 %v4893, %v4639
    %v4926 = vmul.f32 %v4894, %v4641
    %v4927 = vmul.f32 %v4895, %v4645
    %v4928 = vmul.f32 %v4896, %v4647
    %v4929 = vmul.f32 %v4897, %v4651
    %v4930 = vmul.f32 %v4898, %v4653
    %v4931 = vmul.f32 %v4899, %v4657
    %v4932 = vmul.f32 %v4900, %v4659
    %v4933 = vmul.f32 %v4901, %v4663
    %v4934 = vmul.f32 %v4902, %v4665
    %v4935 = vmul.f32 %v4903, %v4669
    %v4936 = vmul.f32 %v4904, %v4671
    %v4937 = vmul.f32 %v4905, %v4675
    %v4938 = vmul.f32 %v4906, %v4677
    %v4939 = vmul.f32 %v4907, %v4681
    %v4940 = vmul.f32 %v4908, %v4683
    %v4941 = vld [vmem:[#allocation14 + $0x200] sm:$0xff]
    %v4942 = vld [vmem:[#allocation14 + $0x208] sm:$0xff]
    %v4943 = vld [vmem:[#allocation14 + $0x210] sm:$0xff]
    %v4944 = vld [vmem:[#allocation14 + $0x218] sm:$0xff]
    %v4945 = vld [vmem:[#allocation14 + $0x220] sm:$0xff]
    %v4946 = vld [vmem:[#allocation14 + $0x228] sm:$0xff]
    %v4947 = vld [vmem:[#allocation14 + $0x230] sm:$0xff]
    %v4948 = vld [vmem:[#allocation14 + $0x238] sm:$0xff]
    %v4949 = vld [vmem:[#allocation14 + $0x240] sm:$0xff]
    %v4950 = vld [vmem:[#allocation14 + $0x248] sm:$0xff]
    %v4951 = vld [vmem:[#allocation14 + $0x250] sm:$0xff]
    %v4952 = vld [vmem:[#allocation14 + $0x258] sm:$0xff]
    %v4953 = vld [vmem:[#allocation14 + $0x260] sm:$0xff]
    %v4954 = vld [vmem:[#allocation14 + $0x268] sm:$0xff]
    %v4955 = vld [vmem:[#allocation14 + $0x270] sm:$0xff]
    %v4956 = vld [vmem:[#allocation14 + $0x278] sm:$0xff]
    %v4957 = vld [vmem:[#allocation14 + $0x280] sm:$0xff]
    %v4958 = vld [vmem:[#allocation14 + $0x288] sm:$0xff]
    %v4959 = vld [vmem:[#allocation14 + $0x290] sm:$0xff]
    %v4960 = vld [vmem:[#allocation14 + $0x298] sm:$0xff]
    %v4961 = vld [vmem:[#allocation14 + $0x2a0] sm:$0xff]
    %v4962 = vld [vmem:[#allocation14 + $0x2a8] sm:$0xff]
    %v4963 = vld [vmem:[#allocation14 + $0x2b0] sm:$0xff]
    %v4964 = vld [vmem:[#allocation14 + $0x2b8] sm:$0xff]
    %v4965 = vld [vmem:[#allocation14 + $0x2c0] sm:$0xff]
    %v4966 = vld [vmem:[#allocation14 + $0x2c8] sm:$0xff]
    %v4967 = vld [vmem:[#allocation14 + $0x2d0] sm:$0xff]
    %v4968 = vld [vmem:[#allocation14 + $0x2d8] sm:$0xff]
    %v4969 = vld [vmem:[#allocation14 + $0x2e0] sm:$0xff]
    %v4970 = vld [vmem:[#allocation14 + $0x2e8] sm:$0xff]
    %v4971 = vld [vmem:[#allocation14 + $0x2f0] sm:$0xff]
    %v4972 = vld [vmem:[#allocation14 + $0x2f8] sm:$0xff]
    %v4973 = vld [vmem:[#allocation14 + $0x300] sm:$0xff]
    %v4974 = vld [vmem:[#allocation14 + $0x308] sm:$0xff]
    %v4975 = vld [vmem:[#allocation14 + $0x310] sm:$0xff]
    %v4976 = vld [vmem:[#allocation14 + $0x318] sm:$0xff]
    %v4977 = vld [vmem:[#allocation14 + $0x320] sm:$0xff]
    %v4978 = vld [vmem:[#allocation14 + $0x328] sm:$0xff]
    %v4979 = vld [vmem:[#allocation14 + $0x330] sm:$0xff]
    %v4980 = vld [vmem:[#allocation14 + $0x338] sm:$0xff]
    %v4981 = vld [vmem:[#allocation14 + $0x340] sm:$0xff]
    %v4982 = vld [vmem:[#allocation14 + $0x348] sm:$0xff]
    %v4983 = vld [vmem:[#allocation14 + $0x350] sm:$0xff]
    %v4984 = vld [vmem:[#allocation14 + $0x358] sm:$0xff]
    %v4985 = vld [vmem:[#allocation14 + $0x360] sm:$0xff]
    %v4986 = vld [vmem:[#allocation14 + $0x368] sm:$0xff]
    %v4987 = vld [vmem:[#allocation14 + $0x370] sm:$0xff]
    %v4988 = vld [vmem:[#allocation14 + $0x378] sm:$0xff]
    %v4989 = vld [vmem:[#allocation14 + $0x380] sm:$0xff]
    %v4990 = vld [vmem:[#allocation14 + $0x388] sm:$0xff]
    %v4991 = vld [vmem:[#allocation14 + $0x390] sm:$0xff]
    %v4992 = vld [vmem:[#allocation14 + $0x398] sm:$0xff]
    %v4993 = vld [vmem:[#allocation14 + $0x3a0] sm:$0xff]
    %v4994 = vld [vmem:[#allocation14 + $0x3a8] sm:$0xff]
    %v4995 = vld [vmem:[#allocation14 + $0x3b0] sm:$0xff]
    %v4996 = vld [vmem:[#allocation14 + $0x3b8] sm:$0xff]
    %v4997 = vld [vmem:[#allocation14 + $0x3c0] sm:$0xff]
    %v4998 = vld [vmem:[#allocation14 + $0x3c8] sm:$0xff]
    %v4999 = vld [vmem:[#allocation14 + $0x3d0] sm:$0xff]
    %v5000 = vld [vmem:[#allocation14 + $0x3d8] sm:$0xff]
    %v5001 = vld [vmem:[#allocation14 + $0x3e0] sm:$0xff]
    %v5002 = vld [vmem:[#allocation14 + $0x3e8] sm:$0xff]
    %v5003 = vld [vmem:[#allocation14 + $0x3f0] sm:$0xff]
    %v5004 = vld [vmem:[#allocation14 + $0x3f8] sm:$0xff]
    %5005 = vmatprep.subr.mxu0 %v4972
    %5006 = vmatpush1.msra.mxu0 %v4971
    %5007 = vmatprep.subr.mxu0 %v4970
    %5008 = vmatpush1.msra.mxu0 %v4969
    %5009 = vmatprep.subr.mxu0 %v4968
    %5010 = vmatpush1.msra.mxu0 %v4967
    %5011 = vmatprep.subr.mxu0 %v4966
    %5012 = vmatpush1.msra.mxu0 %v4965
    %5013 = vmatprep.subr.mxu0 %v4964
    %5014 = vmatpush1.msra.mxu0 %v4963
    %5015 = vmatprep.subr.mxu0 %v4962
    %5016 = vmatpush1.msra.mxu0 %v4961
    %5017 = vmatprep.subr.mxu0 %v4960
    %5018 = vmatpush1.msra.mxu0 %v4959
    %5019 = vmatprep.subr.mxu0 %v4958
    %5020 = vmatpush1.msra.mxu0 %v4957
    %5021 = vmatprep.subr.mxu0 %v4956
    %5022 = vmatpush1.msra.mxu0 %v4955
    %5023 = vmatprep.subr.mxu0 %v4954
    %5024 = vmatpush1.msra.mxu0 %v4953
    %5025 = vmatprep.subr.mxu0 %v4952
    %5026 = vmatpush1.msra.mxu0 %v4951
    %5027 = vmatprep.subr.mxu0 %v4950
    %5028 = vmatpush1.msra.mxu0 %v4949
    %5029 = vmatprep.subr.mxu0 %v4948
    %5030 = vmatpush1.msra.mxu0 %v4947
    %5031 = vmatprep.subr.mxu0 %v4946
    %5032 = vmatpush1.msra.mxu0 %v4945
    %5033 = vmatprep.subr.mxu0 %v4944
    %5034 = vmatpush1.msra.mxu0 %v4943
    %5035 = vmatprep.subr.mxu0 %v4942
    %5036 = vmatpush1.msra.mxu0 %v4941
    %5037 = vmatprep.subr.mxu0 %v5004
    %5038 = vmatpush2.msra.mxu0 %v5003
    %5039 = vmatprep.subr.mxu0 %v5002
    %5040 = vmatpush2.msra.mxu0 %v5001
    %5041 = vmatprep.subr.mxu0 %v5000
    %5042 = vmatpush2.msra.mxu0 %v4999
    %5043 = vmatprep.subr.mxu0 %v4998
    %5044 = vmatpush2.msra.mxu0 %v4997
    %5045 = vmatprep.subr.mxu0 %v4996
    %5046 = vmatpush2.msra.mxu0 %v4995
    %5047 = vmatprep.subr.mxu0 %v4994
    %5048 = vmatpush2.msra.mxu0 %v4993
    %5049 = vmatprep.subr.mxu0 %v4992
    %5050 = vmatpush2.msra.mxu0 %v4991
    %5051 = vmatprep.subr.mxu0 %v4990
    %5052 = vmatpush2.msra.mxu0 %v4989
    %5053 = vmatprep.subr.mxu0 %v4988
    %5054 = vmatpush2.msra.mxu0 %v4987
    %5055 = vmatprep.subr.mxu0 %v4986
    %5056 = vmatpush2.msra.mxu0 %v4985
    %5057 = vmatprep.subr.mxu0 %v4984
    %5058 = vmatpush2.msra.mxu0 %v4983
    %5059 = vmatprep.subr.mxu0 %v4982
    %5060 = vmatpush2.msra.mxu0 %v4981
    %5061 = vmatprep.subr.mxu0 %v4980
    %5062 = vmatpush2.msra.mxu0 %v4979
    %5063 = vmatprep.subr.mxu0 %v4978
    %5064 = vmatpush2.msra.mxu0 %v4977
    %5065 = vmatprep.subr.mxu0 %v4976
    %5066 = vmatpush2.msra.mxu0 %v4975
    %5067 = vmatprep.subr.mxu0 %v4974
    %5068 = vmatpush2.msra.mxu0 %v4973
    %5069 = vmatprep.mubr.f32.mxu0 %v4910
    %5070 = vmatmul.mubr.f32.gmra.mxu0 %v4909
    %v5071 = vpop.f32.mrf.mxu0
    %v5072 = vadd.f32 0.0, %v5071
    %v5073 = vpop.f32.mrf.mxu0
    %v5074 = vadd.f32 0.0, %v5073
    %5075 = vmatprep.mubr.f32.mxu0 %v4912
    %5076 = vmatmul.mubr.f32.gmra.mxu0 %v4911
    %v5077 = vpop.f32.mrf.mxu0
    %v5078 = vadd.f32 0.0, %v5077
    %v5079 = vpop.f32.mrf.mxu0
    %v5080 = vadd.f32 0.0, %v5079
    %5081 = vmatprep.mubr.f32.mxu0 %v4914
    %5082 = vmatmul.mubr.f32.gmra.mxu0 %v4913
    %v5083 = vpop.f32.mrf.mxu0
    %v5084 = vadd.f32 0.0, %v5083
    %v5085 = vpop.f32.mrf.mxu0
    %v5086 = vadd.f32 0.0, %v5085
    %5087 = vmatprep.mubr.f32.mxu0 %v4916
    %5088 = vmatmul.mubr.f32.gmra.mxu0 %v4915
    %v5089 = vpop.f32.mrf.mxu0
    %v5090 = vadd.f32 0.0, %v5089
    %v5091 = vpop.f32.mrf.mxu0
    %v5092 = vadd.f32 0.0, %v5091
    %5093 = vmatprep.mubr.f32.mxu0 %v4918
    %5094 = vmatmul.mubr.f32.gmra.mxu0 %v4917
    %v5095 = vpop.f32.mrf.mxu0
    %v5096 = vadd.f32 0.0, %v5095
    %v5097 = vpop.f32.mrf.mxu0
    %v5098 = vadd.f32 0.0, %v5097
    %5099 = vmatprep.mubr.f32.mxu0 %v4920
    %5100 = vmatmul.mubr.f32.gmra.mxu0 %v4919
    %v5101 = vpop.f32.mrf.mxu0
    %v5102 = vadd.f32 0.0, %v5101
    %v5103 = vpop.f32.mrf.mxu0
    %v5104 = vadd.f32 0.0, %v5103
    %5105 = vmatprep.mubr.f32.mxu0 %v4922
    %5106 = vmatmul.mubr.f32.gmra.mxu0 %v4921
    %v5107 = vpop.f32.mrf.mxu0
    %v5108 = vadd.f32 0.0, %v5107
    %v5109 = vpop.f32.mrf.mxu0
    %v5110 = vadd.f32 0.0, %v5109
    %5111 = vmatprep.mubr.f32.mxu0 %v4924
    %5112 = vmatmul.mubr.f32.gmra.mxu0 %v4923
    %v5113 = vpop.f32.mrf.mxu0
    %v5114 = vadd.f32 0.0, %v5113
    %v5115 = vpop.f32.mrf.mxu0
    %v5116 = vadd.f32 0.0, %v5115
    %5117 = vmatprep.mubr.f32.mxu0 %v4926
    %5118 = vmatmul.mubr.f32.gmra.mxu0 %v4925
    %v5119 = vpop.f32.mrf.mxu0
    %v5120 = vadd.f32 0.0, %v5119
    %v5121 = vpop.f32.mrf.mxu0
    %v5122 = vadd.f32 0.0, %v5121
    %5123 = vmatprep.mubr.f32.mxu0 %v4928
    %5124 = vmatmul.mubr.f32.gmra.mxu0 %v4927
    %v5125 = vpop.f32.mrf.mxu0
    %v5126 = vadd.f32 0.0, %v5125
    %v5127 = vpop.f32.mrf.mxu0
    %v5128 = vadd.f32 0.0, %v5127
    %5129 = vmatprep.mubr.f32.mxu0 %v4930
    %5130 = vmatmul.mubr.f32.gmra.mxu0 %v4929
    %v5131 = vpop.f32.mrf.mxu0
    %v5132 = vadd.f32 0.0, %v5131
    %v5133 = vpop.f32.mrf.mxu0
    %v5134 = vadd.f32 0.0, %v5133
    %5135 = vmatprep.mubr.f32.mxu0 %v4932
    %5136 = vmatmul.mubr.f32.gmra.mxu0 %v4931
    %v5137 = vpop.f32.mrf.mxu0
    %v5138 = vadd.f32 0.0, %v5137
    %v5139 = vpop.f32.mrf.mxu0
    %v5140 = vadd.f32 0.0, %v5139
    %5141 = vmatprep.mubr.f32.mxu0 %v4934
    %5142 = vmatmul.mubr.f32.gmra.mxu0 %v4933
    %v5143 = vpop.f32.mrf.mxu0
    %v5144 = vadd.f32 0.0, %v5143
    %v5145 = vpop.f32.mrf.mxu0
    %v5146 = vadd.f32 0.0, %v5145
    %5147 = vmatprep.mubr.f32.mxu0 %v4936
    %5148 = vmatmul.mubr.f32.gmra.mxu0 %v4935
    %v5149 = vpop.f32.mrf.mxu0
    %v5150 = vadd.f32 0.0, %v5149
    %v5151 = vpop.f32.mrf.mxu0
    %v5152 = vadd.f32 0.0, %v5151
    %5153 = vmatprep.mubr.f32.mxu0 %v4938
    %5154 = vmatmul.mubr.f32.gmra.mxu0 %v4937
    %v5155 = vpop.f32.mrf.mxu0
    %v5156 = vadd.f32 0.0, %v5155
    %v5157 = vpop.f32.mrf.mxu0
    %v5158 = vadd.f32 0.0, %v5157
    %5159 = vmatprep.mubr.f32.mxu0 %v4940
    %5160 = vmatmul.mubr.f32.gmra.mxu0 %v4939
    %v5161 = vpop.f32.mrf.mxu0
    %v5162 = vadd.f32 0.0, %v5161
    %v5163 = vpop.f32.mrf.mxu0
    %v5164 = vadd.f32 0.0, %v5163
    %5165 = vdwg.mxu0
    %v5166 = vadd.f32 %v4203, %v5072
    %v5167 = vadd.f32 %v4204, %v5074
    %v5168 = vadd.f32 %v4205, %v5078
    %v5169 = vadd.f32 %v4206, %v5080
    %v5170 = vadd.f32 %v4207, %v5084
    %v5171 = vadd.f32 %v4208, %v5086
    %v5172 = vadd.f32 %v4209, %v5090
    %v5173 = vadd.f32 %v4210, %v5092
    %v5174 = vadd.f32 %v4211, %v5096
    %v5175 = vadd.f32 %v4212, %v5098
    %v5176 = vadd.f32 %v4213, %v5102
    %v5177 = vadd.f32 %v4214, %v5104
    %v5178 = vadd.f32 %v4215, %v5108
    %v5179 = vadd.f32 %v4216, %v5110
    %v5180 = vadd.f32 %v4217, %v5114
    %v5181 = vadd.f32 %v4218, %v5116
    %v5182 = vadd.f32 %v4219, %v5120
    %v5183 = vadd.f32 %v4220, %v5122
    %v5184 = vadd.f32 %v4221, %v5126
    %v5185 = vadd.f32 %v4222, %v5128
    %v5186 = vadd.f32 %v4223, %v5132
    %v5187 = vadd.f32 %v4224, %v5134
    %v5188 = vadd.f32 %v4225, %v5138
    %v5189 = vadd.f32 %v4226, %v5140
    %v5190 = vadd.f32 %v4227, %v5144
    %v5191 = vadd.f32 %v4228, %v5146
    %v5192 = vadd.f32 %v4229, %v5150
    %v5193 = vadd.f32 %v4230, %v5152
    %v5194 = vadd.f32 %v4231, %v5156
    %v5195 = vadd.f32 %v4232, %v5158
    %v5196 = vadd.f32 %v4233, %v5162
    %v5197 = vadd.f32 %v4234, %v5164
    %5198 = vst [vmem:[#allocation15] sm:$0xff] %v5166
    %5199 = vst [vmem:[#allocation15 + $0x8] sm:$0xff] %v5167
    %5200 = vst [vmem:[#allocation15 + $0x10] sm:$0xff] %v5168
    %5201 = vst [vmem:[#allocation15 + $0x18] sm:$0xff] %v5169
    %5202 = vst [vmem:[#allocation15 + $0x20] sm:$0xff] %v5170
    %5203 = vst [vmem:[#allocation15 + $0x28] sm:$0xff] %v5171
    %5204 = vst [vmem:[#allocation15 + $0x30] sm:$0xff] %v5172
    %5205 = vst [vmem:[#allocation15 + $0x38] sm:$0xff] %v5173
    %5206 = vst [vmem:[#allocation15 + $0x40] sm:$0xff] %v5174
    %5207 = vst [vmem:[#allocation15 + $0x48] sm:$0xff] %v5175
    %5208 = vst [vmem:[#allocation15 + $0x50] sm:$0xff] %v5176
    %5209 = vst [vmem:[#allocation15 + $0x58] sm:$0xff] %v5177
    %5210 = vst [vmem:[#allocation15 + $0x60] sm:$0xff] %v5178
    %5211 = vst [vmem:[#allocation15 + $0x68] sm:$0xff] %v5179
    %5212 = vst [vmem:[#allocation15 + $0x70] sm:$0xff] %v5180
    %5213 = vst [vmem:[#allocation15 + $0x78] sm:$0xff] %v5181
    %5214 = vst [vmem:[#allocation15 + $0x80] sm:$0xff] %v5182
    %5215 = vst [vmem:[#allocation15 + $0x88] sm:$0xff] %v5183
    %5216 = vst [vmem:[#allocation15 + $0x90] sm:$0xff] %v5184
    %5217 = vst [vmem:[#allocation15 + $0x98] sm:$0xff] %v5185
    %5218 = vst [vmem:[#allocation15 + $0xa0] sm:$0xff] %v5186
    %5219 = vst [vmem:[#allocation15 + $0xa8] sm:$0xff] %v5187
    %5220 = vst [vmem:[#allocation15 + $0xb0] sm:$0xff] %v5188
    %5221 = vst [vmem:[#allocation15 + $0xb8] sm:$0xff] %v5189
    %5222 = vst [vmem:[#allocation15 + $0xc0] sm:$0xff] %v5190
    %5223 = vst [vmem:[#allocation15 + $0xc8] sm:$0xff] %v5191
    %5224 = vst [vmem:[#allocation15 + $0xd0] sm:$0xff] %v5192
    %5225 = vst [vmem:[#allocation15 + $0xd8] sm:$0xff] %v5193
    %5226 = vst [vmem:[#allocation15 + $0xe0] sm:$0xff] %v5194
    %5227 = vst [vmem:[#allocation15 + $0xe8] sm:$0xff] %v5195
    %5228 = vst [vmem:[#allocation15 + $0xf0] sm:$0xff] %v5196
    %5229 = vst [vmem:[#allocation15 + $0xf8] sm:$0xff] %v5197
    // Predicated region
    $region74: #{tpu_custom_call.1} parent=1 // pred_check
      _
    $region75: #{tpu_custom_call.1} parent=1 // pred_check_branch
      %5231 = sbr.rel (0) target = $region77
    $region76: #{tpu_custom_call.1} parent=1 // pred_region
      %s5233 = ssub.s32 4096, 4096
      %5234 = vsyncadd [#allocation5], %s5233
      %s5235 = sshll.u32 [#allocation15], 4
      %s5236 = int_to_ptr.vmem [resolvable:$true] %s5235
      %5241 = dma.vmem_to_hbm [thread:$0]  %s5236, 4096, %s11, [#allocation5], 256, 256, 16
    $region77: #{tpu_custom_call.1} parent=1 // pred_fallthru
      _
    // Predicated region
    $region78: #{tpu_custom_call.1} parent=1 // pred_check
      _
    $region79: #{tpu_custom_call.1} parent=1 // pred_check_branch
      %5243 = sbr.rel (0) target = $region81
    $region80: #{tpu_custom_call.1} parent=1 // pred_region
      %5244 = dma.done [#allocation5], 4096
    $region81: #{tpu_custom_call.1} parent=1 // pred_fallthru
      _
    %5245 = vsyncpa [#allocation4], 1
    %5246 = vsyncpa [#allocation7], 1
    %5247 = vsyncpa [#allocation10], 1
    %5248 = vsyncpa [#allocation13], 1
    %5249 = vsyncpa [#allocation5], 1

</llo_original>
